<compile_context>
chip_gen: v7x
topology: tpu7x:2x2x1
jax: 0.10.0
libtpu: 0.0.40
codegen_flags: <defaults>
</compile_context>

<pallas_src>
import math
import functools

import jax
import jax.numpy as jnp
from jax.experimental import pallas as pl
from jax.experimental.pallas import tpu as pltpu


_LN_EPS = 1e-5

_CPARAMS = pltpu.CompilerParams(
    dimension_semantics=("parallel",),
    vmem_limit_bytes=48 * 1024 * 1024,
)


# ----------------------------- in-kernel helpers ----------------------------

def _mm(a, b):
    """MXU matmul: bf16 operands, f32 accumulation."""
    return jnp.dot(a.astype(jnp.bfloat16), b.astype(jnp.bfloat16),
                   preferred_element_type=jnp.float32)


def _layernorm(x, g, b, eps=_LN_EPS):
    m = jnp.mean(x, axis=-1, keepdims=True)
    v = jnp.mean((x - m) ** 2, axis=-1, keepdims=True)
    return (x - m) * jax.lax.rsqrt(v + eps) * g + b


# ------------------------------ Pallas kernels ------------------------------

def _embed_kernel(x_ref, w_ref, b_ref, pe_ref, o_ref):
    # (L, in_dim) @ (in_dim, D) + b + positional encoding, fused.
    y = _mm(x_ref[0], w_ref[...]) + b_ref[...]
    o_ref[0] = y + pe_ref[...]


def encoder_embed(x, w, b, pe):
    B, L, Din = x.shape
    D = w.shape[1]
    return pl.pallas_call(
        _embed_kernel,
        grid=(B,),
        out_shape=jax.ShapeDtypeStruct((B, L, D), jnp.float32),
        in_specs=[
            pl.BlockSpec((1, L, Din), lambda i: (i, 0, 0)),
            pl.BlockSpec((Din, D), lambda i: (0, 0)),
            pl.BlockSpec((1, D), lambda i: (0, 0)),
            pl.BlockSpec((L, D), lambda i: (0, 0)),
        ],
        out_specs=pl.BlockSpec((1, L, D), lambda i: (i, 0, 0)),
        compiler_params=_CPARAMS,
    )(x, w, b, pe)


def _layer_kernel(*refs, n_heads, add_pe):
    """Fused PyTorch TransformerEncoderLayer (post-norm, relu FFN), one batch
    element per grid step.  Optionally adds the positional encoding first
    (used by the decoder's first layer)."""
    if add_pe:
        x_ref, pe_ref = refs[0], refs[1]
        rest = refs[2:]
    else:
        x_ref, pe_ref = refs[0], None
        rest = refs[1:]
    (wqkv_ref, bqkv_ref, wo_ref, bo_ref,
     g1_ref, bt1_ref, w1_ref, bb1_ref,
     w2_ref, bb2_ref, g2_ref, bt2_ref, o_ref) = rest

    x = x_ref[0]                                   # (L, D) f32
    if add_pe:
        x = x + pe_ref[...]

    L, D = x.shape
    dh = D // n_heads
    scale = 1.0 / math.sqrt(dh)

    qkv = _mm(x, wqkv_ref[...]) + bqkv_ref[...]    # (L, 3D) f32
    wo = wo_ref[...]                               # (D, D)

    # all heads handled inside the kernel; out-projection accumulated per head
    # ( concat(o_h) @ Wo  ==  sum_h o_h @ Wo[h*dh:(h+1)*dh] ).
    sa = jnp.zeros((L, D), jnp.float32)
    for h in range(n_heads):
        qh = qkv[:, h * dh:(h + 1) * dh]
        kh = qkv[:, D + h * dh: D + (h + 1) * dh]
        vh = qkv[:, 2 * D + h * dh: 2 * D + (h + 1) * dh]
        s = jax.lax.dot_general(
            qh.astype(jnp.bfloat16), kh.astype(jnp.bfloat16),
            (((1,), (1,)), ((), ())),
            preferred_element_type=jnp.float32) * scale          # (L, L)
        s = s - jnp.max(s, axis=-1, keepdims=True)
        e = jnp.exp(s)
        p = e * pl.reciprocal(jnp.sum(e, axis=-1, keepdims=True), approx=True)
        oh = _mm(p, vh)                                          # (L, dh)
        sa = sa + _mm(oh, wo[h * dh:(h + 1) * dh, :])            # (L, D)
    sa = sa + bo_ref[...]

    h1 = _layernorm(x + sa, g1_ref[...], bt1_ref[...])
    ff = jnp.maximum(_mm(h1, w1_ref[...]) + bb1_ref[...], 0.0)
    ff = _mm(ff, w2_ref[...]) + bb2_ref[...]
    o_ref[0] = _layernorm(h1 + ff, g2_ref[...], bt2_ref[...])


def transformer_layer(x, lp, n_heads, pe=None):
    B, L, D = x.shape
    add_pe = pe is not None
    inputs = [x]
    in_specs = [pl.BlockSpec((1, L, D), lambda i: (i, 0, 0))]
    if add_pe:
        inputs.append(pe)
        in_specs.append(pl.BlockSpec((L, D), lambda i: (0, 0)))
    weights = [lp["in_proj_w"], lp["in_proj_b"], lp["out_w"], lp["out_b"],
               lp["ln1_g"], lp["ln1_b"], lp["lin1_w"], lp["lin1_b"],
               lp["lin2_w"], lp["lin2_b"], lp["ln2_g"], lp["ln2_b"]]
    for wgt in weights:
        inputs.append(wgt)
        in_specs.append(pl.BlockSpec(wgt.shape, lambda i: (0, 0)))
    return pl.pallas_call(
        functools.partial(_layer_kernel, n_heads=n_heads, add_pe=add_pe),
        grid=(B,),
        out_shape=jax.ShapeDtypeStruct((B, L, D), jnp.float32),
        in_specs=in_specs,
        out_specs=pl.BlockSpec((1, L, D), lambda i: (i, 0, 0)),
        compiler_params=_CPARAMS,
    )(*inputs)


def _fc_kernel(x_ref, w_ref, b_ref, o_ref):
    o_ref[0] = _mm(x_ref[0], w_ref[...]) + b_ref[...]


def fc_out(x, w, b):
    B, L, D = x.shape
    Dout = w.shape[1]
    return pl.pallas_call(
        _fc_kernel,
        grid=(B,),
        out_shape=jax.ShapeDtypeStruct((B, L, Dout), jnp.float32),
        in_specs=[pl.BlockSpec((1, L, D), lambda i: (i, 0, 0)),
                  pl.BlockSpec((D, Dout), lambda i: (0, 0)),
                  pl.BlockSpec((1, Dout), lambda i: (0, 0))],
        out_specs=pl.BlockSpec((1, L, Dout), lambda i: (i, 0, 0)),
        compiler_params=_CPARAMS,
    )(x, w, b)


def _vq_kernel(z_ref, cb_ref, zq_ref, idx_ref, err_ref):
    z = z_ref[0]                                                       # (L, D) f32
    cb = cb_ref[...]                                                   # (N, D) f32
    N = cb.shape[0]
    # Transposed orientation: scores are (N, L); argmin runs over sublanes and
    # the index output comes out directly as a lane-dense (1, L) row.
    # ||z_l - e_n||^2 = |z_l|^2 + |e_n|^2 - 2 e_n.z_l ; |z_l|^2 is constant in n.
    e_sq = jnp.sum(cb * cb, axis=-1, keepdims=True)                    # (N, 1)
    crossT = jax.lax.dot_general(cb, z, (((1,), (1,)), ((), ())),
                                 preferred_element_type=jnp.float32)   # (N, L)
    score = e_sq - 2.0 * crossT
    dmin = jnp.min(score, axis=0, keepdims=True)                       # (1, L)
    row = jax.lax.broadcasted_iota(jnp.int32, score.shape, 0)          # (N, L)
    idx = jnp.min(jnp.where(score <= dmin, row, N),
                  axis=0, keepdims=True)                               # (1, L) first argmin
    onehot = (row == idx).astype(jnp.float32)                          # (N, L)
    # Codebook row gather via one small MXU matmul (N is small; keeps lowering
    # simple and off the VPU).
    zq = jax.lax.dot_general(onehot, cb, (((0,), (0,)), ((), ())),
                             preferred_element_type=jnp.float32)       # (L, D)
    zq_ref[0] = zq
    idx_ref[0] = idx
    err_ref[0] = jnp.sum(jnp.sum((zq - z) ** 2, axis=-1, keepdims=True),
                         axis=0, keepdims=True)                        # (1, 1)


def vq_quantize(z_e, codebook, beta):
    B, L, D = z_e.shape
    N = codebook.shape[0]
    zq, idx, err = pl.pallas_call(
        _vq_kernel,
        grid=(B,),
        out_shape=(jax.ShapeDtypeStruct((B, L, D), jnp.float32),
                   jax.ShapeDtypeStruct((B, 1, L), jnp.int32),
                   jax.ShapeDtypeStruct((B, 1, 1), jnp.float32)),
        in_specs=[pl.BlockSpec((1, L, D), lambda i: (i, 0, 0)),
                  pl.BlockSpec((N, D), lambda i: (0, 0))],
        out_specs=(pl.BlockSpec((1, L, D), lambda i: (i, 0, 0)),
                   pl.BlockSpec((1, 1, L), lambda i: (i, 0, 0)),
                   pl.BlockSpec((1, 1, 1), lambda i: (i, 0, 0))),
        compiler_params=_CPARAMS,
    )(z_e, codebook)
    mean_sq = jnp.sum(err) / (B * L * D)
    # commitment + embedding loss have identical forward values.
    vq_loss = beta * mean_sq + mean_sq
    return zq, vq_loss, idx.reshape(B, L)


# ------------------------------ model glue ---------------------------------

def positional_encoding(max_len, d_model):
    pos = jnp.arange(max_len, dtype=jnp.float32)[:, None]
    div = jnp.exp(jnp.arange(0, d_model, 2, dtype=jnp.float32)
                  * (-math.log(10000.0) / d_model))
    pe = jnp.zeros((max_len, d_model), jnp.float32)
    pe = pe.at[:, 0::2].set(jnp.sin(pos * div))
    pe = pe.at[:, 1::2].set(jnp.cos(pos * div))
    return pe


def dna_vqvae_forward(params, x, cfg):
    B, L, _ = x.shape
    pe = params["pe"][:L]

    # encoder: embed + pos-enc fused, then fused layers.
    # TODO(synk): dropout is identity here (eval mode); train-mode RNG dropout not implemented.
    h = encoder_embed(x, params["embed_w"], params["embed_b"], pe)
    for lp in params["enc_layers"]:
        h = transformer_layer(h, lp, cfg["n_heads"])

    # vector quantization (straight-through forward value == z_q).
    z_q, vq_loss, indices = vq_quantize(h, params["codebook"], cfg["beta"])

    # decoder: pos-enc fused into the first layer, then fused layers + fc_out.
    h = z_q
    for li, lp in enumerate(params["dec_layers"]):
        h = transformer_layer(h, lp, cfg["n_heads"], pe=pe if li == 0 else None)
    x_recon = fc_out(h, params["fc_w"], params["fc_b"])
    return x_recon, vq_loss, indices


# --------------------------- deterministic init -----------------------------

def init_params(key, cfg):
    D, dff, in_dim, n_embed = cfg["d_model"], cfg["dff"], cfg["in_dim"], cfg["n_embed"]
    n_layers = cfg["n_layers"]
    kit = iter(jax.random.split(key, 16 * n_layers + 16))

    def w(shape, scale=0.02):
        return (scale * jax.random.normal(next(kit), shape)).astype(jnp.float32)

    def layer():
        # biases / LN params stored as (1, N): no per-call reshapes in the hot path.
        return dict(
            in_proj_w=w((D, 3 * D)), in_proj_b=jnp.zeros((1, 3 * D), jnp.float32),
            out_w=w((D, D)), out_b=jnp.zeros((1, D), jnp.float32),
            lin1_w=w((D, dff)), lin1_b=jnp.zeros((1, dff), jnp.float32),
            lin2_w=w((dff, D)), lin2_b=jnp.zeros((1, D), jnp.float32),
            ln1_g=jnp.ones((1, D), jnp.float32), ln1_b=jnp.zeros((1, D), jnp.float32),
            ln2_g=jnp.ones((1, D), jnp.float32), ln2_b=jnp.zeros((1, D), jnp.float32),
        )

    return dict(
        embed_w=w((in_dim, D)), embed_b=jnp.zeros((1, D), jnp.float32),
        enc_layers=[layer() for _ in range(n_layers)],
        dec_layers=[layer() for _ in range(n_layers)],
        fc_w=w((D, in_dim)), fc_b=jnp.zeros((1, in_dim), jnp.float32),
        codebook=jax.random.uniform(next(kit), (n_embed, D), jnp.float32,
                                    minval=-1.0 / n_embed, maxval=1.0 / n_embed),
        pe=positional_encoding(cfg["max_seq_len"], D),
    )


if __name__ == "__main__":
    # Small config consistent with VQConfig structure (scaled down).
    cfg = dict(in_dim=4, d_model=32, n_heads=4, n_layers=2, n_embed=64,
               dff=64, beta=0.25, max_seq_len=64)
    params = init_params(jax.random.PRNGKey(42), cfg)

    B, L = 2, 8
    x = jax.random.normal(jax.random.PRNGKey(0), (B, L, cfg["in_dim"]), dtype=jnp.float32)

    fwd = jax.jit(lambda p, inp: dna_vqvae_forward(p, inp, cfg))
    x_recon, vq_loss, indices = fwd(params, x)
    jax.block_until_ready((x_recon, vq_loss, indices))

    assert x_recon.shape == (B, L, cfg["in_dim"])
    assert vq_loss.shape == ()
    assert indices.shape == (B, L)
    assert indices.dtype == jnp.int32
    print("KERNEL_OK")
</pallas_src>

<mosaic_0001>
module attributes {stable_mosaic.version = 11 : i64} {
  func.func @_embed_kernel(%arg0: i32, %arg1: memref<1x8x4xf32, #tpu.memory_space<vmem>>, %arg2: memref<4x32xf32, #tpu.memory_space<vmem>>, %arg3: memref<1x32xf32, #tpu.memory_space<vmem>>, %arg4: memref<8x32xf32, #tpu.memory_space<vmem>>, %arg5: memref<1x8x32xf32, #tpu.memory_space<vmem>>) attributes {dimension_semantics = [#tpu.dimension_semantics<parallel>], iteration_bounds = array<i64: 2>, scalar_prefetch = 0 : i64, scratch_operands = 0 : i64, tpu.core_type = #tpu.core_type<tc>, window_params = [{transform_indices = @transform_0, window_bounds = array<i64: 1, 8, 4>}, {pipeline_mode = #tpu.pipeline_mode<synchronous>, transform_indices = @transform_1, window_bounds = array<i64: 4, 32>}, {pipeline_mode = #tpu.pipeline_mode<synchronous>, transform_indices = @transform_2, window_bounds = array<i64: 1, 32>}, {pipeline_mode = #tpu.pipeline_mode<synchronous>, transform_indices = @transform_3, window_bounds = array<i64: 8, 32>}, {transform_indices = @transform_4, window_bounds = array<i64: 1, 8, 32>}]} {
    %c0 = arith.constant 0 : index
    %c0_0 = arith.constant 0 : index
    %c0_1 = arith.constant 0 : index
    %0 = vector.load %arg1[%c0, %c0_0, %c0_1] : memref<1x8x4xf32, #tpu.memory_space<vmem>>, vector<1x8x4xf32>
    %1 = vector.shape_cast %0 : vector<1x8x4xf32> to vector<8x4xf32>
    %c0_2 = arith.constant 0 : index
    %c0_3 = arith.constant 0 : index
    %2 = vector.load %arg2[%c0_2, %c0_3] : memref<4x32xf32, #tpu.memory_space<vmem>>, vector<4x32xf32>
    %3 = arith.truncf %1 : vector<8x4xf32> to vector<8x4xbf16>
    %4 = arith.truncf %2 : vector<4x32xf32> to vector<4x32xbf16>
    %cst = arith.constant dense<0.000000e+00> : vector<8x32xf32>
    %5 = tpu.matmul %3, %4, %cst {dimension_numbers = #tpu.dot_dimension_numbers<[1], [0], [0], [1], [0, 0, 1, 1], [], []>} : vector<8x4xbf16>, vector<4x32xbf16>, vector<8x32xf32> -> vector<8x32xf32>
    %c0_4 = arith.constant 0 : index
    %c0_5 = arith.constant 0 : index
    %6 = vector.load %arg3[%c0_4, %c0_5] : memref<1x32xf32, #tpu.memory_space<vmem>>, vector<1x32xf32>
    %7 = vector.broadcast %6 : vector<1x32xf32> to vector<8x32xf32>
    %8 = arith.addf %5, %7 : vector<8x32xf32>
    %c0_6 = arith.constant 0 : index
    %c0_7 = arith.constant 0 : index
    %9 = vector.load %arg4[%c0_6, %c0_7] : memref<8x32xf32, #tpu.memory_space<vmem>>, vector<8x32xf32>
    %10 = arith.addf %8, %9 : vector<8x32xf32>
    %c0_8 = arith.constant 0 : index
    %c0_9 = arith.constant 0 : index
    %c0_10 = arith.constant 0 : index
    %11 = vector.load %arg5[%c0_8, %c0_9, %c0_10] : memref<1x8x32xf32, #tpu.memory_space<vmem>>, vector<1x8x32xf32>
    %12 = vector.shape_cast %11 : vector<1x8x32xf32> to vector<8x32xf32>
    %13 = vector.shape_cast %10 : vector<8x32xf32> to vector<1x8x32xf32>
    tpu.vector_store %arg5[%c0_8, %c0_9, %c0_10], %13 {strides = array<i32>} : memref<1x8x32xf32, #tpu.memory_space<vmem>>, vector<1x8x32xf32>,
    return
  }
  func.func @transform_0(%arg0: i32) -> (i32, i32, i32) {
    %c0_i32 = arith.constant 0 : i32
    %c0_i32_0 = arith.constant 0 : i32
    %c0_i32_1 = arith.constant 0 : i32
    return %arg0, %c0_i32, %c0_i32_0 : i32, i32, i32
  }
  func.func @transform_1(%arg0: i32) -> (i32, i32) {
    %c0_i32 = arith.constant 0 : i32
    %c0_i32_0 = arith.constant 0 : i32
    %c0_i32_1 = arith.constant 0 : i32
    return %c0_i32, %c0_i32_0 : i32, i32
  }
  func.func @transform_2(%arg0: i32) -> (i32, i32) {
    %c0_i32 = arith.constant 0 : i32
    %c0_i32_0 = arith.constant 0 : i32
    %c0_i32_1 = arith.constant 0 : i32
    return %c0_i32, %c0_i32_0 : i32, i32
  }
  func.func @transform_3(%arg0: i32) -> (i32, i32) {
    %c0_i32 = arith.constant 0 : i32
    %c0_i32_0 = arith.constant 0 : i32
    %c0_i32_1 = arith.constant 0 : i32
    return %c0_i32, %c0_i32_0 : i32, i32
  }
  func.func @transform_4(%arg0: i32) -> (i32, i32, i32) {
    %c0_i32 = arith.constant 0 : i32
    %c0_i32_0 = arith.constant 0 : i32
    %c0_i32_1 = arith.constant 0 : i32
    return %arg0, %c0_i32, %c0_i32_0 : i32, i32, i32
  }
}

module attributes {stable_mosaic.version = 11 : i64} {
  func.func @_vq_kernel(%arg0: i32, %arg1: memref<1x8x32xf32, #tpu.memory_space<vmem>>, %arg2: memref<64x32xf32, #tpu.memory_space<vmem>>, %arg3: memref<1x8x32xf32, #tpu.memory_space<vmem>>, %arg4: memref<1x1x8xi32, #tpu.memory_space<vmem>>, %arg5: memref<1x1x1xf32, #tpu.memory_space<vmem>>) attributes {dimension_semantics = [#tpu.dimension_semantics<parallel>], iteration_bounds = array<i64: 2>, scalar_prefetch = 0 : i64, scratch_operands = 0 : i64, tpu.core_type = #tpu.core_type<tc>, window_params = [{transform_indices = @transform_0, window_bounds = array<i64: 1, 8, 32>}, {pipeline_mode = #tpu.pipeline_mode<synchronous>, transform_indices = @transform_1, window_bounds = array<i64: 64, 32>}, {transform_indices = @transform_2, window_bounds = array<i64: 1, 8, 32>}, {transform_indices = @transform_3, window_bounds = array<i64: 1, 1, 8>}, {transform_indices = @transform_4, window_bounds = array<i64: 1, 1, 1>}]} {
    %c0 = arith.constant 0 : index
    %c0_0 = arith.constant 0 : index
    %c0_1 = arith.constant 0 : index
    %0 = vector.load %arg1[%c0, %c0_0, %c0_1] : memref<1x8x32xf32, #tpu.memory_space<vmem>>, vector<1x8x32xf32>
    %1 = vector.shape_cast %0 : vector<1x8x32xf32> to vector<8x32xf32>
    %c0_2 = arith.constant 0 : index
    %c0_3 = arith.constant 0 : index
    %2 = vector.load %arg2[%c0_2, %c0_3] : memref<64x32xf32, #tpu.memory_space<vmem>>, vector<64x32xf32>
    %3 = arith.mulf %2, %2 : vector<64x32xf32>
    %cst = arith.constant dense<0.000000e+00> : vector<64xf32>
    %4 = vector.multi_reduction <add>, %3, %cst [1] : vector<64x32xf32> to vector<64xf32>
    %5 = vector.shape_cast %4 : vector<64xf32> to vector<64x1xf32>
    %cst_4 = arith.constant dense<0.000000e+00> : vector<64x8xf32>
    %6 = tpu.matmul %2, %1, %cst_4 {dimension_numbers = #tpu.dot_dimension_numbers<[1], [1], [0], [0], [0, 0, 1, 0], [], []>} : vector<64x32xf32>, vector<8x32xf32>, vector<64x8xf32> -> vector<64x8xf32>
    %cst_5 = arith.constant 2.000000e+00 : f32
    %7 = vector.broadcast %cst_5 : f32 to vector<64x8xf32>
    %8 = arith.mulf %7, %6 : vector<64x8xf32>
    %9 = vector.broadcast %5 : vector<64x1xf32> to vector<64x8xf32>
    %10 = arith.subf %9, %8 : vector<64x8xf32>
    %cst_6 = arith.constant dense<0x7F800000> : vector<8xf32>
    %11 = vector.multi_reduction <minimumf>, %10, %cst_6 [0] : vector<64x8xf32> to vector<8xf32>
    %12 = vector.shape_cast %11 : vector<8xf32> to vector<1x8xf32>
    %13 = tpu.iota {dimensions = array<i32: 0>} : vector<64x8xi32>
    %14 = vector.broadcast %12 : vector<1x8xf32> to vector<64x8xf32>
    %15 = arith.cmpf ole, %10, %14 : vector<64x8xf32>
    %c64_i32 = arith.constant 64 : i32
    %16 = vector.broadcast %c64_i32 : i32 to vector<64x8xi32>
    %17 = arith.select %15, %13, %16 : vector<64x8xi1>, vector<64x8xi32>
    %cst_7 = arith.constant dense<2147483647> : vector<8xi32>
    %18 = vector.multi_reduction <minsi>, %17, %cst_7 [0] : vector<64x8xi32> to vector<8xi32>
    %19 = vector.shape_cast %18 : vector<8xi32> to vector<1x8xi32>
    %20 = vector.broadcast %19 : vector<1x8xi32> to vector<64x8xi32>
    %21 = arith.cmpi eq, %13, %20 : vector<64x8xi32>
    %22 = arith.extui %21 : vector<64x8xi1> to vector<64x8xi32>
    %23 = arith.sitofp %22 : vector<64x8xi32> to vector<64x8xf32>
    %cst_8 = arith.constant dense<0.000000e+00> : vector<8x32xf32>
    %24 = tpu.matmul %23, %2, %cst_8 {dimension_numbers = #tpu.dot_dimension_numbers<[0], [0], [1], [1], [0, 1, 1, 1], [], []>} : vector<64x8xf32>, vector<64x32xf32>, vector<8x32xf32> -> vector<8x32xf32>
    %c0_9 = arith.constant 0 : index
    %c0_10 = arith.constant 0 : index
    %c0_11 = arith.constant 0 : index
    %25 = vector.load %arg3[%c0_9, %c0_10, %c0_11] : memref<1x8x32xf32, #tpu.memory_space<vmem>>, vector<1x8x32xf32>
    %26 = vector.shape_cast %25 : vector<1x8x32xf32> to vector<8x32xf32>
    %27 = vector.shape_cast %24 : vector<8x32xf32> to vector<1x8x32xf32>
    tpu.vector_store %arg3[%c0_9, %c0_10, %c0_11], %27 {strides = array<i32>} : memref<1x8x32xf32, #tpu.memory_space<vmem>>, vector<1x8x32xf32>,
    %c0_12 = arith.constant 0 : index
    %c0_13 = arith.constant 0 : index
    %c0_14 = arith.constant 0 : index
    %28 = vector.load %arg4[%c0_12, %c0_13, %c0_14] : memref<1x1x8xi32, #tpu.memory_space<vmem>>, vector<1x1x8xi32>
    %29 = vector.shape_cast %28 : vector<1x1x8xi32> to vector<1x8xi32>
    %30 = vector.shape_cast %19 : vector<1x8xi32> to vector<1x1x8xi32>
    tpu.vector_store %arg4[%c0_12, %c0_13, %c0_14], %30 {strides = array<i32>} : memref<1x1x8xi32, #tpu.memory_space<vmem>>, vector<1x1x8xi32>,
    %31 = arith.subf %24, %1 : vector<8x32xf32>
    %32 = arith.mulf %31, %31 : vector<8x32xf32>
    %cst_15 = arith.constant dense<0.000000e+00> : vector<8xf32>
    %33 = vector.multi_reduction <add>, %32, %cst_15 [1] : vector<8x32xf32> to vector<8xf32>
    %34 = vector.shape_cast %33 : vector<8xf32> to vector<8x1xf32>
    %cst_16 = arith.constant dense<0.000000e+00> : vector<1xf32>
    %35 = vector.multi_reduction <add>, %34, %cst_16 [0] : vector<8x1xf32> to vector<1xf32>
    %36 = vector.shape_cast %35 : vector<1xf32> to vector<1x1xf32>
    %c0_17 = arith.constant 0 : index
    %c0_18 = arith.constant 0 : index
    %c0_19 = arith.constant 0 : index
    %37 = vector.load %arg5[%c0_17, %c0_18, %c0_19] : memref<1x1x1xf32, #tpu.memory_space<vmem>>, vector<1x1x1xf32>
    %38 = vector.shape_cast %37 : vector<1x1x1xf32> to vector<1x1xf32>
    %39 = vector.shape_cast %36 : vector<1x1xf32> to vector<1x1x1xf32>
    tpu.vector_store %arg5[%c0_17, %c0_18, %c0_19], %39 {strides = array<i32>} : memref<1x1x1xf32, #tpu.memory_space<vmem>>, vector<1x1x1xf32>,
    return
  }
  func.func @transform_0(%arg0: i32) -> (i32, i32, i32) {
    %c0_i32 = arith.constant 0 : i32
    %c0_i32_0 = arith.constant 0 : i32
    %c0_i32_1 = arith.constant 0 : i32
    return %arg0, %c0_i32, %c0_i32_0 : i32, i32, i32
  }
  func.func @transform_1(%arg0: i32) -> (i32, i32) {
    %c0_i32 = arith.constant 0 : i32
    %c0_i32_0 = arith.constant 0 : i32
    %c0_i32_1 = arith.constant 0 : i32
    return %c0_i32, %c0_i32_0 : i32, i32
  }
  func.func @transform_2(%arg0: i32) -> (i32, i32, i32) {
    %c0_i32 = arith.constant 0 : i32
    %c0_i32_0 = arith.constant 0 : i32
    %c0_i32_1 = arith.constant 0 : i32
    return %arg0, %c0_i32, %c0_i32_0 : i32, i32, i32
  }
  func.func @transform_3(%arg0: i32) -> (i32, i32, i32) {
    %c0_i32 = arith.constant 0 : i32
    %c0_i32_0 = arith.constant 0 : i32
    %c0_i32_1 = arith.constant 0 : i32
    return %arg0, %c0_i32, %c0_i32_0 : i32, i32, i32
  }
  func.func @transform_4(%arg0: i32) -> (i32, i32, i32) {
    %c0_i32 = arith.constant 0 : i32
    %c0_i32_0 = arith.constant 0 : i32
    %c0_i32_1 = arith.constant 0 : i32
    return %arg0, %c0_i32, %c0_i32_0 : i32, i32, i32
  }
}

module attributes {stable_mosaic.version = 11 : i64} {
  func.func @_layer_kernel(%arg0: i32, %arg1: memref<1x8x32xf32, #tpu.memory_space<vmem>>, %arg2: memref<32x96xf32, #tpu.memory_space<vmem>>, %arg3: memref<1x96xf32, #tpu.memory_space<vmem>>, %arg4: memref<32x32xf32, #tpu.memory_space<vmem>>, %arg5: memref<1x32xf32, #tpu.memory_space<vmem>>, %arg6: memref<1x32xf32, #tpu.memory_space<vmem>>, %arg7: memref<1x32xf32, #tpu.memory_space<vmem>>, %arg8: memref<32x64xf32, #tpu.memory_space<vmem>>, %arg9: memref<1x64xf32, #tpu.memory_space<vmem>>, %arg10: memref<64x32xf32, #tpu.memory_space<vmem>>, %arg11: memref<1x32xf32, #tpu.memory_space<vmem>>, %arg12: memref<1x32xf32, #tpu.memory_space<vmem>>, %arg13: memref<1x32xf32, #tpu.memory_space<vmem>>, %arg14: memref<1x8x32xf32, #tpu.memory_space<vmem>>) attributes {dimension_semantics = [#tpu.dimension_semantics<parallel>], iteration_bounds = array<i64: 2>, scalar_prefetch = 0 : i64, scratch_operands = 0 : i64, tpu.core_type = #tpu.core_type<tc>, window_params = [{transform_indices = @transform_0, window_bounds = array<i64: 1, 8, 32>}, {pipeline_mode = #tpu.pipeline_mode<synchronous>, transform_indices = @transform_1, window_bounds = array<i64: 32, 96>}, {pipeline_mode = #tpu.pipeline_mode<synchronous>, transform_indices = @transform_2, window_bounds = array<i64: 1, 96>}, {pipeline_mode = #tpu.pipeline_mode<synchronous>, transform_indices = @transform_3, window_bounds = array<i64: 32, 32>}, {pipeline_mode = #tpu.pipeline_mode<synchronous>, transform_indices = @transform_4, window_bounds = array<i64: 1, 32>}, {pipeline_mode = #tpu.pipeline_mode<synchronous>, transform_indices = @transform_5, window_bounds = array<i64: 1, 32>}, {pipeline_mode = #tpu.pipeline_mode<synchronous>, transform_indices = @transform_6, window_bounds = array<i64: 1, 32>}, {pipeline_mode = #tpu.pipeline_mode<synchronous>, transform_indices = @transform_7, window_bounds = array<i64: 32, 64>}, {pipeline_mode = #tpu.pipeline_mode<synchronous>, transform_indices = @transform_8, window_bounds = array<i64: 1, 64>}, {pipeline_mode = #tpu.pipeline_mode<synchronous>, transform_indices = @transform_9, window_bounds = array<i64: 64, 32>}, {pipeline_mode = #tpu.pipeline_mode<synchronous>, transform_indices = @transform_10, window_bounds = array<i64: 1, 32>}, {pipeline_mode = #tpu.pipeline_mode<synchronous>, transform_indices = @transform_11, window_bounds = array<i64: 1, 32>}, {pipeline_mode = #tpu.pipeline_mode<synchronous>, transform_indices = @transform_12, window_bounds = array<i64: 1, 32>}, {transform_indices = @transform_13, window_bounds = array<i64: 1, 8, 32>}]} {
    %c0 = arith.constant 0 : index
    %c0_0 = arith.constant 0 : index
    %c0_1 = arith.constant 0 : index
    %0 = vector.load %arg1[%c0, %c0_0, %c0_1] : memref<1x8x32xf32, #tpu.memory_space<vmem>>, vector<1x8x32xf32>
    %1 = vector.shape_cast %0 : vector<1x8x32xf32> to vector<8x32xf32>
    %c0_2 = arith.constant 0 : index
    %c0_3 = arith.constant 0 : index
    %2 = vector.load %arg2[%c0_2, %c0_3] : memref<32x96xf32, #tpu.memory_space<vmem>>, vector<32x96xf32>
    %3 = arith.truncf %1 : vector<8x32xf32> to vector<8x32xbf16>
    %4 = arith.truncf %2 : vector<32x96xf32> to vector<32x96xbf16>
    %cst = arith.constant dense<0.000000e+00> : vector<8x96xf32>
    %5 = tpu.matmul %3, %4, %cst {dimension_numbers = #tpu.dot_dimension_numbers<[1], [0], [0], [1], [0, 0, 1, 1], [], []>} : vector<8x32xbf16>, vector<32x96xbf16>, vector<8x96xf32> -> vector<8x96xf32>
    %c0_4 = arith.constant 0 : index
    %c0_5 = arith.constant 0 : index
    %6 = vector.load %arg3[%c0_4, %c0_5] : memref<1x96xf32, #tpu.memory_space<vmem>>, vector<1x96xf32>
    %7 = vector.broadcast %6 : vector<1x96xf32> to vector<8x96xf32>
    %8 = arith.addf %5, %7 : vector<8x96xf32>
    %c0_6 = arith.constant 0 : index
    %c0_7 = arith.constant 0 : index
    %9 = vector.load %arg4[%c0_6, %c0_7] : memref<32x32xf32, #tpu.memory_space<vmem>>, vector<32x32xf32>
    %cst_8 = arith.constant 0.000000e+00 : f32
    %10 = vector.broadcast %cst_8 : f32 to vector<8x32xf32>
    %11 = vector.extract_strided_slice %8 {offsets = [0, 0], sizes = [8, 8], strides = [1, 1]} : vector<8x96xf32> to vector<8x8xf32>
    %12 = vector.extract_strided_slice %8 {offsets = [0, 32], sizes = [8, 8], strides = [1, 1]} : vector<8x96xf32> to vector<8x8xf32>
    %13 = vector.extract_strided_slice %8 {offsets = [0, 64], sizes = [8, 8], strides = [1, 1]} : vector<8x96xf32> to vector<8x8xf32>
    %14 = arith.truncf %11 : vector<8x8xf32> to vector<8x8xbf16>
    %15 = arith.truncf %12 : vector<8x8xf32> to vector<8x8xbf16>
    %cst_9 = arith.constant dense<0.000000e+00> : vector<8x8xf32>
    %16 = tpu.matmul %14, %15, %cst_9 {dimension_numbers = #tpu.dot_dimension_numbers<[1], [1], [0], [0], [0, 0, 1, 0], [], []>} : vector<8x8xbf16>, vector<8x8xbf16>, vector<8x8xf32> -> vector<8x8xf32>
    %cst_10 = arith.constant 0.353553385 : f32
    %17 = vector.broadcast %cst_10 : f32 to vector<8x8xf32>
    %18 = arith.mulf %16, %17 : vector<8x8xf32>
    %cst_11 = arith.constant dense<0xFF800000> : vector<8xf32>
    %19 = vector.multi_reduction <maximumf>, %18, %cst_11 [1] : vector<8x8xf32> to vector<8xf32>
    %20 = vector.shape_cast %19 : vector<8xf32> to vector<8x1xf32>
    %21 = vector.broadcast %20 : vector<8x1xf32> to vector<8x8xf32>
    %22 = arith.subf %18, %21 : vector<8x8xf32>
    %23 = math.exp %22 : vector<8x8xf32>
    %cst_12 = arith.constant dense<0.000000e+00> : vector<8xf32>
    %24 = vector.multi_reduction <add>, %23, %cst_12 [1] : vector<8x8xf32> to vector<8xf32>
    %25 = vector.shape_cast %24 : vector<8xf32> to vector<8x1xf32>
    %26 = tpu.reciprocal %25 {approx = true} : vector<8x1xf32> -> vector<8x1xf32>
    %27 = vector.broadcast %26 : vector<8x1xf32> to vector<8x8xf32>
    %28 = arith.mulf %23, %27 : vector<8x8xf32>
    %29 = arith.truncf %28 : vector<8x8xf32> to vector<8x8xbf16>
    %30 = arith.truncf %13 : vector<8x8xf32> to vector<8x8xbf16>
    %cst_13 = arith.constant dense<0.000000e+00> : vector<8x8xf32>
    %31 = tpu.matmul %29, %30, %cst_13 {dimension_numbers = #tpu.dot_dimension_numbers<[1], [0], [0], [1], [0, 0, 1, 1], [], []>} : vector<8x8xbf16>, vector<8x8xbf16>, vector<8x8xf32> -> vector<8x8xf32>
    %32 = vector.extract_strided_slice %9 {offsets = [0, 0], sizes = [8, 32], strides = [1, 1]} : vector<32x32xf32> to vector<8x32xf32>
    %33 = arith.truncf %31 : vector<8x8xf32> to vector<8x8xbf16>
    %34 = arith.truncf %32 : vector<8x32xf32> to vector<8x32xbf16>
    %cst_14 = arith.constant dense<0.000000e+00> : vector<8x32xf32>
    %35 = tpu.matmul %33, %34, %cst_14 {dimension_numbers = #tpu.dot_dimension_numbers<[1], [0], [0], [1], [0, 0, 1, 1], [], []>} : vector<8x8xbf16>, vector<8x32xbf16>, vector<8x32xf32> -> vector<8x32xf32>
    %36 = arith.addf %10, %35 : vector<8x32xf32>
    %37 = vector.extract_strided_slice %8 {offsets = [0, 8], sizes = [8, 8], strides = [1, 1]} : vector<8x96xf32> to vector<8x8xf32>
    %38 = vector.extract_strided_slice %8 {offsets = [0, 40], sizes = [8, 8], strides = [1, 1]} : vector<8x96xf32> to vector<8x8xf32>
    %39 = vector.extract_strided_slice %8 {offsets = [0, 72], sizes = [8, 8], strides = [1, 1]} : vector<8x96xf32> to vector<8x8xf32>
    %40 = arith.truncf %37 : vector<8x8xf32> to vector<8x8xbf16>
    %41 = arith.truncf %38 : vector<8x8xf32> to vector<8x8xbf16>
    %cst_15 = arith.constant dense<0.000000e+00> : vector<8x8xf32>
    %42 = tpu.matmul %40, %41, %cst_15 {dimension_numbers = #tpu.dot_dimension_numbers<[1], [1], [0], [0], [0, 0, 1, 0], [], []>} : vector<8x8xbf16>, vector<8x8xbf16>, vector<8x8xf32> -> vector<8x8xf32>
    %cst_16 = arith.constant 0.353553385 : f32
    %43 = vector.broadcast %cst_16 : f32 to vector<8x8xf32>
    %44 = arith.mulf %42, %43 : vector<8x8xf32>
    %cst_17 = arith.constant dense<0xFF800000> : vector<8xf32>
    %45 = vector.multi_reduction <maximumf>, %44, %cst_17 [1] : vector<8x8xf32> to vector<8xf32>
    %46 = vector.shape_cast %45 : vector<8xf32> to vector<8x1xf32>
    %47 = vector.broadcast %46 : vector<8x1xf32> to vector<8x8xf32>
    %48 = arith.subf %44, %47 : vector<8x8xf32>
    %49 = math.exp %48 : vector<8x8xf32>
    %cst_18 = arith.constant dense<0.000000e+00> : vector<8xf32>
    %50 = vector.multi_reduction <add>, %49, %cst_18 [1] : vector<8x8xf32> to vector<8xf32>
    %51 = vector.shape_cast %50 : vector<8xf32> to vector<8x1xf32>
    %52 = tpu.reciprocal %51 {approx = true} : vector<8x1xf32> -> vector<8x1xf32>
    %53 = vector.broadcast %52 : vector<8x1xf32> to vector<8x8xf32>
    %54 = arith.mulf %49, %53 : vector<8x8xf32>
    %55 = arith.truncf %54 : vector<8x8xf32> to vector<8x8xbf16>
    %56 = arith.truncf %39 : vector<8x8xf32> to vector<8x8xbf16>
    %cst_19 = arith.constant dense<0.000000e+00> : vector<8x8xf32>
    %57 = tpu.matmul %55, %56, %cst_19 {dimension_numbers = #tpu.dot_dimension_numbers<[1], [0], [0], [1], [0, 0, 1, 1], [], []>} : vector<8x8xbf16>, vector<8x8xbf16>, vector<8x8xf32> -> vector<8x8xf32>
    %58 = vector.extract_strided_slice %9 {offsets = [8, 0], sizes = [8, 32], strides = [1, 1]} : vector<32x32xf32> to vector<8x32xf32>
    %59 = arith.truncf %57 : vector<8x8xf32> to vector<8x8xbf16>
    %60 = arith.truncf %58 : vector<8x32xf32> to vector<8x32xbf16>
    %cst_20 = arith.constant dense<0.000000e+00> : vector<8x32xf32>
    %61 = tpu.matmul %59, %60, %cst_20 {dimension_numbers = #tpu.dot_dimension_numbers<[1], [0], [0], [1], [0, 0, 1, 1], [], []>} : vector<8x8xbf16>, vector<8x32xbf16>, vector<8x32xf32> -> vector<8x32xf32>
    %62 = arith.addf %36, %61 : vector<8x32xf32>
    %63 = vector.extract_strided_slice %8 {offsets = [0, 16], sizes = [8, 8], strides = [1, 1]} : vector<8x96xf32> to vector<8x8xf32>
    %64 = vector.extract_strided_slice %8 {offsets = [0, 48], sizes = [8, 8], strides = [1, 1]} : vector<8x96xf32> to vector<8x8xf32>
    %65 = vector.extract_strided_slice %8 {offsets = [0, 80], sizes = [8, 8], strides = [1, 1]} : vector<8x96xf32> to vector<8x8xf32>
    %66 = arith.truncf %63 : vector<8x8xf32> to vector<8x8xbf16>
    %67 = arith.truncf %64 : vector<8x8xf32> to vector<8x8xbf16>
    %cst_21 = arith.constant dense<0.000000e+00> : vector<8x8xf32>
    %68 = tpu.matmul %66, %67, %cst_21 {dimension_numbers = #tpu.dot_dimension_numbers<[1], [1], [0], [0], [0, 0, 1, 0], [], []>} : vector<8x8xbf16>, vector<8x8xbf16>, vector<8x8xf32> -> vector<8x8xf32>
    %cst_22 = arith.constant 0.353553385 : f32
    %69 = vector.broadcast %cst_22 : f32 to vector<8x8xf32>
    %70 = arith.mulf %68, %69 : vector<8x8xf32>
    %cst_23 = arith.constant dense<0xFF800000> : vector<8xf32>
    %71 = vector.multi_reduction <maximumf>, %70, %cst_23 [1] : vector<8x8xf32> to vector<8xf32>
    %72 = vector.shape_cast %71 : vector<8xf32> to vector<8x1xf32>
    %73 = vector.broadcast %72 : vector<8x1xf32> to vector<8x8xf32>
    %74 = arith.subf %70, %73 : vector<8x8xf32>
    %75 = math.exp %74 : vector<8x8xf32>
    %cst_24 = arith.constant dense<0.000000e+00> : vector<8xf32>
    %76 = vector.multi_reduction <add>, %75, %cst_24 [1] : vector<8x8xf32> to vector<8xf32>
    %77 = vector.shape_cast %76 : vector<8xf32> to vector<8x1xf32>
    %78 = tpu.reciprocal %77 {approx = true} : vector<8x1xf32> -> vector<8x1xf32>
    %79 = vector.broadcast %78 : vector<8x1xf32> to vector<8x8xf32>
    %80 = arith.mulf %75, %79 : vector<8x8xf32>
    %81 = arith.truncf %80 : vector<8x8xf32> to vector<8x8xbf16>
    %82 = arith.truncf %65 : vector<8x8xf32> to vector<8x8xbf16>
    %cst_25 = arith.constant dense<0.000000e+00> : vector<8x8xf32>
    %83 = tpu.matmul %81, %82, %cst_25 {dimension_numbers = #tpu.dot_dimension_numbers<[1], [0], [0], [1], [0, 0, 1, 1], [], []>} : vector<8x8xbf16>, vector<8x8xbf16>, vector<8x8xf32> -> vector<8x8xf32>
    %84 = vector.extract_strided_slice %9 {offsets = [16, 0], sizes = [8, 32], strides = [1, 1]} : vector<32x32xf32> to vector<8x32xf32>
    %85 = arith.truncf %83 : vector<8x8xf32> to vector<8x8xbf16>
    %86 = arith.truncf %84 : vector<8x32xf32> to vector<8x32xbf16>
    %cst_26 = arith.constant dense<0.000000e+00> : vector<8x32xf32>
    %87 = tpu.matmul %85, %86, %cst_26 {dimension_numbers = #tpu.dot_dimension_numbers<[1], [0], [0], [1], [0, 0, 1, 1], [], []>} : vector<8x8xbf16>, vector<8x32xbf16>, vector<8x32xf32> -> vector<8x32xf32>
    %88 = arith.addf %62, %87 : vector<8x32xf32>
    %89 = vector.extract_strided_slice %8 {offsets = [0, 24], sizes = [8, 8], strides = [1, 1]} : vector<8x96xf32> to vector<8x8xf32>
    %90 = vector.extract_strided_slice %8 {offsets = [0, 56], sizes = [8, 8], strides = [1, 1]} : vector<8x96xf32> to vector<8x8xf32>
    %91 = vector.extract_strided_slice %8 {offsets = [0, 88], sizes = [8, 8], strides = [1, 1]} : vector<8x96xf32> to vector<8x8xf32>
    %92 = arith.truncf %89 : vector<8x8xf32> to vector<8x8xbf16>
    %93 = arith.truncf %90 : vector<8x8xf32> to vector<8x8xbf16>
    %cst_27 = arith.constant dense<0.000000e+00> : vector<8x8xf32>
    %94 = tpu.matmul %92, %93, %cst_27 {dimension_numbers = #tpu.dot_dimension_numbers<[1], [1], [0], [0], [0, 0, 1, 0], [], []>} : vector<8x8xbf16>, vector<8x8xbf16>, vector<8x8xf32> -> vector<8x8xf32>
    %cst_28 = arith.constant 0.353553385 : f32
    %95 = vector.broadcast %cst_28 : f32 to vector<8x8xf32>
    %96 = arith.mulf %94, %95 : vector<8x8xf32>
    %cst_29 = arith.constant dense<0xFF800000> : vector<8xf32>
    %97 = vector.multi_reduction <maximumf>, %96, %cst_29 [1] : vector<8x8xf32> to vector<8xf32>
    %98 = vector.shape_cast %97 : vector<8xf32> to vector<8x1xf32>
    %99 = vector.broadcast %98 : vector<8x1xf32> to vector<8x8xf32>
    %100 = arith.subf %96, %99 : vector<8x8xf32>
    %101 = math.exp %100 : vector<8x8xf32>
    %cst_30 = arith.constant dense<0.000000e+00> : vector<8xf32>
    %102 = vector.multi_reduction <add>, %101, %cst_30 [1] : vector<8x8xf32> to vector<8xf32>
    %103 = vector.shape_cast %102 : vector<8xf32> to vector<8x1xf32>
    %104 = tpu.reciprocal %103 {approx = true} : vector<8x1xf32> -> vector<8x1xf32>
    %105 = vector.broadcast %104 : vector<8x1xf32> to vector<8x8xf32>
    %106 = arith.mulf %101, %105 : vector<8x8xf32>
    %107 = arith.truncf %106 : vector<8x8xf32> to vector<8x8xbf16>
    %108 = arith.truncf %91 : vector<8x8xf32> to vector<8x8xbf16>
    %cst_31 = arith.constant dense<0.000000e+00> : vector<8x8xf32>
    %109 = tpu.matmul %107, %108, %cst_31 {dimension_numbers = #tpu.dot_dimension_numbers<[1], [0], [0], [1], [0, 0, 1, 1], [], []>} : vector<8x8xbf16>, vector<8x8xbf16>, vector<8x8xf32> -> vector<8x8xf32>
    %110 = vector.extract_strided_slice %9 {offsets = [24, 0], sizes = [8, 32], strides = [1, 1]} : vector<32x32xf32> to vector<8x32xf32>
    %111 = arith.truncf %109 : vector<8x8xf32> to vector<8x8xbf16>
    %112 = arith.truncf %110 : vector<8x32xf32> to vector<8x32xbf16>
    %cst_32 = arith.constant dense<0.000000e+00> : vector<8x32xf32>
    %113 = tpu.matmul %111, %112, %cst_32 {dimension_numbers = #tpu.dot_dimension_numbers<[1], [0], [0], [1], [0, 0, 1, 1], [], []>} : vector<8x8xbf16>, vector<8x32xbf16>, vector<8x32xf32> -> vector<8x32xf32>
    %114 = arith.addf %88, %113 : vector<8x32xf32>
    %c0_33 = arith.constant 0 : index
    %c0_34 = arith.constant 0 : index
    %115 = vector.load %arg5[%c0_33, %c0_34] : memref<1x32xf32, #tpu.memory_space<vmem>>, vector<1x32xf32>
    %116 = vector.broadcast %115 : vector<1x32xf32> to vector<8x32xf32>
    %117 = arith.addf %114, %116 : vector<8x32xf32>
    %118 = arith.addf %1, %117 : vector<8x32xf32>
    %c0_35 = arith.constant 0 : index
    %c0_36 = arith.constant 0 : index
    %119 = vector.load %arg6[%c0_35, %c0_36] : memref<1x32xf32, #tpu.memory_space<vmem>>, vector<1x32xf32>
    %c0_37 = arith.constant 0 : index
    %c0_38 = arith.constant 0 : index
    %120 = vector.load %arg7[%c0_37, %c0_38] : memref<1x32xf32, #tpu.memory_space<vmem>>, vector<1x32xf32>
    %cst_39 = arith.constant dense<0.000000e+00> : vector<8xf32>
    %121 = vector.multi_reduction <add>, %118, %cst_39 [1] : vector<8x32xf32> to vector<8xf32>
    %122 = vector.shape_cast %121 : vector<8xf32> to vector<8x1xf32>
    %cst_40 = arith.constant 3.200000e+01 : f32
    %123 = vector.broadcast %cst_40 : f32 to vector<8x1xf32>
    %124 = arith.divf %122, %123 : vector<8x1xf32>
    %125 = vector.broadcast %124 : vector<8x1xf32> to vector<8x32xf32>
    %126 = arith.subf %118, %125 : vector<8x32xf32>
    %127 = arith.mulf %126, %126 : vector<8x32xf32>
    %cst_41 = arith.constant dense<0.000000e+00> : vector<8xf32>
    %128 = vector.multi_reduction <add>, %127, %cst_41 [1] : vector<8x32xf32> to vector<8xf32>
    %129 = vector.shape_cast %128 : vector<8xf32> to vector<8x1xf32>
    %cst_42 = arith.constant 3.200000e+01 : f32
    %130 = vector.broadcast %cst_42 : f32 to vector<8x1xf32>
    %131 = arith.divf %129, %130 : vector<8x1xf32>
    %132 = vector.broadcast %124 : vector<8x1xf32> to vector<8x32xf32>
    %133 = arith.subf %118, %132 : vector<8x32xf32>
    %cst_43 = arith.constant 9.99999974E-6 : f32
    %134 = vector.broadcast %cst_43 : f32 to vector<8x1xf32>
    %135 = arith.addf %131, %134 : vector<8x1xf32>
    %136 = math.rsqrt %135 : vector<8x1xf32>
    %137 = vector.broadcast %136 : vector<8x1xf32> to vector<8x32xf32>
    %138 = arith.mulf %133, %137 : vector<8x32xf32>
    %139 = vector.broadcast %119 : vector<1x32xf32> to vector<8x32xf32>
    %140 = arith.mulf %138, %139 : vector<8x32xf32>
    %141 = vector.broadcast %120 : vector<1x32xf32> to vector<8x32xf32>
    %142 = arith.addf %140, %141 : vector<8x32xf32>
    %c0_44 = arith.constant 0 : index
    %c0_45 = arith.constant 0 : index
    %143 = vector.load %arg8[%c0_44, %c0_45] : memref<32x64xf32, #tpu.memory_space<vmem>>, vector<32x64xf32>
    %144 = arith.truncf %142 : vector<8x32xf32> to vector<8x32xbf16>
    %145 = arith.truncf %143 : vector<32x64xf32> to vector<32x64xbf16>
    %cst_46 = arith.constant dense<0.000000e+00> : vector<8x64xf32>
    %146 = tpu.matmul %144, %145, %cst_46 {dimension_numbers = #tpu.dot_dimension_numbers<[1], [0], [0], [1], [0, 0, 1, 1], [], []>} : vector<8x32xbf16>, vector<32x64xbf16>, vector<8x64xf32> -> vector<8x64xf32>
    %c0_47 = arith.constant 0 : index
    %c0_48 = arith.constant 0 : index
    %147 = vector.load %arg9[%c0_47, %c0_48] : memref<1x64xf32, #tpu.memory_space<vmem>>, vector<1x64xf32>
    %148 = vector.broadcast %147 : vector<1x64xf32> to vector<8x64xf32>
    %149 = arith.addf %146, %148 : vector<8x64xf32>
    %cst_49 = arith.constant 0.000000e+00 : f32
    %150 = vector.broadcast %cst_49 : f32 to vector<8x64xf32>
    %151 = arith.maximumf %149, %150 : vector<8x64xf32>
    %c0_50 = arith.constant 0 : index
    %c0_51 = arith.constant 0 : index
    %152 = vector.load %arg10[%c0_50, %c0_51] : memref<64x32xf32, #tpu.memory_space<vmem>>, vector<64x32xf32>
    %153 = arith.truncf %151 : vector<8x64xf32> to vector<8x64xbf16>
    %154 = arith.truncf %152 : vector<64x32xf32> to vector<64x32xbf16>
    %cst_52 = arith.constant dense<0.000000e+00> : vector<8x32xf32>
    %155 = tpu.matmul %153, %154, %cst_52 {dimension_numbers = #tpu.dot_dimension_numbers<[1], [0], [0], [1], [0, 0, 1, 1], [], []>} : vector<8x64xbf16>, vector<64x32xbf16>, vector<8x32xf32> -> vector<8x32xf32>
    %c0_53 = arith.constant 0 : index
    %c0_54 = arith.constant 0 : index
    %156 = vector.load %arg11[%c0_53, %c0_54] : memref<1x32xf32, #tpu.memory_space<vmem>>, vector<1x32xf32>
    %157 = vector.broadcast %156 : vector<1x32xf32> to vector<8x32xf32>
    %158 = arith.addf %155, %157 : vector<8x32xf32>
    %159 = arith.addf %142, %158 : vector<8x32xf32>
    %c0_55 = arith.constant 0 : index
    %c0_56 = arith.constant 0 : index
    %160 = vector.load %arg12[%c0_55, %c0_56] : memref<1x32xf32, #tpu.memory_space<vmem>>, vector<1x32xf32>
    %c0_57 = arith.constant 0 : index
    %c0_58 = arith.constant 0 : index
    %161 = vector.load %arg13[%c0_57, %c0_58] : memref<1x32xf32, #tpu.memory_space<vmem>>, vector<1x32xf32>
    %cst_59 = arith.constant dense<0.000000e+00> : vector<8xf32>
    %162 = vector.multi_reduction <add>, %159, %cst_59 [1] : vector<8x32xf32> to vector<8xf32>
    %163 = vector.shape_cast %162 : vector<8xf32> to vector<8x1xf32>
    %cst_60 = arith.constant 3.200000e+01 : f32
    %164 = vector.broadcast %cst_60 : f32 to vector<8x1xf32>
    %165 = arith.divf %163, %164 : vector<8x1xf32>
    %166 = vector.broadcast %165 : vector<8x1xf32> to vector<8x32xf32>
    %167 = arith.subf %159, %166 : vector<8x32xf32>
    %168 = arith.mulf %167, %167 : vector<8x32xf32>
    %cst_61 = arith.constant dense<0.000000e+00> : vector<8xf32>
    %169 = vector.multi_reduction <add>, %168, %cst_61 [1] : vector<8x32xf32> to vector<8xf32>
    %170 = vector.shape_cast %169 : vector<8xf32> to vector<8x1xf32>
    %cst_62 = arith.constant 3.200000e+01 : f32
    %171 = vector.broadcast %cst_62 : f32 to vector<8x1xf32>
    %172 = arith.divf %170, %171 : vector<8x1xf32>
    %173 = vector.broadcast %165 : vector<8x1xf32> to vector<8x32xf32>
    %174 = arith.subf %159, %173 : vector<8x32xf32>
    %cst_63 = arith.constant 9.99999974E-6 : f32
    %175 = vector.broadcast %cst_63 : f32 to vector<8x1xf32>
    %176 = arith.addf %172, %175 : vector<8x1xf32>
    %177 = math.rsqrt %176 : vector<8x1xf32>
    %178 = vector.broadcast %177 : vector<8x1xf32> to vector<8x32xf32>
    %179 = arith.mulf %174, %178 : vector<8x32xf32>
    %180 = vector.broadcast %160 : vector<1x32xf32> to vector<8x32xf32>
    %181 = arith.mulf %179, %180 : vector<8x32xf32>
    %182 = vector.broadcast %161 : vector<1x32xf32> to vector<8x32xf32>
    %183 = arith.addf %181, %182 : vector<8x32xf32>
    %c0_64 = arith.constant 0 : index
    %c0_65 = arith.constant 0 : index
    %c0_66 = arith.constant 0 : index
    %184 = vector.load %arg14[%c0_64, %c0_65, %c0_66] : memref<1x8x32xf32, #tpu.memory_space<vmem>>, vector<1x8x32xf32>
    %185 = vector.shape_cast %184 : vector<1x8x32xf32> to vector<8x32xf32>
    %186 = vector.shape_cast %183 : vector<8x32xf32> to vector<1x8x32xf32>
    tpu.vector_store %arg14[%c0_64, %c0_65, %c0_66], %186 {strides = array<i32>} : memref<1x8x32xf32, #tpu.memory_space<vmem>>, vector<1x8x32xf32>,
    return
  }
  func.func @transform_0(%arg0: i32) -> (i32, i32, i32) {
    %c0_i32 = arith.constant 0 : i32
    %c0_i32_0 = arith.constant 0 : i32
    %c0_i32_1 = arith.constant 0 : i32
    return %arg0, %c0_i32, %c0_i32_0 : i32, i32, i32
  }
  func.func @transform_1(%arg0: i32) -> (i32, i32) {
    %c0_i32 = arith.constant 0 : i32
    %c0_i32_0 = arith.constant 0 : i32
    %c0_i32_1 = arith.constant 0 : i32
    return %c0_i32, %c0_i32_0 : i32, i32
  }
  func.func @transform_2(%arg0: i32) -> (i32, i32) {
    %c0_i32 = arith.constant 0 : i32
    %c0_i32_0 = arith.constant 0 : i32
    %c0_i32_1 = arith.constant 0 : i32
    return %c0_i32, %c0_i32_0 : i32, i32
  }
  func.func @transform_3(%arg0: i32) -> (i32, i32) {
    %c0_i32 = arith.constant 0 : i32
    %c0_i32_0 = arith.constant 0 : i32
    %c0_i32_1 = arith.constant 0 : i32
    return %c0_i32, %c0_i32_0 : i32, i32
  }
  func.func @transform_4(%arg0: i32) -> (i32, i32) {
    %c0_i32 = arith.constant 0 : i32
    %c0_i32_0 = arith.constant 0 : i32
    %c0_i32_1 = arith.constant 0 : i32
    return %c0_i32, %c0_i32_0 : i32, i32
  }
  func.func @transform_5(%arg0: i32) -> (i32, i32) {
    %c0_i32 = arith.constant 0 : i32
    %c0_i32_0 = arith.constant 0 : i32
    %c0_i32_1 = arith.constant 0 : i32
    return %c0_i32, %c0_i32_0 : i32, i32
  }
  func.func @transform_6(%arg0: i32) -> (i32, i32) {
    %c0_i32 = arith.constant 0 : i32
    %c0_i32_0 = arith.constant 0 : i32
    %c0_i32_1 = arith.constant 0 : i32
    return %c0_i32, %c0_i32_0 : i32, i32
  }
  func.func @transform_7(%arg0: i32) -> (i32, i32) {
    %c0_i32 = arith.constant 0 : i32
    %c0_i32_0 = arith.constant 0 : i32
    %c0_i32_1 = arith.constant 0 : i32
    return %c0_i32, %c0_i32_0 : i32, i32
  }
  func.func @transform_8(%arg0: i32) -> (i32, i32) {
    %c0_i32 = arith.constant 0 : i32
    %c0_i32_0 = arith.constant 0 : i32
    %c0_i32_1 = arith.constant 0 : i32
    return %c0_i32, %c0_i32_0 : i32, i32
  }
  func.func @transform_9(%arg0: i32) -> (i32, i32) {
    %c0_i32 = arith.constant 0 : i32
    %c0_i32_0 = arith.constant 0 : i32
    %c0_i32_1 = arith.constant 0 : i32
    return %c0_i32, %c0_i32_0 : i32, i32
  }
  func.func @transform_10(%arg0: i32) -> (i32, i32) {
    %c0_i32 = arith.constant 0 : i32
    %c0_i32_0 = arith.constant 0 : i32
    %c0_i32_1 = arith.constant 0 : i32
    return %c0_i32, %c0_i32_0 : i32, i32
  }
  func.func @transform_11(%arg0: i32) -> (i32, i32) {
    %c0_i32 = arith.constant 0 : i32
    %c0_i32_0 = arith.constant 0 : i32
    %c0_i32_1 = arith.constant 0 : i32
    return %c0_i32, %c0_i32_0 : i32, i32
  }
  func.func @transform_12(%arg0: i32) -> (i32, i32) {
    %c0_i32 = arith.constant 0 : i32
    %c0_i32_0 = arith.constant 0 : i32
    %c0_i32_1 = arith.constant 0 : i32
    return %c0_i32, %c0_i32_0 : i32, i32
  }
  func.func @transform_13(%arg0: i32) -> (i32, i32, i32) {
    %c0_i32 = arith.constant 0 : i32
    %c0_i32_0 = arith.constant 0 : i32
    %c0_i32_1 = arith.constant 0 : i32
    return %arg0, %c0_i32, %c0_i32_0 : i32, i32, i32
  }
}

module attributes {stable_mosaic.version = 11 : i64} {
  func.func @_layer_kernel(%arg0: i32, %arg1: memref<1x8x32xf32, #tpu.memory_space<vmem>>, %arg2: memref<8x32xf32, #tpu.memory_space<vmem>>, %arg3: memref<32x96xf32, #tpu.memory_space<vmem>>, %arg4: memref<1x96xf32, #tpu.memory_space<vmem>>, %arg5: memref<32x32xf32, #tpu.memory_space<vmem>>, %arg6: memref<1x32xf32, #tpu.memory_space<vmem>>, %arg7: memref<1x32xf32, #tpu.memory_space<vmem>>, %arg8: memref<1x32xf32, #tpu.memory_space<vmem>>, %arg9: memref<32x64xf32, #tpu.memory_space<vmem>>, %arg10: memref<1x64xf32, #tpu.memory_space<vmem>>, %arg11: memref<64x32xf32, #tpu.memory_space<vmem>>, %arg12: memref<1x32xf32, #tpu.memory_space<vmem>>, %arg13: memref<1x32xf32, #tpu.memory_space<vmem>>, %arg14: memref<1x32xf32, #tpu.memory_space<vmem>>, %arg15: memref<1x8x32xf32, #tpu.memory_space<vmem>>) attributes {dimension_semantics = [#tpu.dimension_semantics<parallel>], iteration_bounds = array<i64: 2>, scalar_prefetch = 0 : i64, scratch_operands = 0 : i64, tpu.core_type = #tpu.core_type<tc>, window_params = [{transform_indices = @transform_0, window_bounds = array<i64: 1, 8, 32>}, {pipeline_mode = #tpu.pipeline_mode<synchronous>, transform_indices = @transform_1, window_bounds = array<i64: 8, 32>}, {pipeline_mode = #tpu.pipeline_mode<synchronous>, transform_indices = @transform_2, window_bounds = array<i64: 32, 96>}, {pipeline_mode = #tpu.pipeline_mode<synchronous>, transform_indices = @transform_3, window_bounds = array<i64: 1, 96>}, {pipeline_mode = #tpu.pipeline_mode<synchronous>, transform_indices = @transform_4, window_bounds = array<i64: 32, 32>}, {pipeline_mode = #tpu.pipeline_mode<synchronous>, transform_indices = @transform_5, window_bounds = array<i64: 1, 32>}, {pipeline_mode = #tpu.pipeline_mode<synchronous>, transform_indices = @transform_6, window_bounds = array<i64: 1, 32>}, {pipeline_mode = #tpu.pipeline_mode<synchronous>, transform_indices = @transform_7, window_bounds = array<i64: 1, 32>}, {pipeline_mode = #tpu.pipeline_mode<synchronous>, transform_indices = @transform_8, window_bounds = array<i64: 32, 64>}, {pipeline_mode = #tpu.pipeline_mode<synchronous>, transform_indices = @transform_9, window_bounds = array<i64: 1, 64>}, {pipeline_mode = #tpu.pipeline_mode<synchronous>, transform_indices = @transform_10, window_bounds = array<i64: 64, 32>}, {pipeline_mode = #tpu.pipeline_mode<synchronous>, transform_indices = @transform_11, window_bounds = array<i64: 1, 32>}, {pipeline_mode = #tpu.pipeline_mode<synchronous>, transform_indices = @transform_12, window_bounds = array<i64: 1, 32>}, {pipeline_mode = #tpu.pipeline_mode<synchronous>, transform_indices = @transform_13, window_bounds = array<i64: 1, 32>}, {transform_indices = @transform_14, window_bounds = array<i64: 1, 8, 32>}]} {
    %c0 = arith.constant 0 : index
    %c0_0 = arith.constant 0 : index
    %c0_1 = arith.constant 0 : index
    %0 = vector.load %arg1[%c0, %c0_0, %c0_1] : memref<1x8x32xf32, #tpu.memory_space<vmem>>, vector<1x8x32xf32>
    %1 = vector.shape_cast %0 : vector<1x8x32xf32> to vector<8x32xf32>
    %c0_2 = arith.constant 0 : index
    %c0_3 = arith.constant 0 : index
    %2 = vector.load %arg2[%c0_2, %c0_3] : memref<8x32xf32, #tpu.memory_space<vmem>>, vector<8x32xf32>
    %3 = arith.addf %1, %2 : vector<8x32xf32>
    %c0_4 = arith.constant 0 : index
    %c0_5 = arith.constant 0 : index
    %4 = vector.load %arg3[%c0_4, %c0_5] : memref<32x96xf32, #tpu.memory_space<vmem>>, vector<32x96xf32>
    %5 = arith.truncf %3 : vector<8x32xf32> to vector<8x32xbf16>
    %6 = arith.truncf %4 : vector<32x96xf32> to vector<32x96xbf16>
    %cst = arith.constant dense<0.000000e+00> : vector<8x96xf32>
    %7 = tpu.matmul %5, %6, %cst {dimension_numbers = #tpu.dot_dimension_numbers<[1], [0], [0], [1], [0, 0, 1, 1], [], []>} : vector<8x32xbf16>, vector<32x96xbf16>, vector<8x96xf32> -> vector<8x96xf32>
    %c0_6 = arith.constant 0 : index
    %c0_7 = arith.constant 0 : index
    %8 = vector.load %arg4[%c0_6, %c0_7] : memref<1x96xf32, #tpu.memory_space<vmem>>, vector<1x96xf32>
    %9 = vector.broadcast %8 : vector<1x96xf32> to vector<8x96xf32>
    %10 = arith.addf %7, %9 : vector<8x96xf32>
    %c0_8 = arith.constant 0 : index
    %c0_9 = arith.constant 0 : index
    %11 = vector.load %arg5[%c0_8, %c0_9] : memref<32x32xf32, #tpu.memory_space<vmem>>, vector<32x32xf32>
    %cst_10 = arith.constant 0.000000e+00 : f32
    %12 = vector.broadcast %cst_10 : f32 to vector<8x32xf32>
    %13 = vector.extract_strided_slice %10 {offsets = [0, 0], sizes = [8, 8], strides = [1, 1]} : vector<8x96xf32> to vector<8x8xf32>
    %14 = vector.extract_strided_slice %10 {offsets = [0, 32], sizes = [8, 8], strides = [1, 1]} : vector<8x96xf32> to vector<8x8xf32>
    %15 = vector.extract_strided_slice %10 {offsets = [0, 64], sizes = [8, 8], strides = [1, 1]} : vector<8x96xf32> to vector<8x8xf32>
    %16 = arith.truncf %13 : vector<8x8xf32> to vector<8x8xbf16>
    %17 = arith.truncf %14 : vector<8x8xf32> to vector<8x8xbf16>
    %cst_11 = arith.constant dense<0.000000e+00> : vector<8x8xf32>
    %18 = tpu.matmul %16, %17, %cst_11 {dimension_numbers = #tpu.dot_dimension_numbers<[1], [1], [0], [0], [0, 0, 1, 0], [], []>} : vector<8x8xbf16>, vector<8x8xbf16>, vector<8x8xf32> -> vector<8x8xf32>
    %cst_12 = arith.constant 0.353553385 : f32
    %19 = vector.broadcast %cst_12 : f32 to vector<8x8xf32>
    %20 = arith.mulf %18, %19 : vector<8x8xf32>
    %cst_13 = arith.constant dense<0xFF800000> : vector<8xf32>
    %21 = vector.multi_reduction <maximumf>, %20, %cst_13 [1] : vector<8x8xf32> to vector<8xf32>
    %22 = vector.shape_cast %21 : vector<8xf32> to vector<8x1xf32>
    %23 = vector.broadcast %22 : vector<8x1xf32> to vector<8x8xf32>
    %24 = arith.subf %20, %23 : vector<8x8xf32>
    %25 = math.exp %24 : vector<8x8xf32>
    %cst_14 = arith.constant dense<0.000000e+00> : vector<8xf32>
    %26 = vector.multi_reduction <add>, %25, %cst_14 [1] : vector<8x8xf32> to vector<8xf32>
    %27 = vector.shape_cast %26 : vector<8xf32> to vector<8x1xf32>
    %28 = tpu.reciprocal %27 {approx = true} : vector<8x1xf32> -> vector<8x1xf32>
    %29 = vector.broadcast %28 : vector<8x1xf32> to vector<8x8xf32>
    %30 = arith.mulf %25, %29 : vector<8x8xf32>
    %31 = arith.truncf %30 : vector<8x8xf32> to vector<8x8xbf16>
    %32 = arith.truncf %15 : vector<8x8xf32> to vector<8x8xbf16>
    %cst_15 = arith.constant dense<0.000000e+00> : vector<8x8xf32>
    %33 = tpu.matmul %31, %32, %cst_15 {dimension_numbers = #tpu.dot_dimension_numbers<[1], [0], [0], [1], [0, 0, 1, 1], [], []>} : vector<8x8xbf16>, vector<8x8xbf16>, vector<8x8xf32> -> vector<8x8xf32>
    %34 = vector.extract_strided_slice %11 {offsets = [0, 0], sizes = [8, 32], strides = [1, 1]} : vector<32x32xf32> to vector<8x32xf32>
    %35 = arith.truncf %33 : vector<8x8xf32> to vector<8x8xbf16>
    %36 = arith.truncf %34 : vector<8x32xf32> to vector<8x32xbf16>
    %cst_16 = arith.constant dense<0.000000e+00> : vector<8x32xf32>
    %37 = tpu.matmul %35, %36, %cst_16 {dimension_numbers = #tpu.dot_dimension_numbers<[1], [0], [0], [1], [0, 0, 1, 1], [], []>} : vector<8x8xbf16>, vector<8x32xbf16>, vector<8x32xf32> -> vector<8x32xf32>
    %38 = arith.addf %12, %37 : vector<8x32xf32>
    %39 = vector.extract_strided_slice %10 {offsets = [0, 8], sizes = [8, 8], strides = [1, 1]} : vector<8x96xf32> to vector<8x8xf32>
    %40 = vector.extract_strided_slice %10 {offsets = [0, 40], sizes = [8, 8], strides = [1, 1]} : vector<8x96xf32> to vector<8x8xf32>
    %41 = vector.extract_strided_slice %10 {offsets = [0, 72], sizes = [8, 8], strides = [1, 1]} : vector<8x96xf32> to vector<8x8xf32>
    %42 = arith.truncf %39 : vector<8x8xf32> to vector<8x8xbf16>
    %43 = arith.truncf %40 : vector<8x8xf32> to vector<8x8xbf16>
    %cst_17 = arith.constant dense<0.000000e+00> : vector<8x8xf32>
    %44 = tpu.matmul %42, %43, %cst_17 {dimension_numbers = #tpu.dot_dimension_numbers<[1], [1], [0], [0], [0, 0, 1, 0], [], []>} : vector<8x8xbf16>, vector<8x8xbf16>, vector<8x8xf32> -> vector<8x8xf32>
    %cst_18 = arith.constant 0.353553385 : f32
    %45 = vector.broadcast %cst_18 : f32 to vector<8x8xf32>
    %46 = arith.mulf %44, %45 : vector<8x8xf32>
    %cst_19 = arith.constant dense<0xFF800000> : vector<8xf32>
    %47 = vector.multi_reduction <maximumf>, %46, %cst_19 [1] : vector<8x8xf32> to vector<8xf32>
    %48 = vector.shape_cast %47 : vector<8xf32> to vector<8x1xf32>
    %49 = vector.broadcast %48 : vector<8x1xf32> to vector<8x8xf32>
    %50 = arith.subf %46, %49 : vector<8x8xf32>
    %51 = math.exp %50 : vector<8x8xf32>
    %cst_20 = arith.constant dense<0.000000e+00> : vector<8xf32>
    %52 = vector.multi_reduction <add>, %51, %cst_20 [1] : vector<8x8xf32> to vector<8xf32>
    %53 = vector.shape_cast %52 : vector<8xf32> to vector<8x1xf32>
    %54 = tpu.reciprocal %53 {approx = true} : vector<8x1xf32> -> vector<8x1xf32>
    %55 = vector.broadcast %54 : vector<8x1xf32> to vector<8x8xf32>
    %56 = arith.mulf %51, %55 : vector<8x8xf32>
    %57 = arith.truncf %56 : vector<8x8xf32> to vector<8x8xbf16>
    %58 = arith.truncf %41 : vector<8x8xf32> to vector<8x8xbf16>
    %cst_21 = arith.constant dense<0.000000e+00> : vector<8x8xf32>
    %59 = tpu.matmul %57, %58, %cst_21 {dimension_numbers = #tpu.dot_dimension_numbers<[1], [0], [0], [1], [0, 0, 1, 1], [], []>} : vector<8x8xbf16>, vector<8x8xbf16>, vector<8x8xf32> -> vector<8x8xf32>
    %60 = vector.extract_strided_slice %11 {offsets = [8, 0], sizes = [8, 32], strides = [1, 1]} : vector<32x32xf32> to vector<8x32xf32>
    %61 = arith.truncf %59 : vector<8x8xf32> to vector<8x8xbf16>
    %62 = arith.truncf %60 : vector<8x32xf32> to vector<8x32xbf16>
    %cst_22 = arith.constant dense<0.000000e+00> : vector<8x32xf32>
    %63 = tpu.matmul %61, %62, %cst_22 {dimension_numbers = #tpu.dot_dimension_numbers<[1], [0], [0], [1], [0, 0, 1, 1], [], []>} : vector<8x8xbf16>, vector<8x32xbf16>, vector<8x32xf32> -> vector<8x32xf32>
    %64 = arith.addf %38, %63 : vector<8x32xf32>
    %65 = vector.extract_strided_slice %10 {offsets = [0, 16], sizes = [8, 8], strides = [1, 1]} : vector<8x96xf32> to vector<8x8xf32>
    %66 = vector.extract_strided_slice %10 {offsets = [0, 48], sizes = [8, 8], strides = [1, 1]} : vector<8x96xf32> to vector<8x8xf32>
    %67 = vector.extract_strided_slice %10 {offsets = [0, 80], sizes = [8, 8], strides = [1, 1]} : vector<8x96xf32> to vector<8x8xf32>
    %68 = arith.truncf %65 : vector<8x8xf32> to vector<8x8xbf16>
    %69 = arith.truncf %66 : vector<8x8xf32> to vector<8x8xbf16>
    %cst_23 = arith.constant dense<0.000000e+00> : vector<8x8xf32>
    %70 = tpu.matmul %68, %69, %cst_23 {dimension_numbers = #tpu.dot_dimension_numbers<[1], [1], [0], [0], [0, 0, 1, 0], [], []>} : vector<8x8xbf16>, vector<8x8xbf16>, vector<8x8xf32> -> vector<8x8xf32>
    %cst_24 = arith.constant 0.353553385 : f32
    %71 = vector.broadcast %cst_24 : f32 to vector<8x8xf32>
    %72 = arith.mulf %70, %71 : vector<8x8xf32>
    %cst_25 = arith.constant dense<0xFF800000> : vector<8xf32>
    %73 = vector.multi_reduction <maximumf>, %72, %cst_25 [1] : vector<8x8xf32> to vector<8xf32>
    %74 = vector.shape_cast %73 : vector<8xf32> to vector<8x1xf32>
    %75 = vector.broadcast %74 : vector<8x1xf32> to vector<8x8xf32>
    %76 = arith.subf %72, %75 : vector<8x8xf32>
    %77 = math.exp %76 : vector<8x8xf32>
    %cst_26 = arith.constant dense<0.000000e+00> : vector<8xf32>
    %78 = vector.multi_reduction <add>, %77, %cst_26 [1] : vector<8x8xf32> to vector<8xf32>
    %79 = vector.shape_cast %78 : vector<8xf32> to vector<8x1xf32>
    %80 = tpu.reciprocal %79 {approx = true} : vector<8x1xf32> -> vector<8x1xf32>
    %81 = vector.broadcast %80 : vector<8x1xf32> to vector<8x8xf32>
    %82 = arith.mulf %77, %81 : vector<8x8xf32>
    %83 = arith.truncf %82 : vector<8x8xf32> to vector<8x8xbf16>
    %84 = arith.truncf %67 : vector<8x8xf32> to vector<8x8xbf16>
    %cst_27 = arith.constant dense<0.000000e+00> : vector<8x8xf32>
    %85 = tpu.matmul %83, %84, %cst_27 {dimension_numbers = #tpu.dot_dimension_numbers<[1], [0], [0], [1], [0, 0, 1, 1], [], []>} : vector<8x8xbf16>, vector<8x8xbf16>, vector<8x8xf32> -> vector<8x8xf32>
    %86 = vector.extract_strided_slice %11 {offsets = [16, 0], sizes = [8, 32], strides = [1, 1]} : vector<32x32xf32> to vector<8x32xf32>
    %87 = arith.truncf %85 : vector<8x8xf32> to vector<8x8xbf16>
    %88 = arith.truncf %86 : vector<8x32xf32> to vector<8x32xbf16>
    %cst_28 = arith.constant dense<0.000000e+00> : vector<8x32xf32>
    %89 = tpu.matmul %87, %88, %cst_28 {dimension_numbers = #tpu.dot_dimension_numbers<[1], [0], [0], [1], [0, 0, 1, 1], [], []>} : vector<8x8xbf16>, vector<8x32xbf16>, vector<8x32xf32> -> vector<8x32xf32>
    %90 = arith.addf %64, %89 : vector<8x32xf32>
    %91 = vector.extract_strided_slice %10 {offsets = [0, 24], sizes = [8, 8], strides = [1, 1]} : vector<8x96xf32> to vector<8x8xf32>
    %92 = vector.extract_strided_slice %10 {offsets = [0, 56], sizes = [8, 8], strides = [1, 1]} : vector<8x96xf32> to vector<8x8xf32>
    %93 = vector.extract_strided_slice %10 {offsets = [0, 88], sizes = [8, 8], strides = [1, 1]} : vector<8x96xf32> to vector<8x8xf32>
    %94 = arith.truncf %91 : vector<8x8xf32> to vector<8x8xbf16>
    %95 = arith.truncf %92 : vector<8x8xf32> to vector<8x8xbf16>
    %cst_29 = arith.constant dense<0.000000e+00> : vector<8x8xf32>
    %96 = tpu.matmul %94, %95, %cst_29 {dimension_numbers = #tpu.dot_dimension_numbers<[1], [1], [0], [0], [0, 0, 1, 0], [], []>} : vector<8x8xbf16>, vector<8x8xbf16>, vector<8x8xf32> -> vector<8x8xf32>
    %cst_30 = arith.constant 0.353553385 : f32
    %97 = vector.broadcast %cst_30 : f32 to vector<8x8xf32>
    %98 = arith.mulf %96, %97 : vector<8x8xf32>
    %cst_31 = arith.constant dense<0xFF800000> : vector<8xf32>
    %99 = vector.multi_reduction <maximumf>, %98, %cst_31 [1] : vector<8x8xf32> to vector<8xf32>
    %100 = vector.shape_cast %99 : vector<8xf32> to vector<8x1xf32>
    %101 = vector.broadcast %100 : vector<8x1xf32> to vector<8x8xf32>
    %102 = arith.subf %98, %101 : vector<8x8xf32>
    %103 = math.exp %102 : vector<8x8xf32>
    %cst_32 = arith.constant dense<0.000000e+00> : vector<8xf32>
    %104 = vector.multi_reduction <add>, %103, %cst_32 [1] : vector<8x8xf32> to vector<8xf32>
    %105 = vector.shape_cast %104 : vector<8xf32> to vector<8x1xf32>
    %106 = tpu.reciprocal %105 {approx = true} : vector<8x1xf32> -> vector<8x1xf32>
    %107 = vector.broadcast %106 : vector<8x1xf32> to vector<8x8xf32>
    %108 = arith.mulf %103, %107 : vector<8x8xf32>
    %109 = arith.truncf %108 : vector<8x8xf32> to vector<8x8xbf16>
    %110 = arith.truncf %93 : vector<8x8xf32> to vector<8x8xbf16>
    %cst_33 = arith.constant dense<0.000000e+00> : vector<8x8xf32>
    %111 = tpu.matmul %109, %110, %cst_33 {dimension_numbers = #tpu.dot_dimension_numbers<[1], [0], [0], [1], [0, 0, 1, 1], [], []>} : vector<8x8xbf16>, vector<8x8xbf16>, vector<8x8xf32> -> vector<8x8xf32>
    %112 = vector.extract_strided_slice %11 {offsets = [24, 0], sizes = [8, 32], strides = [1, 1]} : vector<32x32xf32> to vector<8x32xf32>
    %113 = arith.truncf %111 : vector<8x8xf32> to vector<8x8xbf16>
    %114 = arith.truncf %112 : vector<8x32xf32> to vector<8x32xbf16>
    %cst_34 = arith.constant dense<0.000000e+00> : vector<8x32xf32>
    %115 = tpu.matmul %113, %114, %cst_34 {dimension_numbers = #tpu.dot_dimension_numbers<[1], [0], [0], [1], [0, 0, 1, 1], [], []>} : vector<8x8xbf16>, vector<8x32xbf16>, vector<8x32xf32> -> vector<8x32xf32>
    %116 = arith.addf %90, %115 : vector<8x32xf32>
    %c0_35 = arith.constant 0 : index
    %c0_36 = arith.constant 0 : index
    %117 = vector.load %arg6[%c0_35, %c0_36] : memref<1x32xf32, #tpu.memory_space<vmem>>, vector<1x32xf32>
    %118 = vector.broadcast %117 : vector<1x32xf32> to vector<8x32xf32>
    %119 = arith.addf %116, %118 : vector<8x32xf32>
    %120 = arith.addf %3, %119 : vector<8x32xf32>
    %c0_37 = arith.constant 0 : index
    %c0_38 = arith.constant 0 : index
    %121 = vector.load %arg7[%c0_37, %c0_38] : memref<1x32xf32, #tpu.memory_space<vmem>>, vector<1x32xf32>
    %c0_39 = arith.constant 0 : index
    %c0_40 = arith.constant 0 : index
    %122 = vector.load %arg8[%c0_39, %c0_40] : memref<1x32xf32, #tpu.memory_space<vmem>>, vector<1x32xf32>
    %cst_41 = arith.constant dense<0.000000e+00> : vector<8xf32>
    %123 = vector.multi_reduction <add>, %120, %cst_41 [1] : vector<8x32xf32> to vector<8xf32>
    %124 = vector.shape_cast %123 : vector<8xf32> to vector<8x1xf32>
    %cst_42 = arith.constant 3.200000e+01 : f32
    %125 = vector.broadcast %cst_42 : f32 to vector<8x1xf32>
    %126 = arith.divf %124, %125 : vector<8x1xf32>
    %127 = vector.broadcast %126 : vector<8x1xf32> to vector<8x32xf32>
    %128 = arith.subf %120, %127 : vector<8x32xf32>
    %129 = arith.mulf %128, %128 : vector<8x32xf32>
    %cst_43 = arith.constant dense<0.000000e+00> : vector<8xf32>
    %130 = vector.multi_reduction <add>, %129, %cst_43 [1] : vector<8x32xf32> to vector<8xf32>
    %131 = vector.shape_cast %130 : vector<8xf32> to vector<8x1xf32>
    %cst_44 = arith.constant 3.200000e+01 : f32
    %132 = vector.broadcast %cst_44 : f32 to vector<8x1xf32>
    %133 = arith.divf %131, %132 : vector<8x1xf32>
    %134 = vector.broadcast %126 : vector<8x1xf32> to vector<8x32xf32>
    %135 = arith.subf %120, %134 : vector<8x32xf32>
    %cst_45 = arith.constant 9.99999974E-6 : f32
    %136 = vector.broadcast %cst_45 : f32 to vector<8x1xf32>
    %137 = arith.addf %133, %136 : vector<8x1xf32>
    %138 = math.rsqrt %137 : vector<8x1xf32>
    %139 = vector.broadcast %138 : vector<8x1xf32> to vector<8x32xf32>
    %140 = arith.mulf %135, %139 : vector<8x32xf32>
    %141 = vector.broadcast %121 : vector<1x32xf32> to vector<8x32xf32>
    %142 = arith.mulf %140, %141 : vector<8x32xf32>
    %143 = vector.broadcast %122 : vector<1x32xf32> to vector<8x32xf32>
    %144 = arith.addf %142, %143 : vector<8x32xf32>
    %c0_46 = arith.constant 0 : index
    %c0_47 = arith.constant 0 : index
    %145 = vector.load %arg9[%c0_46, %c0_47] : memref<32x64xf32, #tpu.memory_space<vmem>>, vector<32x64xf32>
    %146 = arith.truncf %144 : vector<8x32xf32> to vector<8x32xbf16>
    %147 = arith.truncf %145 : vector<32x64xf32> to vector<32x64xbf16>
    %cst_48 = arith.constant dense<0.000000e+00> : vector<8x64xf32>
    %148 = tpu.matmul %146, %147, %cst_48 {dimension_numbers = #tpu.dot_dimension_numbers<[1], [0], [0], [1], [0, 0, 1, 1], [], []>} : vector<8x32xbf16>, vector<32x64xbf16>, vector<8x64xf32> -> vector<8x64xf32>
    %c0_49 = arith.constant 0 : index
    %c0_50 = arith.constant 0 : index
    %149 = vector.load %arg10[%c0_49, %c0_50] : memref<1x64xf32, #tpu.memory_space<vmem>>, vector<1x64xf32>
    %150 = vector.broadcast %149 : vector<1x64xf32> to vector<8x64xf32>
    %151 = arith.addf %148, %150 : vector<8x64xf32>
    %cst_51 = arith.constant 0.000000e+00 : f32
    %152 = vector.broadcast %cst_51 : f32 to vector<8x64xf32>
    %153 = arith.maximumf %151, %152 : vector<8x64xf32>
    %c0_52 = arith.constant 0 : index
    %c0_53 = arith.constant 0 : index
    %154 = vector.load %arg11[%c0_52, %c0_53] : memref<64x32xf32, #tpu.memory_space<vmem>>, vector<64x32xf32>
    %155 = arith.truncf %153 : vector<8x64xf32> to vector<8x64xbf16>
    %156 = arith.truncf %154 : vector<64x32xf32> to vector<64x32xbf16>
    %cst_54 = arith.constant dense<0.000000e+00> : vector<8x32xf32>
    %157 = tpu.matmul %155, %156, %cst_54 {dimension_numbers = #tpu.dot_dimension_numbers<[1], [0], [0], [1], [0, 0, 1, 1], [], []>} : vector<8x64xbf16>, vector<64x32xbf16>, vector<8x32xf32> -> vector<8x32xf32>
    %c0_55 = arith.constant 0 : index
    %c0_56 = arith.constant 0 : index
    %158 = vector.load %arg12[%c0_55, %c0_56] : memref<1x32xf32, #tpu.memory_space<vmem>>, vector<1x32xf32>
    %159 = vector.broadcast %158 : vector<1x32xf32> to vector<8x32xf32>
    %160 = arith.addf %157, %159 : vector<8x32xf32>
    %161 = arith.addf %144, %160 : vector<8x32xf32>
    %c0_57 = arith.constant 0 : index
    %c0_58 = arith.constant 0 : index
    %162 = vector.load %arg13[%c0_57, %c0_58] : memref<1x32xf32, #tpu.memory_space<vmem>>, vector<1x32xf32>
    %c0_59 = arith.constant 0 : index
    %c0_60 = arith.constant 0 : index
    %163 = vector.load %arg14[%c0_59, %c0_60] : memref<1x32xf32, #tpu.memory_space<vmem>>, vector<1x32xf32>
    %cst_61 = arith.constant dense<0.000000e+00> : vector<8xf32>
    %164 = vector.multi_reduction <add>, %161, %cst_61 [1] : vector<8x32xf32> to vector<8xf32>
    %165 = vector.shape_cast %164 : vector<8xf32> to vector<8x1xf32>
    %cst_62 = arith.constant 3.200000e+01 : f32
    %166 = vector.broadcast %cst_62 : f32 to vector<8x1xf32>
    %167 = arith.divf %165, %166 : vector<8x1xf32>
    %168 = vector.broadcast %167 : vector<8x1xf32> to vector<8x32xf32>
    %169 = arith.subf %161, %168 : vector<8x32xf32>
    %170 = arith.mulf %169, %169 : vector<8x32xf32>
    %cst_63 = arith.constant dense<0.000000e+00> : vector<8xf32>
    %171 = vector.multi_reduction <add>, %170, %cst_63 [1] : vector<8x32xf32> to vector<8xf32>
    %172 = vector.shape_cast %171 : vector<8xf32> to vector<8x1xf32>
    %cst_64 = arith.constant 3.200000e+01 : f32
    %173 = vector.broadcast %cst_64 : f32 to vector<8x1xf32>
    %174 = arith.divf %172, %173 : vector<8x1xf32>
    %175 = vector.broadcast %167 : vector<8x1xf32> to vector<8x32xf32>
    %176 = arith.subf %161, %175 : vector<8x32xf32>
    %cst_65 = arith.constant 9.99999974E-6 : f32
    %177 = vector.broadcast %cst_65 : f32 to vector<8x1xf32>
    %178 = arith.addf %174, %177 : vector<8x1xf32>
    %179 = math.rsqrt %178 : vector<8x1xf32>
    %180 = vector.broadcast %179 : vector<8x1xf32> to vector<8x32xf32>
    %181 = arith.mulf %176, %180 : vector<8x32xf32>
    %182 = vector.broadcast %162 : vector<1x32xf32> to vector<8x32xf32>
    %183 = arith.mulf %181, %182 : vector<8x32xf32>
    %184 = vector.broadcast %163 : vector<1x32xf32> to vector<8x32xf32>
    %185 = arith.addf %183, %184 : vector<8x32xf32>
    %c0_66 = arith.constant 0 : index
    %c0_67 = arith.constant 0 : index
    %c0_68 = arith.constant 0 : index
    %186 = vector.load %arg15[%c0_66, %c0_67, %c0_68] : memref<1x8x32xf32, #tpu.memory_space<vmem>>, vector<1x8x32xf32>
    %187 = vector.shape_cast %186 : vector<1x8x32xf32> to vector<8x32xf32>
    %188 = vector.shape_cast %185 : vector<8x32xf32> to vector<1x8x32xf32>
    tpu.vector_store %arg15[%c0_66, %c0_67, %c0_68], %188 {strides = array<i32>} : memref<1x8x32xf32, #tpu.memory_space<vmem>>, vector<1x8x32xf32>,
    return
  }
  func.func @transform_0(%arg0: i32) -> (i32, i32, i32) {
    %c0_i32 = arith.constant 0 : i32
    %c0_i32_0 = arith.constant 0 : i32
    %c0_i32_1 = arith.constant 0 : i32
    return %arg0, %c0_i32, %c0_i32_0 : i32, i32, i32
  }
  func.func @transform_1(%arg0: i32) -> (i32, i32) {
    %c0_i32 = arith.constant 0 : i32
    %c0_i32_0 = arith.constant 0 : i32
    %c0_i32_1 = arith.constant 0 : i32
    return %c0_i32, %c0_i32_0 : i32, i32
  }
  func.func @transform_2(%arg0: i32) -> (i32, i32) {
    %c0_i32 = arith.constant 0 : i32
    %c0_i32_0 = arith.constant 0 : i32
    %c0_i32_1 = arith.constant 0 : i32
    return %c0_i32, %c0_i32_0 : i32, i32
  }
  func.func @transform_3(%arg0: i32) -> (i32, i32) {
    %c0_i32 = arith.constant 0 : i32
    %c0_i32_0 = arith.constant 0 : i32
    %c0_i32_1 = arith.constant 0 : i32
    return %c0_i32, %c0_i32_0 : i32, i32
  }
  func.func @transform_4(%arg0: i32) -> (i32, i32) {
    %c0_i32 = arith.constant 0 : i32
    %c0_i32_0 = arith.constant 0 : i32
    %c0_i32_1 = arith.constant 0 : i32
    return %c0_i32, %c0_i32_0 : i32, i32
  }
  func.func @transform_5(%arg0: i32) -> (i32, i32) {
    %c0_i32 = arith.constant 0 : i32
    %c0_i32_0 = arith.constant 0 : i32
    %c0_i32_1 = arith.constant 0 : i32
    return %c0_i32, %c0_i32_0 : i32, i32
  }
  func.func @transform_6(%arg0: i32) -> (i32, i32) {
    %c0_i32 = arith.constant 0 : i32
    %c0_i32_0 = arith.constant 0 : i32
    %c0_i32_1 = arith.constant 0 : i32
    return %c0_i32, %c0_i32_0 : i32, i32
  }
  func.func @transform_7(%arg0: i32) -> (i32, i32) {
    %c0_i32 = arith.constant 0 : i32
    %c0_i32_0 = arith.constant 0 : i32
    %c0_i32_1 = arith.constant 0 : i32
    return %c0_i32, %c0_i32_0 : i32, i32
  }
  func.func @transform_8(%arg0: i32) -> (i32, i32) {
    %c0_i32 = arith.constant 0 : i32
    %c0_i32_0 = arith.constant 0 : i32
    %c0_i32_1 = arith.constant 0 : i32
    return %c0_i32, %c0_i32_0 : i32, i32
  }
  func.func @transform_9(%arg0: i32) -> (i32, i32) {
    %c0_i32 = arith.constant 0 : i32
    %c0_i32_0 = arith.constant 0 : i32
    %c0_i32_1 = arith.constant 0 : i32
    return %c0_i32, %c0_i32_0 : i32, i32
  }
  func.func @transform_10(%arg0: i32) -> (i32, i32) {
    %c0_i32 = arith.constant 0 : i32
    %c0_i32_0 = arith.constant 0 : i32
    %c0_i32_1 = arith.constant 0 : i32
    return %c0_i32, %c0_i32_0 : i32, i32
  }
  func.func @transform_11(%arg0: i32) -> (i32, i32) {
    %c0_i32 = arith.constant 0 : i32
    %c0_i32_0 = arith.constant 0 : i32
    %c0_i32_1 = arith.constant 0 : i32
    return %c0_i32, %c0_i32_0 : i32, i32
  }
  func.func @transform_12(%arg0: i32) -> (i32, i32) {
    %c0_i32 = arith.constant 0 : i32
    %c0_i32_0 = arith.constant 0 : i32
    %c0_i32_1 = arith.constant 0 : i32
    return %c0_i32, %c0_i32_0 : i32, i32
  }
  func.func @transform_13(%arg0: i32) -> (i32, i32) {
    %c0_i32 = arith.constant 0 : i32
    %c0_i32_0 = arith.constant 0 : i32
    %c0_i32_1 = arith.constant 0 : i32
    return %c0_i32, %c0_i32_0 : i32, i32
  }
  func.func @transform_14(%arg0: i32) -> (i32, i32, i32) {
    %c0_i32 = arith.constant 0 : i32
    %c0_i32_0 = arith.constant 0 : i32
    %c0_i32_1 = arith.constant 0 : i32
    return %arg0, %c0_i32, %c0_i32_0 : i32, i32, i32
  }
}

module attributes {stable_mosaic.version = 11 : i64} {
  func.func @_fc_kernel(%arg0: i32, %arg1: memref<1x8x32xf32, #tpu.memory_space<vmem>>, %arg2: memref<32x4xf32, #tpu.memory_space<vmem>>, %arg3: memref<1x4xf32, #tpu.memory_space<vmem>>, %arg4: memref<1x8x4xf32, #tpu.memory_space<vmem>>) attributes {dimension_semantics = [#tpu.dimension_semantics<parallel>], iteration_bounds = array<i64: 2>, scalar_prefetch = 0 : i64, scratch_operands = 0 : i64, tpu.core_type = #tpu.core_type<tc>, window_params = [{transform_indices = @transform_0, window_bounds = array<i64: 1, 8, 32>}, {pipeline_mode = #tpu.pipeline_mode<synchronous>, transform_indices = @transform_1, window_bounds = array<i64: 32, 4>}, {pipeline_mode = #tpu.pipeline_mode<synchronous>, transform_indices = @transform_2, window_bounds = array<i64: 1, 4>}, {transform_indices = @transform_3, window_bounds = array<i64: 1, 8, 4>}]} {
    %c0 = arith.constant 0 : index
    %c0_0 = arith.constant 0 : index
    %c0_1 = arith.constant 0 : index
    %0 = vector.load %arg1[%c0, %c0_0, %c0_1] : memref<1x8x32xf32, #tpu.memory_space<vmem>>, vector<1x8x32xf32>
    %1 = vector.shape_cast %0 : vector<1x8x32xf32> to vector<8x32xf32>
    %c0_2 = arith.constant 0 : index
    %c0_3 = arith.constant 0 : index
    %2 = vector.load %arg2[%c0_2, %c0_3] : memref<32x4xf32, #tpu.memory_space<vmem>>, vector<32x4xf32>
    %3 = arith.truncf %1 : vector<8x32xf32> to vector<8x32xbf16>
    %4 = arith.truncf %2 : vector<32x4xf32> to vector<32x4xbf16>
    %cst = arith.constant dense<0.000000e+00> : vector<8x4xf32>
    %5 = tpu.matmul %3, %4, %cst {dimension_numbers = #tpu.dot_dimension_numbers<[1], [0], [0], [1], [0, 0, 1, 1], [], []>} : vector<8x32xbf16>, vector<32x4xbf16>, vector<8x4xf32> -> vector<8x4xf32>
    %c0_4 = arith.constant 0 : index
    %c0_5 = arith.constant 0 : index
    %6 = vector.load %arg3[%c0_4, %c0_5] : memref<1x4xf32, #tpu.memory_space<vmem>>, vector<1x4xf32>
    %7 = vector.broadcast %6 : vector<1x4xf32> to vector<8x4xf32>
    %8 = arith.addf %5, %7 : vector<8x4xf32>
    %c0_6 = arith.constant 0 : index
    %c0_7 = arith.constant 0 : index
    %c0_8 = arith.constant 0 : index
    %9 = vector.load %arg4[%c0_6, %c0_7, %c0_8] : memref<1x8x4xf32, #tpu.memory_space<vmem>>, vector<1x8x4xf32>
    %10 = vector.shape_cast %9 : vector<1x8x4xf32> to vector<8x4xf32>
    %11 = vector.shape_cast %8 : vector<8x4xf32> to vector<1x8x4xf32>
    tpu.vector_store %arg4[%c0_6, %c0_7, %c0_8], %11 {strides = array<i32>} : memref<1x8x4xf32, #tpu.memory_space<vmem>>, vector<1x8x4xf32>,
    return
  }
  func.func @transform_0(%arg0: i32) -> (i32, i32, i32) {
    %c0_i32 = arith.constant 0 : i32
    %c0_i32_0 = arith.constant 0 : i32
    %c0_i32_1 = arith.constant 0 : i32
    return %arg0, %c0_i32, %c0_i32_0 : i32, i32, i32
  }
  func.func @transform_1(%arg0: i32) -> (i32, i32) {
    %c0_i32 = arith.constant 0 : i32
    %c0_i32_0 = arith.constant 0 : i32
    %c0_i32_1 = arith.constant 0 : i32
    return %c0_i32, %c0_i32_0 : i32, i32
  }
  func.func @transform_2(%arg0: i32) -> (i32, i32) {
    %c0_i32 = arith.constant 0 : i32
    %c0_i32_0 = arith.constant 0 : i32
    %c0_i32_1 = arith.constant 0 : i32
    return %c0_i32, %c0_i32_0 : i32, i32
  }
  func.func @transform_3(%arg0: i32) -> (i32, i32, i32) {
    %c0_i32 = arith.constant 0 : i32
    %c0_i32_0 = arith.constant 0 : i32
    %c0_i32_1 = arith.constant 0 : i32
    return %arg0, %c0_i32, %c0_i32_0 : i32, i32, i32
  }
}

</mosaic_0001>

<llo_original>
// kernel: _lambda_.7
$region0: #{_lambda_.7}
  #allocation0 [shape = 'u32[]', space=smem, size = 0x4, offset = 0x4, fixed_abs, tag = 'smem constant byte address 0x4 - core index']
  #allocation1 [shape = 'u32[144,128]{1,0:T(1,128)}', space=vmem, size = 0x12000, scoped, tag = 'internal scratch']
  %s0 = inlined_call_operand.vmem [shape: f32[2,8,4], index: 0, kind: input, shape index: {}]
  %s1 = inlined_call_operand.vmem [shape: f32[4,32], index: 1, kind: input, shape index: {}]
  %s2 = inlined_call_operand.vmem [shape: f32[1,32], index: 2, kind: input, shape index: {}]
  %s3 = inlined_call_operand.vmem [shape: f32[8,32], index: 3, kind: input, shape index: {}]
  %s4 = inlined_call_operand.vmem [shape: f32[2,8,32], index: 4, kind: output, shape index: {}]
  %s5 = sld [smem:[#allocation0]]
  $region49: #{_lambda_.7} parent=0
    _
  %s7 = ssub.s32 1, %s5
  %s8 = scalar_select 0, %s7, %s5
  loop: start=0, step=1, limit=4
  $region2: #{_lambda_.7} parent=0 // loop_pre_header
    _
  $region3: #{_lambda_.7} parent=0 // loop_header
    %s10 = sphi 0, %s14
    %p11 = scmp.ge.s32.totalorder %s10, 4
    %s20 = sphi 0, %s22
    %s23 = sphi 0, %s20
    %s24 = sphi 0, %s23
    %s40 = sphi 0, %s24
    %s44 = sphi 0, %s44
    %s46 = sphi 0, %s44
    %s47 = sphi 0, %s46
    %s61 = sphi 0, %s47
    %s65 = sphi 0, %s65
    %s67 = sphi 0, %s65
    %s68 = sphi 0, %s67
    %s82 = sphi 0, %s68
    %s86 = sphi 0, %s86
    %s88 = sphi 0, %s86
    %s89 = sphi 0, %s88
    %s103 = sphi 0, %s89
    %s109 = sphi 0, %s111
    %s112 = sphi 0, %s109
    %s113 = sphi 0, %s112
    %s129 = sphi 0, %s113
  $region4: #{_lambda_.7} parent=0 // loop_header_branch
    %13 = sbr.rel (%p11) target = $region8
  $region5: #{_lambda_.7} parent=0 // loop_body
    %s15 = ssub.s32 %s10, 1
    %s16 = ssub.s32 %s10, 2
    %s17 = sadd.s32 %s10, 1
    %s18 = ssub.s32 %s10, %s17
    %p19 = scmp.eq.s32.totalorder %s18, 0
    %s21 = sadd.s32 %s20, 1
    %s22 = scalar_select %p19, %s20, %s21
    %p25 = pneg %p19
    %p26 = scmp.eq.s32.totalorder %s10, 1
    %p27 = por %p25, %p26
    %p28 = scmp.ne.s32.totalorder %s20, %s23
    %p29 = scmp.eq.s32.totalorder %s10, 0
    %p30 = por %p28, %p29
    %p31 = scmp.ne.s32.totalorder %s20, %s23
    %p32 = scmp.eq.s32.totalorder %s15, 1
    %p33 = por %p31, %p32
    %p34 = scmp.ne.s32.totalorder %s23, %s24
    %p35 = scmp.eq.s32.totalorder %s15, 0
    %p36 = por %p34, %p35
    %p37 = scmp.ne.s32.totalorder %s23, %s24
    %p38 = scmp.eq.s32.totalorder %s16, 1
    %p39 = por %p37, %p38
    %p41 = scmp.ne.s32.totalorder %s24, %s40
    %p42 = scmp.eq.s32.totalorder %s16, 0
    %p43 = por %p41, %p42
    %s45 = sadd.s32 %s44, 1
    %p48 = scmp.eq.s32.totalorder %s10, 1
    %p49 = scmp.ne.s32.totalorder %s44, %s46
    %p50 = scmp.eq.s32.totalorder %s10, 0
    %p51 = por %p49, %p50
    %p52 = scmp.ne.s32.totalorder %s44, %s46
    %p53 = scmp.eq.s32.totalorder %s15, 1
    %p54 = por %p52, %p53
    %p55 = scmp.ne.s32.totalorder %s46, %s47
    %p56 = scmp.eq.s32.totalorder %s15, 0
    %p57 = por %p55, %p56
    %p58 = scmp.ne.s32.totalorder %s46, %s47
    %p59 = scmp.eq.s32.totalorder %s16, 1
    %p60 = por %p58, %p59
    %p62 = scmp.ne.s32.totalorder %s47, %s61
    %p63 = scmp.eq.s32.totalorder %s16, 0
    %p64 = por %p62, %p63
    %s66 = sadd.s32 %s65, 1
    %p69 = scmp.eq.s32.totalorder %s10, 1
    %p70 = scmp.ne.s32.totalorder %s65, %s67
    %p71 = scmp.eq.s32.totalorder %s10, 0
    %p72 = por %p70, %p71
    %p73 = scmp.ne.s32.totalorder %s65, %s67
    %p74 = scmp.eq.s32.totalorder %s15, 1
    %p75 = por %p73, %p74
    %p76 = scmp.ne.s32.totalorder %s67, %s68
    %p77 = scmp.eq.s32.totalorder %s15, 0
    %p78 = por %p76, %p77
    %p79 = scmp.ne.s32.totalorder %s67, %s68
    %p80 = scmp.eq.s32.totalorder %s16, 1
    %p81 = por %p79, %p80
    %p83 = scmp.ne.s32.totalorder %s68, %s82
    %p84 = scmp.eq.s32.totalorder %s16, 0
    %p85 = por %p83, %p84
    %s87 = sadd.s32 %s86, 1
    %p90 = scmp.eq.s32.totalorder %s10, 1
    %p91 = scmp.ne.s32.totalorder %s86, %s88
    %p92 = scmp.eq.s32.totalorder %s10, 0
    %p93 = por %p91, %p92
    %p94 = scmp.ne.s32.totalorder %s86, %s88
    %p95 = scmp.eq.s32.totalorder %s15, 1
    %p96 = por %p94, %p95
    %p97 = scmp.ne.s32.totalorder %s88, %s89
    %p98 = scmp.eq.s32.totalorder %s15, 0
    %p99 = por %p97, %p98
    %p100 = scmp.ne.s32.totalorder %s88, %s89
    %p101 = scmp.eq.s32.totalorder %s16, 1
    %p102 = por %p100, %p101
    %p104 = scmp.ne.s32.totalorder %s89, %s103
    %p105 = scmp.eq.s32.totalorder %s16, 0
    %p106 = por %p104, %p105
    %s107 = ssub.s32 %s10, %s17
    %p108 = scmp.eq.s32.totalorder %s107, 0
    %s110 = sadd.s32 %s109, 1
    %s111 = scalar_select %p108, %s109, %s110
    %p114 = pneg %p108
    %p115 = scmp.eq.s32.totalorder %s10, 1
    %p116 = por %p114, %p115
    %p117 = scmp.ne.s32.totalorder %s109, %s112
    %p118 = scmp.eq.s32.totalorder %s10, 0
    %p119 = por %p117, %p118
    %p120 = scmp.ne.s32.totalorder %s109, %s112
    %p121 = scmp.eq.s32.totalorder %s15, 1
    %p122 = por %p120, %p121
    %p123 = scmp.ne.s32.totalorder %s112, %s113
    %p124 = scmp.eq.s32.totalorder %s15, 0
    %p125 = por %p123, %p124
    %p126 = scmp.ne.s32.totalorder %s112, %s113
    %p127 = scmp.eq.s32.totalorder %s16, 1
    %p128 = por %p126, %p127
    %p130 = scmp.ne.s32.totalorder %s113, %s129
    %p131 = scmp.eq.s32.totalorder %s16, 0
    %p132 = por %p130, %p131
    %p133 = scmp.le.s32.totalorder 1, %s10
    %p134 = scmp.lt.s32.totalorder %s10, 3
    %p135 = pnand %p133, %p134
    %p136 = pneg %p135
    // Predicated region
    $region9: #{_lambda_.7} parent=5 // pred_check
      _
    $region10: #{_lambda_.7} parent=5 // pred_check_branch
      %138 = sbr.rel (%p135) target = $region12
    $region11: #{_lambda_.7} parent=5 // pred_region
      %s139 = ssub.s32 %s10, 1
      // Predicated region
      $region13: #{_lambda_.7} parent=11 // pred_check
        %p140 = pneg %p57
      $region14: #{_lambda_.7} parent=11 // pred_check_branch
        %142 = sbr.rel (%p140) target = $region16
      $region15: #{_lambda_.7} parent=11 // pred_region
        _
      $region16: #{_lambda_.7} parent=11 // pred_fallthru
        _
      // Predicated region
      $region17: #{_lambda_.7} parent=11 // pred_check
        %p143 = pneg %p78
      $region18: #{_lambda_.7} parent=11 // pred_check_branch
        %145 = sbr.rel (%p143) target = $region20
      $region19: #{_lambda_.7} parent=11 // pred_region
        _
      $region20: #{_lambda_.7} parent=11 // pred_fallthru
        _
      // Predicated region
      $region21: #{_lambda_.7} parent=11 // pred_check
        %p146 = pneg %p99
      $region22: #{_lambda_.7} parent=11 // pred_check_branch
        %148 = sbr.rel (%p146) target = $region24
      $region23: #{_lambda_.7} parent=11 // pred_region
        _
      $region24: #{_lambda_.7} parent=11 // pred_fallthru
        _
    $region12: #{_lambda_.7} parent=5 // pred_fallthru
      _
    %p149 = scmp.lt.s32.totalorder %s10, 2
    // Predicated region
    $region25: #{_lambda_.7} parent=5 // pred_check
      %p150 = pneg %p149
    $region26: #{_lambda_.7} parent=5 // pred_check_branch
      %152 = sbr.rel (%p150) target = $region28
    $region27: #{_lambda_.7} parent=5 // pred_region
      // Predicated region
      $region29: #{_lambda_.7} parent=27 // pred_check
        %p153 = pneg %p30
      $region30: #{_lambda_.7} parent=27 // pred_check_branch
        %155 = sbr.rel (%p153) target = $region32
      $region31: #{_lambda_.7} parent=27 // pred_region
        %p156 = scmp.lt.s32.totalorder %s10, 1
        %s157 = scalar_select %p156, %s10, 1
        %s158 = smul.addr %s157, 8
        %s159 = scalar_lea.vmem %s0, %s158
      $region32: #{_lambda_.7} parent=27 // pred_fallthru
        _
    $region28: #{_lambda_.7} parent=5 // pred_fallthru
      _
    %p160 = scmp.le.s32.totalorder 1, %s10
    %p161 = scmp.lt.s32.totalorder %s10, 3
    %p162 = pnand %p160, %p161
    %p163 = pneg %p162
    // Predicated region
    $region33: #{_lambda_.7} parent=5 // pred_check
      _
    $region34: #{_lambda_.7} parent=5 // pred_check_branch
      %165 = sbr.rel (%p162) target = $region36
    $region35: #{_lambda_.7} parent=5 // pred_region
      %s166 = ssub.s32 %s10, 1
      %p167 = scmp.lt.s32.totalorder %s15, 1
      %s168 = scalar_select %p167, %s15, 1
      %s169 = smul.addr %s168, 8
      %s170 = scalar_lea.vmem %s0, %s169
      %p171 = pneg %p36
      %p172 = pneg %p33
      %p173 = pneg %p57
      %p174 = pneg %p54
      %p175 = pneg %p78
      %p176 = pneg %p75
      %p177 = pneg %p99
      %p178 = pneg %p96
      %p179 = pneg %p125
      %p180 = pneg %p122
      %p181 = scmp.lt.s32.totalorder %s15, 1
      %s182 = scalar_select %p181, %s15, 1
      %s183 = smul.addr %s182, 8
      %s184 = scalar_lea.vmem %s4, %s183
      %p185 = scmp.lt.s32.totalorder %s15, 1
      %s186 = scalar_select %p185, %s15, 1
      %s187 = smul.addr %s186, 8
      %s188 = scalar_lea.vmem %s0, %s187
      %p189 = scmp.lt.s32.totalorder %s15, 1
      %s190 = scalar_select %p189, %s15, 1
      %s191 = smul.addr %s190, 8
      %s192 = scalar_lea.vmem %s4, %s191
      %v194 = vld [vmem:[%s188] sm:$0xff]
      %v195 = vld [vmem:[%s1] sm:$0xf]
      %v196 = vpack.c.bf16 %v194, %v194
      %v197 = vpack.c.bf16 %v195, %v195
      %v198 = vld [vmem:[%s2] sm:$0x1]
      %v200 = vlaneseq
      %v201 = vshrl.u32 %v200, 7
      %v202 = vsub.s32 0, %v201
      %v203 = vrot.slane %v198, %v202
      %vm205 = vcmask 31744
      %v207 = vsel %vm205, %v196, 0
      %vm209 = vcmask 1041408
      %v211 = vsel %vm209, %v197, 0
      %213 = vmatprep.subr.bf16.mxu0 0
      %214 = vmatpush1.bf16.msra.mxu0 %v211
      %215 = vmatprep.subr.bf16.mxu0 0
      %216 = vmatpush1.bf16.msra.mxu0 0
      %217 = vmatprep.subr.bf16.mxu0 0
      %218 = vmatpush1.bf16.msra.mxu0 0
      %219 = vmatprep.subr.bf16.mxu0 0
      %220 = vmatpush1.bf16.msra.mxu0 0
      %221 = vmatprep.subr.bf16.mxu0 0
      %222 = vmatpush1.bf16.msra.mxu0 0
      %223 = vmatprep.subr.bf16.mxu0 0
      %224 = vmatpush1.bf16.msra.mxu0 0
      %225 = vmatprep.subr.bf16.mxu0 0
      %226 = vmatpush1.bf16.msra.mxu0 0
      %227 = vmatprep.subr.bf16.mxu0 0
      %228 = vmatpush1.bf16.msra.mxu0 0
      %229 = vmatprep.subr.bf16.mxu0 0
      %230 = vmatpush1.bf16.msra.mxu0 0
      %231 = vmatprep.subr.bf16.mxu0 0
      %232 = vmatpush1.bf16.msra.mxu0 0
      %233 = vmatprep.subr.bf16.mxu0 0
      %234 = vmatpush1.bf16.msra.mxu0 0
      %235 = vmatprep.subr.bf16.mxu0 0
      %236 = vmatpush1.bf16.msra.mxu0 0
      %237 = vmatprep.subr.bf16.mxu0 0
      %238 = vmatpush1.bf16.msra.mxu0 0
      %239 = vmatprep.subr.bf16.mxu0 0
      %240 = vmatpush1.bf16.msra.mxu0 0
      %241 = vmatprep.subr.bf16.mxu0 0
      %242 = vmatpush1.bf16.msra.mxu0 0
      %243 = vmatprep.subr.bf16.mxu0 0
      %244 = vmatpush1.bf16.msra.mxu0 0
      %245 = vmatprep.mubr.bf16.mxu0 0
      %246 = vmatmul.mubr.bf16.gmra.mrb[0].mxu0 %v207
      %v247 = vpop.f32.mrb[0].mxu0
      %v248 = vadd.f32 %v203, %v247
      %v249 = vpop.f32.mrb[0].mxu0
      %v250 = vpop.f32.mrb[0].mxu0
      %v251 = vpop.f32.mrb[0].mxu0
      %252 = vdwg.mxu0
      %v253 = vld [vmem:[%s3] sm:$0xff]
      %v254 = vadd.f32 %v248, %v253
      %vm255 = vcmask 261120
      %256 = vst.msk [vmem:[%s192] sm:$0xff] %vm255, %v254
      %p257 = scmp.lt.s32.totalorder %s15, 1
      %s258 = scalar_select %p257, %s15, 1
      %s259 = smul.addr %s258, 8
      %s260 = scalar_lea.vmem %s4, %s259
      // Predicated region
      $region37: #{_lambda_.7} parent=35 // pred_check
        %p261 = pneg %p122
      $region38: #{_lambda_.7} parent=35 // pred_check_branch
        %263 = sbr.rel (%p261) target = $region40
      $region39: #{_lambda_.7} parent=35 // pred_region
        _
      $region40: #{_lambda_.7} parent=35 // pred_fallthru
        _
    $region36: #{_lambda_.7} parent=5 // pred_fallthru
      _
    %p264 = scmp.le.s32.totalorder 2, %s10
    // Predicated region
    $region41: #{_lambda_.7} parent=5 // pred_check
      %p265 = pneg %p264
    $region42: #{_lambda_.7} parent=5 // pred_check_branch
      %267 = sbr.rel (%p265) target = $region44
    $region43: #{_lambda_.7} parent=5 // pred_region
      %s268 = ssub.s32 %s10, 2
      // Predicated region
      $region45: #{_lambda_.7} parent=43 // pred_check
        %p269 = pneg %p128
      $region46: #{_lambda_.7} parent=43 // pred_check_branch
        %271 = sbr.rel (%p269) target = $region48
      $region47: #{_lambda_.7} parent=43 // pred_region
        %p272 = scmp.lt.s32.totalorder %s16, 1
        %s273 = scalar_select %p272, %s16, 1
        %s274 = smul.addr %s273, 8
        %s275 = scalar_lea.vmem %s4, %s274
      $region48: #{_lambda_.7} parent=43 // pred_fallthru
        _
    $region44: #{_lambda_.7} parent=5 // pred_fallthru
      _
  $region6: #{_lambda_.7} parent=0 // loop_footer
    %s14 = sadd.s32 1, %s10
  $region7: #{_lambda_.7} parent=0 // loop_footer_branch
    %9 = sbr.rel target = $region3
  $region8: #{_lambda_.7} parent=0 // loop_exit
    _

// kernel: _lambda_.10
$region0: #{_lambda_.10}
  #allocation0 [shape = 'u32[]', space=smem, size = 0x4, offset = 0x4, fixed_abs, tag = 'smem constant byte address 0x4 - core index']
  #allocation1 [shape = 'u32[144,128]{1,0:T(1,128)}', space=vmem, size = 0x12000, scoped, tag = 'internal scratch']
  %s0 = inlined_call_operand.vmem [shape: f32[2,8,32], index: 0, kind: input, shape index: {}]
  %s1 = inlined_call_operand.vmem [shape: f32[64,32], index: 1, kind: input, shape index: {}]
  %s2 = inlined_call_operand.vmem [shape: f32[2,8,32], index: 2, kind: output, shape index: {0}]
  %s3 = inlined_call_operand.hbm [shape: s32[2,1,8], index: 3, kind: output, shape index: {1}]
  %s4 = inlined_call_operand.vmem [shape: f32[2,1,1], index: 4, kind: output, shape index: {2}]
  %5 = xla_tuple %s2, %s3, %s4
  %s6 = sld [smem:[#allocation0]]
  $region57: #{_lambda_.10} parent=0
    _
  %s8 = ssub.s32 1, %s6
  %s9 = scalar_select 0, %s8, %s6
  $region1: #{_lambda_.10} parent=0
    #allocation2 [shape = 'u8[1024]{0}', space=vmem, size = 0x400, scoped, tag = 'output window, operand 1']
    #allocation3 [shape = 's32[2]{0}', space=sflag, size = 0x8, scoped, tag = 'scoped memory for _lambda_.10']
    %10 = vsyncpa [#allocation3], 0
    %s11 = scalar_lea.sflag [#allocation3], 1
    %12 = vsyncpa %s11, 0
    loop: start=0, step=1, limit=4
    $region2: #{_lambda_.10} parent=1 // loop_pre_header
      _
    $region3: #{_lambda_.10} parent=1 // loop_header
      %s14 = sphi 0, %s18
      %p15 = scmp.ge.s32.totalorder %s14, 4
      %s24 = sphi 0, %s26
      %s27 = sphi 0, %s24
      %s28 = sphi 0, %s27
      %s44 = sphi 0, %s28
      %s48 = sphi 0, %s48
      %s50 = sphi 0, %s48
      %s51 = sphi 0, %s50
      %s65 = sphi 0, %s51
      %s71 = sphi 0, %s73
      %s74 = sphi 0, %s71
      %s75 = sphi 0, %s74
      %s91 = sphi 0, %s75
      %s97 = sphi 0, %s99
      %s100 = sphi 0, %s97
      %s101 = sphi 0, %s100
      %s117 = sphi 0, %s101
      %s123 = sphi 0, %s125
      %s126 = sphi 0, %s123
      %s127 = sphi 0, %s126
      %s143 = sphi 0, %s127
    $region4: #{_lambda_.10} parent=1 // loop_header_branch
      %17 = sbr.rel (%p15) target = $region8
    $region5: #{_lambda_.10} parent=1 // loop_body
      %s19 = ssub.s32 %s14, 1
      %s20 = ssub.s32 %s14, 2
      %s21 = sadd.s32 %s14, 1
      %s22 = ssub.s32 %s14, %s21
      %p23 = scmp.eq.s32.totalorder %s22, 0
      %s25 = sadd.s32 %s24, 1
      %s26 = scalar_select %p23, %s24, %s25
      %p29 = pneg %p23
      %p30 = scmp.eq.s32.totalorder %s14, 1
      %p31 = por %p29, %p30
      %p32 = scmp.ne.s32.totalorder %s24, %s27
      %p33 = scmp.eq.s32.totalorder %s14, 0
      %p34 = por %p32, %p33
      %p35 = scmp.ne.s32.totalorder %s24, %s27
      %p36 = scmp.eq.s32.totalorder %s19, 1
      %p37 = por %p35, %p36
      %p38 = scmp.ne.s32.totalorder %s27, %s28
      %p39 = scmp.eq.s32.totalorder %s19, 0
      %p40 = por %p38, %p39
      %p41 = scmp.ne.s32.totalorder %s27, %s28
      %p42 = scmp.eq.s32.totalorder %s20, 1
      %p43 = por %p41, %p42
      %p45 = scmp.ne.s32.totalorder %s28, %s44
      %p46 = scmp.eq.s32.totalorder %s20, 0
      %p47 = por %p45, %p46
      %s49 = sadd.s32 %s48, 1
      %p52 = scmp.eq.s32.totalorder %s14, 1
      %p53 = scmp.ne.s32.totalorder %s48, %s50
      %p54 = scmp.eq.s32.totalorder %s14, 0
      %p55 = por %p53, %p54
      %p56 = scmp.ne.s32.totalorder %s48, %s50
      %p57 = scmp.eq.s32.totalorder %s19, 1
      %p58 = por %p56, %p57
      %p59 = scmp.ne.s32.totalorder %s50, %s51
      %p60 = scmp.eq.s32.totalorder %s19, 0
      %p61 = por %p59, %p60
      %p62 = scmp.ne.s32.totalorder %s50, %s51
      %p63 = scmp.eq.s32.totalorder %s20, 1
      %p64 = por %p62, %p63
      %p66 = scmp.ne.s32.totalorder %s51, %s65
      %p67 = scmp.eq.s32.totalorder %s20, 0
      %p68 = por %p66, %p67
      %s69 = ssub.s32 %s14, %s21
      %p70 = scmp.eq.s32.totalorder %s69, 0
      %s72 = sadd.s32 %s71, 1
      %s73 = scalar_select %p70, %s71, %s72
      %p76 = pneg %p70
      %p77 = scmp.eq.s32.totalorder %s14, 1
      %p78 = por %p76, %p77
      %p79 = scmp.ne.s32.totalorder %s71, %s74
      %p80 = scmp.eq.s32.totalorder %s14, 0
      %p81 = por %p79, %p80
      %p82 = scmp.ne.s32.totalorder %s71, %s74
      %p83 = scmp.eq.s32.totalorder %s19, 1
      %p84 = por %p82, %p83
      %p85 = scmp.ne.s32.totalorder %s74, %s75
      %p86 = scmp.eq.s32.totalorder %s19, 0
      %p87 = por %p85, %p86
      %p88 = scmp.ne.s32.totalorder %s74, %s75
      %p89 = scmp.eq.s32.totalorder %s20, 1
      %p90 = por %p88, %p89
      %p92 = scmp.ne.s32.totalorder %s75, %s91
      %p93 = scmp.eq.s32.totalorder %s20, 0
      %p94 = por %p92, %p93
      %s95 = ssub.s32 %s14, %s21
      %p96 = scmp.eq.s32.totalorder %s95, 0
      %s98 = sadd.s32 %s97, 1
      %s99 = scalar_select %p96, %s97, %s98
      %p102 = pneg %p96
      %p103 = scmp.eq.s32.totalorder %s14, 1
      %p104 = por %p102, %p103
      %p105 = scmp.ne.s32.totalorder %s97, %s100
      %p106 = scmp.eq.s32.totalorder %s14, 0
      %p107 = por %p105, %p106
      %p108 = scmp.ne.s32.totalorder %s97, %s100
      %p109 = scmp.eq.s32.totalorder %s19, 1
      %p110 = por %p108, %p109
      %p111 = scmp.ne.s32.totalorder %s100, %s101
      %p112 = scmp.eq.s32.totalorder %s19, 0
      %p113 = por %p111, %p112
      %p114 = scmp.ne.s32.totalorder %s100, %s101
      %p115 = scmp.eq.s32.totalorder %s20, 1
      %p116 = por %p114, %p115
      %p118 = scmp.ne.s32.totalorder %s101, %s117
      %p119 = scmp.eq.s32.totalorder %s20, 0
      %p120 = por %p118, %p119
      %s121 = ssub.s32 %s14, %s21
      %p122 = scmp.eq.s32.totalorder %s121, 0
      %s124 = sadd.s32 %s123, 1
      %s125 = scalar_select %p122, %s123, %s124
      %p128 = pneg %p122
      %p129 = scmp.eq.s32.totalorder %s14, 1
      %p130 = por %p128, %p129
      %p131 = scmp.ne.s32.totalorder %s123, %s126
      %p132 = scmp.eq.s32.totalorder %s14, 0
      %p133 = por %p131, %p132
      %p134 = scmp.ne.s32.totalorder %s123, %s126
      %p135 = scmp.eq.s32.totalorder %s19, 1
      %p136 = por %p134, %p135
      %p137 = scmp.ne.s32.totalorder %s126, %s127
      %p138 = scmp.eq.s32.totalorder %s19, 0
      %p139 = por %p137, %p138
      %p140 = scmp.ne.s32.totalorder %s126, %s127
      %p141 = scmp.eq.s32.totalorder %s20, 1
      %p142 = por %p140, %p141
      %p144 = scmp.ne.s32.totalorder %s127, %s143
      %p145 = scmp.eq.s32.totalorder %s20, 0
      %p146 = por %p144, %p145
      %p147 = scmp.le.s32.totalorder 1, %s14
      %p148 = scmp.lt.s32.totalorder %s14, 3
      %p149 = pnand %p147, %p148
      %p150 = pneg %p149
      // Predicated region
      $region9: #{_lambda_.10} parent=5 // pred_check
        _
      $region10: #{_lambda_.10} parent=5 // pred_check_branch
        %152 = sbr.rel (%p149) target = $region12
      $region11: #{_lambda_.10} parent=5 // pred_region
        %s153 = ssub.s32 %s14, 1
        // Predicated region
        $region13: #{_lambda_.10} parent=11 // pred_check
          %p154 = pneg %p61
        $region14: #{_lambda_.10} parent=11 // pred_check_branch
          %156 = sbr.rel (%p154) target = $region16
        $region15: #{_lambda_.10} parent=11 // pred_region
          _
        $region16: #{_lambda_.10} parent=11 // pred_fallthru
          _
      $region12: #{_lambda_.10} parent=5 // pred_fallthru
        _
      %p157 = scmp.lt.s32.totalorder %s14, 2
      // Predicated region
      $region17: #{_lambda_.10} parent=5 // pred_check
        %p158 = pneg %p157
      $region18: #{_lambda_.10} parent=5 // pred_check_branch
        %160 = sbr.rel (%p158) target = $region20
      $region19: #{_lambda_.10} parent=5 // pred_region
        // Predicated region
        $region21: #{_lambda_.10} parent=19 // pred_check
          %p161 = pneg %p34
        $region22: #{_lambda_.10} parent=19 // pred_check_branch
          %163 = sbr.rel (%p161) target = $region24
        $region23: #{_lambda_.10} parent=19 // pred_region
          %p164 = scmp.lt.s32.totalorder %s14, 1
          %s165 = scalar_select %p164, %s14, 1
          %s166 = smul.addr %s165, 8
          %s167 = scalar_lea.vmem %s0, %s166
        $region24: #{_lambda_.10} parent=19 // pred_fallthru
          _
      $region20: #{_lambda_.10} parent=5 // pred_fallthru
        _
      %p168 = scmp.le.s32.totalorder 1, %s14
      %p169 = scmp.lt.s32.totalorder %s14, 3
      %p170 = pnand %p168, %p169
      %p171 = pneg %p170
      // Predicated region
      $region25: #{_lambda_.10} parent=5 // pred_check
        _
      $region26: #{_lambda_.10} parent=5 // pred_check_branch
        %173 = sbr.rel (%p170) target = $region28
      $region27: #{_lambda_.10} parent=5 // pred_region
        %s174 = ssub.s32 %s14, 1
        %p175 = scmp.lt.s32.totalorder %s19, 1
        %s176 = scalar_select %p175, %s19, 1
        %s177 = smul.addr %s176, 8
        %s178 = scalar_lea.vmem %s0, %s177
        %p179 = pneg %p40
        %p180 = pneg %p37
        %p181 = pneg %p61
        %p182 = pneg %p58
        %p183 = pneg %p87
        %p184 = pneg %p84
        %p185 = scmp.lt.s32.totalorder %s19, 1
        %s186 = scalar_select %p185, %s19, 1
        %s187 = smul.addr %s186, 8
        %s188 = scalar_lea.vmem %s2, %s187
        %p189 = pneg %p113
        %p190 = pneg %p110
        %s191 = sand.u32 %s100, 1
        %s192 = scalar_lea.sflag [#allocation3], %s191
        %s193 = sand.u32 %s100, 1
        %s194 = scalar_lea.vmem [#allocation2], %s193
        %p195 = pneg %p139
        %p196 = pneg %p136
        %p197 = scmp.lt.s32.totalorder %s19, 1
        %s198 = scalar_select %p197, %s19, 1
        %s199 = scalar_lea.vmem %s4, %s198
        %p200 = scmp.lt.s32.totalorder %s19, 1
        %s201 = scalar_select %p200, %s19, 1
        %s202 = smul.addr %s201, 8
        %s203 = scalar_lea.vmem %s0, %s202
        %p204 = scmp.lt.s32.totalorder %s19, 1
        %s205 = scalar_select %p204, %s19, 1
        %s206 = smul.addr %s205, 8
        %s207 = scalar_lea.vmem %s2, %s206
        %p208 = scmp.lt.s32.totalorder %s19, 1
        %s209 = scalar_select %p208, %s19, 1
        %s210 = scalar_lea.vmem %s4, %s209
        %v211 = vld [vmem:[%s203] sm:$0xff]
        %v212 = vld [vmem:[%s1] sm:$0xff]
        %v213 = vld [vmem:[%s1 + $0x8] sm:$0xff]
        %v214 = vld [vmem:[%s1 + $0x10] sm:$0xff]
        %v215 = vld [vmem:[%s1 + $0x18] sm:$0xff]
        %v216 = vld [vmem:[%s1 + $0x20] sm:$0xff]
        %v217 = vld [vmem:[%s1 + $0x28] sm:$0xff]
        %v218 = vld [vmem:[%s1 + $0x30] sm:$0xff]
        %v219 = vld [vmem:[%s1 + $0x38] sm:$0xff]
        %v220 = vmul.f32 %v212, %v212
        %v221 = vmul.f32 %v213, %v213
        %v222 = vmul.f32 %v214, %v214
        %v223 = vmul.f32 %v215, %v215
        %v224 = vmul.f32 %v216, %v216
        %v225 = vmul.f32 %v217, %v217
        %v226 = vmul.f32 %v218, %v218
        %v227 = vmul.f32 %v219, %v219
        %vm228 = vcmask 261120
        %v229 = vsel %vm228, %v220, 0.0
        %230 = vadd.xlane.f32.xlu0 %v229
        %v231 = vpop.xlane.xlu0 %230
        %v232 = vsel %vm228, %v221, 0.0
        %233 = vadd.xlane.f32.xlu0 %v232
        %v234 = vpop.xlane.xlu0 %233
        %v235 = vsel %vm228, %v222, 0.0
        %236 = vadd.xlane.f32.xlu0 %v235
        %v237 = vpop.xlane.xlu0 %236
        %v238 = vsel %vm228, %v223, 0.0
        %239 = vadd.xlane.f32.xlu0 %v238
        %v240 = vpop.xlane.xlu0 %239
        %v241 = vsel %vm228, %v224, 0.0
        %242 = vadd.xlane.f32.xlu0 %v241
        %v243 = vpop.xlane.xlu0 %242
        %v244 = vsel %vm228, %v225, 0.0
        %245 = vadd.xlane.f32.xlu0 %v244
        %v246 = vpop.xlane.xlu0 %245
        %v247 = vsel %vm228, %v226, 0.0
        %248 = vadd.xlane.f32.xlu0 %v247
        %v249 = vpop.xlane.xlu0 %248
        %v250 = vsel %vm228, %v227, 0.0
        %251 = vadd.xlane.f32.xlu0 %v250
        %v252 = vpop.xlane.xlu0 %251
        %v254 = vsel %vm228, %v212, 0
        %v257 = vsel %vm228, %v213, 0
        %v260 = vsel %vm228, %v214, 0
        %v263 = vsel %vm228, %v215, 0
        %v266 = vsel %vm228, %v216, 0
        %v269 = vsel %vm228, %v217, 0
        %v272 = vsel %vm228, %v218, 0
        %v275 = vsel %vm228, %v219, 0
        %v278 = vsel %vm228, %v211, 0
        %280 = vmatprep.subr.mxu0 0.0
        %281 = vmatpush1.xpose.msra.mxu0 %v278
        %282 = vmatprep.subr.mxu0 0.0
        %283 = vmatpush1.xpose.msra.mxu0 0.0
        %284 = vmatprep.subr.mxu0 0.0
        %285 = vmatpush1.xpose.msra.mxu0 0.0
        %286 = vmatprep.subr.mxu0 0.0
        %287 = vmatpush1.xpose.msra.mxu0 0.0
        %288 = vmatprep.subr.mxu0 0.0
        %289 = vmatpush1.xpose.msra.mxu0 0.0
        %290 = vmatprep.subr.mxu0 0.0
        %291 = vmatpush1.xpose.msra.mxu0 0.0
        %292 = vmatprep.subr.mxu0 0.0
        %293 = vmatpush1.xpose.msra.mxu0 0.0
        %294 = vmatprep.subr.mxu0 0.0
        %295 = vmatpush1.xpose.msra.mxu0 0.0
        %296 = vmatprep.subr.mxu0 0.0
        %297 = vmatpush1.xpose.msra.mxu0 0.0
        %298 = vmatprep.subr.mxu0 0.0
        %299 = vmatpush1.xpose.msra.mxu0 0.0
        %300 = vmatprep.subr.mxu0 0.0
        %301 = vmatpush1.xpose.msra.mxu0 0.0
        %302 = vmatprep.subr.mxu0 0.0
        %303 = vmatpush1.xpose.msra.mxu0 0.0
        %304 = vmatprep.subr.mxu0 0.0
        %305 = vmatpush1.xpose.msra.mxu0 0.0
        %306 = vmatprep.subr.mxu0 0.0
        %307 = vmatpush1.xpose.msra.mxu0 0.0
        %308 = vmatprep.subr.mxu0 0.0
        %309 = vmatpush1.xpose.msra.mxu0 0.0
        %310 = vmatprep.subr.mxu0 0.0
        %311 = vmatpush1.xpose.msra.mxu0 0.0
        %312 = vmatprep.subr.mxu0 0.0
        %313 = vmatpush1.xpose.msra.mxu0 0.0
        %314 = vmatprep.subr.mxu0 0.0
        %315 = vmatpush1.xpose.msra.mxu0 0.0
        %316 = vmatprep.subr.mxu0 0.0
        %317 = vmatpush1.xpose.msra.mxu0 0.0
        %318 = vmatprep.subr.mxu0 0.0
        %319 = vmatpush1.xpose.msra.mxu0 0.0
        %320 = vmatprep.subr.mxu0 0.0
        %321 = vmatpush1.xpose.msra.mxu0 0.0
        %322 = vmatprep.subr.mxu0 0.0
        %323 = vmatpush1.xpose.msra.mxu0 0.0
        %324 = vmatprep.subr.mxu0 0.0
        %325 = vmatpush1.xpose.msra.mxu0 0.0
        %326 = vmatprep.subr.mxu0 0.0
        %327 = vmatpush1.xpose.msra.mxu0 0.0
        %328 = vmatprep.subr.mxu0 0.0
        %329 = vmatpush1.xpose.msra.mxu0 0.0
        %330 = vmatprep.subr.mxu0 0.0
        %331 = vmatpush1.xpose.msra.mxu0 0.0
        %332 = vmatprep.subr.mxu0 0.0
        %333 = vmatpush1.xpose.msra.mxu0 0.0
        %334 = vmatprep.subr.mxu0 0.0
        %335 = vmatpush1.xpose.msra.mxu0 0.0
        %336 = vmatprep.subr.mxu0 0.0
        %337 = vmatpush1.xpose.msra.mxu0 0.0
        %338 = vmatprep.subr.mxu0 0.0
        %339 = vmatpush1.xpose.msra.mxu0 0.0
        %340 = vmatprep.subr.mxu0 0.0
        %341 = vmatpush1.xpose.msra.mxu0 0.0
        %342 = vmatprep.subr.mxu0 0.0
        %343 = vmatpush1.xpose.msra.mxu0 0.0
        %344 = vmatprep.mubr.f32.mxu0 0.0
        %345 = vmatmul.mubr.f32.gmra.mrb[0].mxu0 %v254
        %v346 = vpop.f32.mrb[0].mxu0
        %v347 = vadd.f32 0.0, %v346
        %v348 = vpop.f32.mrb[0].mxu0
        %349 = vmatprep.mubr.f32.mxu0 0.0
        %350 = vmatmul.mubr.f32.gmra.mrb[0].mxu0 %v257
        %v351 = vpop.f32.mrb[0].mxu0
        %v352 = vadd.f32 0.0, %v351
        %v353 = vpop.f32.mrb[0].mxu0
        %354 = vmatprep.mubr.f32.mxu0 0.0
        %355 = vmatmul.mubr.f32.gmra.mrb[0].mxu0 %v260
        %v356 = vpop.f32.mrb[0].mxu0
        %v357 = vadd.f32 0.0, %v356
        %v358 = vpop.f32.mrb[0].mxu0
        %359 = vmatprep.mubr.f32.mxu0 0.0
        %360 = vmatmul.mubr.f32.gmra.mrb[0].mxu0 %v263
        %v361 = vpop.f32.mrb[0].mxu0
        %v362 = vadd.f32 0.0, %v361
        %v363 = vpop.f32.mrb[0].mxu0
        %364 = vmatprep.mubr.f32.mxu0 0.0
        %365 = vmatmul.mubr.f32.gmra.mrb[0].mxu0 %v266
        %v366 = vpop.f32.mrb[0].mxu0
        %v367 = vadd.f32 0.0, %v366
        %v368 = vpop.f32.mrb[0].mxu0
        %369 = vmatprep.mubr.f32.mxu0 0.0
        %370 = vmatmul.mubr.f32.gmra.mrb[0].mxu0 %v269
        %v371 = vpop.f32.mrb[0].mxu0
        %v372 = vadd.f32 0.0, %v371
        %v373 = vpop.f32.mrb[0].mxu0
        %374 = vmatprep.mubr.f32.mxu0 0.0
        %375 = vmatmul.mubr.f32.gmra.mrb[0].mxu0 %v272
        %v376 = vpop.f32.mrb[0].mxu0
        %v377 = vadd.f32 0.0, %v376
        %v378 = vpop.f32.mrb[0].mxu0
        %379 = vmatprep.mubr.f32.mxu0 0.0
        %380 = vmatmul.mubr.f32.gmra.mrb[0].mxu0 %v275
        %v381 = vpop.f32.mrb[0].mxu0
        %v382 = vadd.f32 0.0, %v381
        %v383 = vpop.f32.mrb[0].mxu0
        %384 = vdwg.mxu0
        %v385 = vmul.f32 %v347, 2.0
        %v386 = vmul.f32 %v352, 2.0
        %v387 = vmul.f32 %v357, 2.0
        %v388 = vmul.f32 %v362, 2.0
        %v389 = vmul.f32 %v367, 2.0
        %v390 = vmul.f32 %v372, 2.0
        %v391 = vmul.f32 %v377, 2.0
        %v392 = vmul.f32 %v382, 2.0
        %v393 = vsub.f32 %v231, %v385
        %v394 = vsub.f32 %v234, %v386
        %v395 = vsub.f32 %v237, %v387
        %v396 = vsub.f32 %v240, %v388
        %v397 = vsub.f32 %v243, %v389
        %v398 = vsub.f32 %v246, %v390
        %v399 = vsub.f32 %v249, %v391
        %v400 = vsub.f32 %v252, %v392
        %vm401 = vcmask 64512
        %v402 = vsel %vm401, %v393, inf
        %v403 = vsel %vm401, %v394, inf
        %v404 = vsel %vm401, %v395, inf
        %v405 = vsel %vm401, %v396, inf
        %v406 = vsel %vm401, %v397, inf
        %v407 = vmin.f32 %v402, %v406
        %v408 = vsel %vm401, %v398, inf
        %v409 = vmin.f32 %v403, %v408
        %v410 = vsel %vm401, %v399, inf
        %v411 = vmin.f32 %v404, %v410
        %v412 = vsel %vm401, %v400, inf
        %v413 = vmin.f32 %v405, %v412
        %v414 = vmin.f32 %v407, %v409
        %v415 = vmin.f32 %v411, %v413
        %v416 = vmin.f32 %v414, %v415
        %v417 = vrot.slane %v416, 4
        %v418 = vmin.f32 %v416, %v417
        %v419 = vrot.slane %v418, 2
        %v420 = vmin.f32 %v418, %v419
        %v421 = vrot.slane %v420, 1
        %v422 = vmin.f32 %v420, %v421
        %v423 = vlaneseq
        %v424 = vshrl.u32 %v423, 7
        %v425 = vadd.s32 %v424, 8
        %v426 = vadd.s32 %v424, 16
        %v427 = vadd.s32 %v424, 24
        %v428 = vadd.s32 %v424, 32
        %v429 = vadd.s32 %v424, 40
        %v430 = vadd.s32 %v424, 48
        %v431 = vadd.s32 %v424, 56
        %vm432 = vcmp.le.f32.partialorder %v393, %v422
        %vm433 = vcmp.le.f32.partialorder %v394, %v422
        %vm434 = vcmp.le.f32.partialorder %v395, %v422
        %vm435 = vcmp.le.f32.partialorder %v396, %v422
        %vm436 = vcmp.le.f32.partialorder %v397, %v422
        %vm437 = vcmp.le.f32.partialorder %v398, %v422
        %vm438 = vcmp.le.f32.partialorder %v399, %v422
        %vm439 = vcmp.le.f32.partialorder %v400, %v422
        %v440 = vsel %vm432, %v424, 64
        %v441 = vsel %vm433, %v425, 64
        %v442 = vsel %vm434, %v426, 64
        %v443 = vsel %vm435, %v427, 64
        %v444 = vsel %vm436, %v428, 64
        %v445 = vsel %vm437, %v429, 64
        %v446 = vsel %vm438, %v430, 64
        %v447 = vsel %vm439, %v431, 64
        %v448 = vsel %vm401, %v440, 2147483647
        %v449 = vsel %vm401, %v441, 2147483647
        %v450 = vsel %vm401, %v442, 2147483647
        %v451 = vsel %vm401, %v443, 2147483647
        %v452 = vsel %vm401, %v444, 2147483647
        %vm453 = vcmp.lt.s32.totalorder %v448, %v452
        %v454 = vsel %vm453, %v448, %v452
        %v455 = vsel %vm401, %v445, 2147483647
        %vm456 = vcmp.lt.s32.totalorder %v449, %v455
        %v457 = vsel %vm456, %v449, %v455
        %v458 = vsel %vm401, %v446, 2147483647
        %vm459 = vcmp.lt.s32.totalorder %v450, %v458
        %v460 = vsel %vm459, %v450, %v458
        %v461 = vsel %vm401, %v447, 2147483647
        %vm462 = vcmp.lt.s32.totalorder %v451, %v461
        %v463 = vsel %vm462, %v451, %v461
        %vm464 = vcmp.lt.s32.totalorder %v454, %v457
        %v465 = vsel %vm464, %v454, %v457
        %vm466 = vcmp.lt.s32.totalorder %v460, %v463
        %v467 = vsel %vm466, %v460, %v463
        %vm468 = vcmp.lt.s32.totalorder %v465, %v467
        %v469 = vsel %vm468, %v465, %v467
        %v470 = vrot.slane %v469, 4
        %vm471 = vcmp.lt.s32.totalorder %v469, %v470
        %v472 = vsel %vm471, %v469, %v470
        %v473 = vrot.slane %v472, 2
        %vm474 = vcmp.lt.s32.totalorder %v472, %v473
        %v475 = vsel %vm474, %v472, %v473
        %v476 = vrot.slane %v475, 1
        %vm477 = vcmp.lt.s32.totalorder %v475, %v476
        %v478 = vsel %vm477, %v475, %v476
        %vm479 = vcmp.eq.s32.totalorder %v424, %v478
        %vm480 = vcmp.eq.s32.totalorder %v425, %v478
        %vm481 = vcmp.eq.s32.totalorder %v426, %v478
        %vm482 = vcmp.eq.s32.totalorder %v427, %v478
        %vm483 = vcmp.eq.s32.totalorder %v428, %v478
        %vm484 = vcmp.eq.s32.totalorder %v429, %v478
        %vm485 = vcmp.eq.s32.totalorder %v430, %v478
        %vm486 = vcmp.eq.s32.totalorder %v431, %v478
        %v487 = vsel %vm479, 1, 0
        %v488 = vsel %vm480, 1, 0
        %v489 = vsel %vm481, 1, 0
        %v490 = vsel %vm482, 1, 0
        %v491 = vsel %vm483, 1, 0
        %v492 = vsel %vm484, 1, 0
        %v493 = vsel %vm485, 1, 0
        %v494 = vsel %vm486, 1, 0
        %v495 = vcvt.s32.f32 %v487
        %v496 = vcvt.s32.f32 %v488
        %v497 = vcvt.s32.f32 %v489
        %v498 = vcvt.s32.f32 %v490
        %v499 = vcvt.s32.f32 %v491
        %v500 = vcvt.s32.f32 %v492
        %v501 = vcvt.s32.f32 %v493
        %v502 = vcvt.s32.f32 %v494
        %503 = vxpose.xlu0.b32.start [1/16] %v495, 128
        %504 = vxpose.xlu0.b32.cont [2/16] %v496, 128
        %505 = vxpose.xlu0.b32.cont [3/16] %v497, 128
        %506 = vxpose.xlu0.b32.cont [4/16] %v498, 128
        %507 = vxpose.xlu0.b32.cont [5/16] %v499, 128
        %508 = vxpose.xlu0.b32.cont [6/16] %v500, 128
        %509 = vxpose.xlu0.b32.cont [7/16] %v501, 128
        %510 = vxpose.xlu0.b32.cont [8/16] %v502, 128
        %511 = vxpose.xlu0.b32.cont [9/16] 0.0, 128
        %512 = vxpose.xlu0.b32.cont [10/16] 0.0, 128
        %513 = vxpose.xlu0.b32.cont [11/16] 0.0, 128
        %514 = vxpose.xlu0.b32.cont [12/16] 0.0, 128
        %515 = vxpose.xlu0.b32.cont [13/16] 0.0, 128
        %516 = vxpose.xlu0.b32.cont [14/16] 0.0, 128
        %517 = vxpose.xlu0.b32.cont [15/16] 0.0, 128
        %518 = vxpose.xlu0.b32.end [16/16] 0.0, 128
        %v519 = vpop.trf.xlu0
        %v520 = vpop.trf.xlu0
        %v521 = vpop.trf.xlu0
        %v522 = vpop.trf.xlu0
        %v523 = vpop.trf.xlu0
        %v524 = vpop.trf.xlu0
        %v525 = vpop.trf.xlu0
        %v526 = vpop.trf.xlu0
        %v527 = vpop.trf.xlu0
        %v528 = vpop.trf.xlu0
        %v529 = vpop.trf.xlu0
        %v530 = vpop.trf.xlu0
        %v531 = vpop.trf.xlu0
        %v532 = vpop.trf.xlu0
        %v533 = vpop.trf.xlu0
        %v534 = vpop.trf.xlu0
        %vm535 = vcmask 523264
        %v537 = vsel %vm535, %v519, 0
        %539 = vmatprep.subr.mxu0 0.0
        %540 = vmatpush1.msra.mxu0 %v212
        %541 = vmatprep.subr.mxu0 0.0
        %542 = vmatpush1.msra.mxu0 %v213
        %543 = vmatprep.subr.mxu0 0.0
        %544 = vmatpush1.msra.mxu0 %v214
        %545 = vmatprep.subr.mxu0 0.0
        %546 = vmatpush1.msra.mxu0 %v215
        %547 = vmatprep.subr.mxu0 0.0
        %548 = vmatpush1.msra.mxu0 %v216
        %549 = vmatprep.subr.mxu0 0.0
        %550 = vmatpush1.msra.mxu0 %v217
        %551 = vmatprep.subr.mxu0 0.0
        %552 = vmatpush1.msra.mxu0 %v218
        %553 = vmatprep.subr.mxu0 0.0
        %554 = vmatpush1.msra.mxu0 %v219
        %555 = vmatprep.subr.mxu0 0.0
        %556 = vmatpush1.msra.mxu0 0.0
        %557 = vmatprep.subr.mxu0 0.0
        %558 = vmatpush1.msra.mxu0 0.0
        %559 = vmatprep.subr.mxu0 0.0
        %560 = vmatpush1.msra.mxu0 0.0
        %561 = vmatprep.subr.mxu0 0.0
        %562 = vmatpush1.msra.mxu0 0.0
        %563 = vmatprep.subr.mxu0 0.0
        %564 = vmatpush1.msra.mxu0 0.0
        %565 = vmatprep.subr.mxu0 0.0
        %566 = vmatpush1.msra.mxu0 0.0
        %567 = vmatprep.subr.mxu0 0.0
        %568 = vmatpush1.msra.mxu0 0.0
        %569 = vmatprep.subr.mxu0 0.0
        %570 = vmatpush1.msra.mxu0 0.0
        %571 = vmatprep.subr.mxu0 0.0
        %572 = vmatpush1.msra.mxu0 0.0
        %573 = vmatprep.subr.mxu0 0.0
        %574 = vmatpush1.msra.mxu0 0.0
        %575 = vmatprep.subr.mxu0 0.0
        %576 = vmatpush1.msra.mxu0 0.0
        %577 = vmatprep.subr.mxu0 0.0
        %578 = vmatpush1.msra.mxu0 0.0
        %579 = vmatprep.subr.mxu0 0.0
        %580 = vmatpush1.msra.mxu0 0.0
        %581 = vmatprep.subr.mxu0 0.0
        %582 = vmatpush1.msra.mxu0 0.0
        %583 = vmatprep.subr.mxu0 0.0
        %584 = vmatpush1.msra.mxu0 0.0
        %585 = vmatprep.subr.mxu0 0.0
        %586 = vmatpush1.msra.mxu0 0.0
        %587 = vmatprep.subr.mxu0 0.0
        %588 = vmatpush1.msra.mxu0 0.0
        %589 = vmatprep.subr.mxu0 0.0
        %590 = vmatpush1.msra.mxu0 0.0
        %591 = vmatprep.subr.mxu0 0.0
        %592 = vmatpush1.msra.mxu0 0.0
        %593 = vmatprep.subr.mxu0 0.0
        %594 = vmatpush1.msra.mxu0 0.0
        %595 = vmatprep.subr.mxu0 0.0
        %596 = vmatpush1.msra.mxu0 0.0
        %597 = vmatprep.subr.mxu0 0.0
        %598 = vmatpush1.msra.mxu0 0.0
        %599 = vmatprep.subr.mxu0 0.0
        %600 = vmatpush1.msra.mxu0 0.0
        %601 = vmatprep.subr.mxu0 0.0
        %602 = vmatpush1.msra.mxu0 0.0
        %603 = vmatprep.mubr.f32.mxu0 0.0
        %604 = vmatmul.mubr.f32.gmra.mrb[0].mxu0 %v537
        %v605 = vpop.f32.mrb[0].mxu0
        %v606 = vadd.f32 0.0, %v605
        %v607 = vpop.f32.mrb[0].mxu0
        %608 = vdwg.mxu0
        %609 = vst.msk [vmem:[%s207] sm:$0xff] %vm228, %v606
        %vm610 = vcmask 57344
        %611 = vst.msk [vmem:[%s194] sm:$0x1] %vm610, %v478
        %v612 = vsub.f32 %v606, %v211
        %v613 = vmul.f32 %v612, %v612
        %v614 = vsel %vm228, %v613, 0.0
        %615 = vadd.xlane.f32.xlu0 %v614
        %v616 = vpop.xlane.xlu0 %615
        %v617 = vrot.slane %v616, 4
        %v618 = vadd.f32 %v616, %v617
        %v619 = vrot.slane %v618, 2
        %v620 = vadd.f32 %v618, %v619
        %v621 = vrot.slane %v620, 1
        %v622 = vadd.f32 %v620, %v621
        %vm623 = vcmask 0
        %624 = vst.msk [vmem:[%s210] sm:$0x1] %vm623, %v622
        %p625 = scmp.lt.s32.totalorder %s19, 1
        %s626 = scalar_select %p625, %s19, 1
        %s627 = smul.addr %s626, 8
        %s628 = scalar_lea.vmem %s2, %s627
        %s629 = sand.u32 %s100, 1
        %s630 = scalar_lea.sflag [#allocation3], %s629
        %s631 = sand.u32 %s100, 1
        %s632 = scalar_lea.vmem [#allocation2], %s631
        %p633 = scmp.lt.s32.totalorder %s19, 1
        %s634 = scalar_select %p633, %s19, 1
        %s635 = scalar_lea.vmem %s4, %s634
        // Predicated region
        $region29: #{_lambda_.10} parent=27 // pred_check
          %p636 = pneg %p84
        $region30: #{_lambda_.10} parent=27 // pred_check_branch
          %638 = sbr.rel (%p636) target = $region32
        $region31: #{_lambda_.10} parent=27 // pred_region
          _
        $region32: #{_lambda_.10} parent=27 // pred_fallthru
          _
        // Predicated region
        $region33: #{_lambda_.10} parent=27 // pred_check
          %p639 = pneg %p110
        $region34: #{_lambda_.10} parent=27 // pred_check_branch
          %641 = sbr.rel (%p639) target = $region36
        $region35: #{_lambda_.10} parent=27 // pred_region
          %s643 = ssub.s32 16, 16
          %644 = vsyncadd %s630, %s643
          %s645 = smul.addr %s19, 16
          %s646 = scalar_lea.hbm %s3, %s645
          %s648 = sshll.u32 %s632, 4
          %s649 = int_to_ptr.vmem [resolvable:$true] %s648
          %651 = dma.vmem_to_hbm [thread:$0]  %s649, 16, %s646, %s630
        $region36: #{_lambda_.10} parent=27 // pred_fallthru
          _
        // Predicated region
        $region37: #{_lambda_.10} parent=27 // pred_check
          %p652 = pneg %p136
        $region38: #{_lambda_.10} parent=27 // pred_check_branch
          %654 = sbr.rel (%p652) target = $region40
        $region39: #{_lambda_.10} parent=27 // pred_region
          _
        $region40: #{_lambda_.10} parent=27 // pred_fallthru
          _
      $region28: #{_lambda_.10} parent=5 // pred_fallthru
        _
      %p655 = scmp.le.s32.totalorder 2, %s14
      // Predicated region
      $region41: #{_lambda_.10} parent=5 // pred_check
        %p656 = pneg %p655
      $region42: #{_lambda_.10} parent=5 // pred_check_branch
        %658 = sbr.rel (%p656) target = $region44
      $region43: #{_lambda_.10} parent=5 // pred_region
        %s659 = ssub.s32 %s14, 2
        // Predicated region
        $region45: #{_lambda_.10} parent=43 // pred_check
          %p660 = pneg %p90
        $region46: #{_lambda_.10} parent=43 // pred_check_branch
          %662 = sbr.rel (%p660) target = $region48
        $region47: #{_lambda_.10} parent=43 // pred_region
          %p663 = scmp.lt.s32.totalorder %s20, 1
          %s664 = scalar_select %p663, %s20, 1
          %s665 = smul.addr %s664, 8
          %s666 = scalar_lea.vmem %s2, %s665
        $region48: #{_lambda_.10} parent=43 // pred_fallthru
          _
        // Predicated region
        $region49: #{_lambda_.10} parent=43 // pred_check
          %p667 = pneg %p116
        $region50: #{_lambda_.10} parent=43 // pred_check_branch
          %669 = sbr.rel (%p667) target = $region52
        $region51: #{_lambda_.10} parent=43 // pred_region
          %s670 = sand.u32 %s101, 1
          %s671 = scalar_lea.sflag [#allocation3], %s670
          %s672 = sand.u32 %s101, 1
          %s673 = scalar_lea.vmem [#allocation2], %s672
          %674 = dma.done %s671, 16
        $region52: #{_lambda_.10} parent=43 // pred_fallthru
          _
        // Predicated region
        $region53: #{_lambda_.10} parent=43 // pred_check
          %p675 = pneg %p142
        $region54: #{_lambda_.10} parent=43 // pred_check_branch
          %677 = sbr.rel (%p675) target = $region56
        $region55: #{_lambda_.10} parent=43 // pred_region
          %p678 = scmp.lt.s32.totalorder %s20, 1
          %s679 = scalar_select %p678, %s20, 1
          %s680 = scalar_lea.vmem %s4, %s679
        $region56: #{_lambda_.10} parent=43 // pred_fallthru
          _
      $region44: #{_lambda_.10} parent=5 // pred_fallthru
        _
    $region6: #{_lambda_.10} parent=1 // loop_footer
      %s18 = sadd.s32 1, %s14
    $region7: #{_lambda_.10} parent=1 // loop_footer_branch
      %13 = sbr.rel target = $region3
    $region8: #{_lambda_.10} parent=1 // loop_exit
      _
    %681 = vsyncpa [#allocation3], 1
    %s682 = scalar_lea.sflag [#allocation3], 1
    %683 = vsyncpa %s682, 1

// kernel: _lambda_.11
$region0: #{_lambda_.11}
  #allocation0 [shape = 'u32[]', space=smem, size = 0x4, offset = 0x4, fixed_abs, tag = 'smem constant byte address 0x4 - core index']
  #allocation1 [shape = 'u32[144,128]{1,0:T(1,128)}', space=vmem, size = 0x12000, scoped, tag = 'internal scratch']
  %s0 = inlined_call_operand.vmem [shape: f32[2,8,32], index: 0, kind: input, shape index: {}]
  %s1 = inlined_call_operand.vmem [shape: f32[8,32], index: 1, kind: input, shape index: {}]
  %s2 = inlined_call_operand.vmem [shape: f32[32,96], index: 2, kind: input, shape index: {}]
  %s3 = inlined_call_operand.vmem [shape: f32[1,96], index: 3, kind: input, shape index: {}]
  %s4 = inlined_call_operand.vmem [shape: f32[32,32], index: 4, kind: input, shape index: {}]
  %s5 = inlined_call_operand.vmem [shape: f32[1,32], index: 5, kind: input, shape index: {}]
  %s6 = inlined_call_operand.vmem [shape: f32[1,32], index: 6, kind: input, shape index: {}]
  %s7 = inlined_call_operand.vmem [shape: f32[1,32], index: 7, kind: input, shape index: {}]
  %s8 = inlined_call_operand.vmem [shape: f32[32,64], index: 8, kind: input, shape index: {}]
  %s9 = inlined_call_operand.vmem [shape: f32[1,64], index: 9, kind: input, shape index: {}]
  %s10 = inlined_call_operand.vmem [shape: f32[64,32], index: 10, kind: input, shape index: {}]
  %s11 = inlined_call_operand.vmem [shape: f32[1,32], index: 11, kind: input, shape index: {}]
  %s12 = inlined_call_operand.vmem [shape: f32[1,32], index: 12, kind: input, shape index: {}]
  %s13 = inlined_call_operand.vmem [shape: f32[1,32], index: 13, kind: input, shape index: {}]
  %s14 = inlined_call_operand.vmem [shape: f32[2,8,32], index: 14, kind: output, shape index: {}]
  %s15 = sld [smem:[#allocation0]]
  $region89: #{_lambda_.11} parent=0
    _
  %s17 = ssub.s32 1, %s15
  %s18 = scalar_select 0, %s17, %s15
  loop: start=0, step=1, limit=4
  $region2: #{_lambda_.11} parent=0 // loop_pre_header
    _
  $region3: #{_lambda_.11} parent=0 // loop_header
    %s20 = sphi 0, %s24
    %p21 = scmp.ge.s32.totalorder %s20, 4
    %s30 = sphi 0, %s32
    %s33 = sphi 0, %s30
    %s34 = sphi 0, %s33
    %s50 = sphi 0, %s34
    %s54 = sphi 0, %s54
    %s56 = sphi 0, %s54
    %s57 = sphi 0, %s56
    %s71 = sphi 0, %s57
    %s75 = sphi 0, %s75
    %s77 = sphi 0, %s75
    %s78 = sphi 0, %s77
    %s92 = sphi 0, %s78
    %s96 = sphi 0, %s96
    %s98 = sphi 0, %s96
    %s99 = sphi 0, %s98
    %s113 = sphi 0, %s99
    %s117 = sphi 0, %s117
    %s119 = sphi 0, %s117
    %s120 = sphi 0, %s119
    %s134 = sphi 0, %s120
    %s138 = sphi 0, %s138
    %s140 = sphi 0, %s138
    %s141 = sphi 0, %s140
    %s155 = sphi 0, %s141
    %s159 = sphi 0, %s159
    %s161 = sphi 0, %s159
    %s162 = sphi 0, %s161
    %s176 = sphi 0, %s162
    %s180 = sphi 0, %s180
    %s182 = sphi 0, %s180
    %s183 = sphi 0, %s182
    %s197 = sphi 0, %s183
    %s201 = sphi 0, %s201
    %s203 = sphi 0, %s201
    %s204 = sphi 0, %s203
    %s218 = sphi 0, %s204
    %s222 = sphi 0, %s222
    %s224 = sphi 0, %s222
    %s225 = sphi 0, %s224
    %s239 = sphi 0, %s225
    %s243 = sphi 0, %s243
    %s245 = sphi 0, %s243
    %s246 = sphi 0, %s245
    %s260 = sphi 0, %s246
    %s264 = sphi 0, %s264
    %s266 = sphi 0, %s264
    %s267 = sphi 0, %s266
    %s281 = sphi 0, %s267
    %s285 = sphi 0, %s285
    %s287 = sphi 0, %s285
    %s288 = sphi 0, %s287
    %s302 = sphi 0, %s288
    %s306 = sphi 0, %s306
    %s308 = sphi 0, %s306
    %s309 = sphi 0, %s308
    %s323 = sphi 0, %s309
    %s329 = sphi 0, %s331
    %s332 = sphi 0, %s329
    %s333 = sphi 0, %s332
    %s349 = sphi 0, %s333
  $region4: #{_lambda_.11} parent=0 // loop_header_branch
    %23 = sbr.rel (%p21) target = $region8
  $region5: #{_lambda_.11} parent=0 // loop_body
    %s25 = ssub.s32 %s20, 1
    %s26 = ssub.s32 %s20, 2
    %s27 = sadd.s32 %s20, 1
    %s28 = ssub.s32 %s20, %s27
    %p29 = scmp.eq.s32.totalorder %s28, 0
    %s31 = sadd.s32 %s30, 1
    %s32 = scalar_select %p29, %s30, %s31
    %p35 = pneg %p29
    %p36 = scmp.eq.s32.totalorder %s20, 1
    %p37 = por %p35, %p36
    %p38 = scmp.ne.s32.totalorder %s30, %s33
    %p39 = scmp.eq.s32.totalorder %s20, 0
    %p40 = por %p38, %p39
    %p41 = scmp.ne.s32.totalorder %s30, %s33
    %p42 = scmp.eq.s32.totalorder %s25, 1
    %p43 = por %p41, %p42
    %p44 = scmp.ne.s32.totalorder %s33, %s34
    %p45 = scmp.eq.s32.totalorder %s25, 0
    %p46 = por %p44, %p45
    %p47 = scmp.ne.s32.totalorder %s33, %s34
    %p48 = scmp.eq.s32.totalorder %s26, 1
    %p49 = por %p47, %p48
    %p51 = scmp.ne.s32.totalorder %s34, %s50
    %p52 = scmp.eq.s32.totalorder %s26, 0
    %p53 = por %p51, %p52
    %s55 = sadd.s32 %s54, 1
    %p58 = scmp.eq.s32.totalorder %s20, 1
    %p59 = scmp.ne.s32.totalorder %s54, %s56
    %p60 = scmp.eq.s32.totalorder %s20, 0
    %p61 = por %p59, %p60
    %p62 = scmp.ne.s32.totalorder %s54, %s56
    %p63 = scmp.eq.s32.totalorder %s25, 1
    %p64 = por %p62, %p63
    %p65 = scmp.ne.s32.totalorder %s56, %s57
    %p66 = scmp.eq.s32.totalorder %s25, 0
    %p67 = por %p65, %p66
    %p68 = scmp.ne.s32.totalorder %s56, %s57
    %p69 = scmp.eq.s32.totalorder %s26, 1
    %p70 = por %p68, %p69
    %p72 = scmp.ne.s32.totalorder %s57, %s71
    %p73 = scmp.eq.s32.totalorder %s26, 0
    %p74 = por %p72, %p73
    %s76 = sadd.s32 %s75, 1
    %p79 = scmp.eq.s32.totalorder %s20, 1
    %p80 = scmp.ne.s32.totalorder %s75, %s77
    %p81 = scmp.eq.s32.totalorder %s20, 0
    %p82 = por %p80, %p81
    %p83 = scmp.ne.s32.totalorder %s75, %s77
    %p84 = scmp.eq.s32.totalorder %s25, 1
    %p85 = por %p83, %p84
    %p86 = scmp.ne.s32.totalorder %s77, %s78
    %p87 = scmp.eq.s32.totalorder %s25, 0
    %p88 = por %p86, %p87
    %p89 = scmp.ne.s32.totalorder %s77, %s78
    %p90 = scmp.eq.s32.totalorder %s26, 1
    %p91 = por %p89, %p90
    %p93 = scmp.ne.s32.totalorder %s78, %s92
    %p94 = scmp.eq.s32.totalorder %s26, 0
    %p95 = por %p93, %p94
    %s97 = sadd.s32 %s96, 1
    %p100 = scmp.eq.s32.totalorder %s20, 1
    %p101 = scmp.ne.s32.totalorder %s96, %s98
    %p102 = scmp.eq.s32.totalorder %s20, 0
    %p103 = por %p101, %p102
    %p104 = scmp.ne.s32.totalorder %s96, %s98
    %p105 = scmp.eq.s32.totalorder %s25, 1
    %p106 = por %p104, %p105
    %p107 = scmp.ne.s32.totalorder %s98, %s99
    %p108 = scmp.eq.s32.totalorder %s25, 0
    %p109 = por %p107, %p108
    %p110 = scmp.ne.s32.totalorder %s98, %s99
    %p111 = scmp.eq.s32.totalorder %s26, 1
    %p112 = por %p110, %p111
    %p114 = scmp.ne.s32.totalorder %s99, %s113
    %p115 = scmp.eq.s32.totalorder %s26, 0
    %p116 = por %p114, %p115
    %s118 = sadd.s32 %s117, 1
    %p121 = scmp.eq.s32.totalorder %s20, 1
    %p122 = scmp.ne.s32.totalorder %s117, %s119
    %p123 = scmp.eq.s32.totalorder %s20, 0
    %p124 = por %p122, %p123
    %p125 = scmp.ne.s32.totalorder %s117, %s119
    %p126 = scmp.eq.s32.totalorder %s25, 1
    %p127 = por %p125, %p126
    %p128 = scmp.ne.s32.totalorder %s119, %s120
    %p129 = scmp.eq.s32.totalorder %s25, 0
    %p130 = por %p128, %p129
    %p131 = scmp.ne.s32.totalorder %s119, %s120
    %p132 = scmp.eq.s32.totalorder %s26, 1
    %p133 = por %p131, %p132
    %p135 = scmp.ne.s32.totalorder %s120, %s134
    %p136 = scmp.eq.s32.totalorder %s26, 0
    %p137 = por %p135, %p136
    %s139 = sadd.s32 %s138, 1
    %p142 = scmp.eq.s32.totalorder %s20, 1
    %p143 = scmp.ne.s32.totalorder %s138, %s140
    %p144 = scmp.eq.s32.totalorder %s20, 0
    %p145 = por %p143, %p144
    %p146 = scmp.ne.s32.totalorder %s138, %s140
    %p147 = scmp.eq.s32.totalorder %s25, 1
    %p148 = por %p146, %p147
    %p149 = scmp.ne.s32.totalorder %s140, %s141
    %p150 = scmp.eq.s32.totalorder %s25, 0
    %p151 = por %p149, %p150
    %p152 = scmp.ne.s32.totalorder %s140, %s141
    %p153 = scmp.eq.s32.totalorder %s26, 1
    %p154 = por %p152, %p153
    %p156 = scmp.ne.s32.totalorder %s141, %s155
    %p157 = scmp.eq.s32.totalorder %s26, 0
    %p158 = por %p156, %p157
    %s160 = sadd.s32 %s159, 1
    %p163 = scmp.eq.s32.totalorder %s20, 1
    %p164 = scmp.ne.s32.totalorder %s159, %s161
    %p165 = scmp.eq.s32.totalorder %s20, 0
    %p166 = por %p164, %p165
    %p167 = scmp.ne.s32.totalorder %s159, %s161
    %p168 = scmp.eq.s32.totalorder %s25, 1
    %p169 = por %p167, %p168
    %p170 = scmp.ne.s32.totalorder %s161, %s162
    %p171 = scmp.eq.s32.totalorder %s25, 0
    %p172 = por %p170, %p171
    %p173 = scmp.ne.s32.totalorder %s161, %s162
    %p174 = scmp.eq.s32.totalorder %s26, 1
    %p175 = por %p173, %p174
    %p177 = scmp.ne.s32.totalorder %s162, %s176
    %p178 = scmp.eq.s32.totalorder %s26, 0
    %p179 = por %p177, %p178
    %s181 = sadd.s32 %s180, 1
    %p184 = scmp.eq.s32.totalorder %s20, 1
    %p185 = scmp.ne.s32.totalorder %s180, %s182
    %p186 = scmp.eq.s32.totalorder %s20, 0
    %p187 = por %p185, %p186
    %p188 = scmp.ne.s32.totalorder %s180, %s182
    %p189 = scmp.eq.s32.totalorder %s25, 1
    %p190 = por %p188, %p189
    %p191 = scmp.ne.s32.totalorder %s182, %s183
    %p192 = scmp.eq.s32.totalorder %s25, 0
    %p193 = por %p191, %p192
    %p194 = scmp.ne.s32.totalorder %s182, %s183
    %p195 = scmp.eq.s32.totalorder %s26, 1
    %p196 = por %p194, %p195
    %p198 = scmp.ne.s32.totalorder %s183, %s197
    %p199 = scmp.eq.s32.totalorder %s26, 0
    %p200 = por %p198, %p199
    %s202 = sadd.s32 %s201, 1
    %p205 = scmp.eq.s32.totalorder %s20, 1
    %p206 = scmp.ne.s32.totalorder %s201, %s203
    %p207 = scmp.eq.s32.totalorder %s20, 0
    %p208 = por %p206, %p207
    %p209 = scmp.ne.s32.totalorder %s201, %s203
    %p210 = scmp.eq.s32.totalorder %s25, 1
    %p211 = por %p209, %p210
    %p212 = scmp.ne.s32.totalorder %s203, %s204
    %p213 = scmp.eq.s32.totalorder %s25, 0
    %p214 = por %p212, %p213
    %p215 = scmp.ne.s32.totalorder %s203, %s204
    %p216 = scmp.eq.s32.totalorder %s26, 1
    %p217 = por %p215, %p216
    %p219 = scmp.ne.s32.totalorder %s204, %s218
    %p220 = scmp.eq.s32.totalorder %s26, 0
    %p221 = por %p219, %p220
    %s223 = sadd.s32 %s222, 1
    %p226 = scmp.eq.s32.totalorder %s20, 1
    %p227 = scmp.ne.s32.totalorder %s222, %s224
    %p228 = scmp.eq.s32.totalorder %s20, 0
    %p229 = por %p227, %p228
    %p230 = scmp.ne.s32.totalorder %s222, %s224
    %p231 = scmp.eq.s32.totalorder %s25, 1
    %p232 = por %p230, %p231
    %p233 = scmp.ne.s32.totalorder %s224, %s225
    %p234 = scmp.eq.s32.totalorder %s25, 0
    %p235 = por %p233, %p234
    %p236 = scmp.ne.s32.totalorder %s224, %s225
    %p237 = scmp.eq.s32.totalorder %s26, 1
    %p238 = por %p236, %p237
    %p240 = scmp.ne.s32.totalorder %s225, %s239
    %p241 = scmp.eq.s32.totalorder %s26, 0
    %p242 = por %p240, %p241
    %s244 = sadd.s32 %s243, 1
    %p247 = scmp.eq.s32.totalorder %s20, 1
    %p248 = scmp.ne.s32.totalorder %s243, %s245
    %p249 = scmp.eq.s32.totalorder %s20, 0
    %p250 = por %p248, %p249
    %p251 = scmp.ne.s32.totalorder %s243, %s245
    %p252 = scmp.eq.s32.totalorder %s25, 1
    %p253 = por %p251, %p252
    %p254 = scmp.ne.s32.totalorder %s245, %s246
    %p255 = scmp.eq.s32.totalorder %s25, 0
    %p256 = por %p254, %p255
    %p257 = scmp.ne.s32.totalorder %s245, %s246
    %p258 = scmp.eq.s32.totalorder %s26, 1
    %p259 = por %p257, %p258
    %p261 = scmp.ne.s32.totalorder %s246, %s260
    %p262 = scmp.eq.s32.totalorder %s26, 0
    %p263 = por %p261, %p262
    %s265 = sadd.s32 %s264, 1
    %p268 = scmp.eq.s32.totalorder %s20, 1
    %p269 = scmp.ne.s32.totalorder %s264, %s266
    %p270 = scmp.eq.s32.totalorder %s20, 0
    %p271 = por %p269, %p270
    %p272 = scmp.ne.s32.totalorder %s264, %s266
    %p273 = scmp.eq.s32.totalorder %s25, 1
    %p274 = por %p272, %p273
    %p275 = scmp.ne.s32.totalorder %s266, %s267
    %p276 = scmp.eq.s32.totalorder %s25, 0
    %p277 = por %p275, %p276
    %p278 = scmp.ne.s32.totalorder %s266, %s267
    %p279 = scmp.eq.s32.totalorder %s26, 1
    %p280 = por %p278, %p279
    %p282 = scmp.ne.s32.totalorder %s267, %s281
    %p283 = scmp.eq.s32.totalorder %s26, 0
    %p284 = por %p282, %p283
    %s286 = sadd.s32 %s285, 1
    %p289 = scmp.eq.s32.totalorder %s20, 1
    %p290 = scmp.ne.s32.totalorder %s285, %s287
    %p291 = scmp.eq.s32.totalorder %s20, 0
    %p292 = por %p290, %p291
    %p293 = scmp.ne.s32.totalorder %s285, %s287
    %p294 = scmp.eq.s32.totalorder %s25, 1
    %p295 = por %p293, %p294
    %p296 = scmp.ne.s32.totalorder %s287, %s288
    %p297 = scmp.eq.s32.totalorder %s25, 0
    %p298 = por %p296, %p297
    %p299 = scmp.ne.s32.totalorder %s287, %s288
    %p300 = scmp.eq.s32.totalorder %s26, 1
    %p301 = por %p299, %p300
    %p303 = scmp.ne.s32.totalorder %s288, %s302
    %p304 = scmp.eq.s32.totalorder %s26, 0
    %p305 = por %p303, %p304
    %s307 = sadd.s32 %s306, 1
    %p310 = scmp.eq.s32.totalorder %s20, 1
    %p311 = scmp.ne.s32.totalorder %s306, %s308
    %p312 = scmp.eq.s32.totalorder %s20, 0
    %p313 = por %p311, %p312
    %p314 = scmp.ne.s32.totalorder %s306, %s308
    %p315 = scmp.eq.s32.totalorder %s25, 1
    %p316 = por %p314, %p315
    %p317 = scmp.ne.s32.totalorder %s308, %s309
    %p318 = scmp.eq.s32.totalorder %s25, 0
    %p319 = por %p317, %p318
    %p320 = scmp.ne.s32.totalorder %s308, %s309
    %p321 = scmp.eq.s32.totalorder %s26, 1
    %p322 = por %p320, %p321
    %p324 = scmp.ne.s32.totalorder %s309, %s323
    %p325 = scmp.eq.s32.totalorder %s26, 0
    %p326 = por %p324, %p325
    %s327 = ssub.s32 %s20, %s27
    %p328 = scmp.eq.s32.totalorder %s327, 0
    %s330 = sadd.s32 %s329, 1
    %s331 = scalar_select %p328, %s329, %s330
    %p334 = pneg %p328
    %p335 = scmp.eq.s32.totalorder %s20, 1
    %p336 = por %p334, %p335
    %p337 = scmp.ne.s32.totalorder %s329, %s332
    %p338 = scmp.eq.s32.totalorder %s20, 0
    %p339 = por %p337, %p338
    %p340 = scmp.ne.s32.totalorder %s329, %s332
    %p341 = scmp.eq.s32.totalorder %s25, 1
    %p342 = por %p340, %p341
    %p343 = scmp.ne.s32.totalorder %s332, %s333
    %p344 = scmp.eq.s32.totalorder %s25, 0
    %p345 = por %p343, %p344
    %p346 = scmp.ne.s32.totalorder %s332, %s333
    %p347 = scmp.eq.s32.totalorder %s26, 1
    %p348 = por %p346, %p347
    %p350 = scmp.ne.s32.totalorder %s333, %s349
    %p351 = scmp.eq.s32.totalorder %s26, 0
    %p352 = por %p350, %p351
    %p353 = scmp.le.s32.totalorder 1, %s20
    %p354 = scmp.lt.s32.totalorder %s20, 3
    %p355 = pnand %p353, %p354
    %p356 = pneg %p355
    // Predicated region
    $region9: #{_lambda_.11} parent=5 // pred_check
      _
    $region10: #{_lambda_.11} parent=5 // pred_check_branch
      %358 = sbr.rel (%p355) target = $region12
    $region11: #{_lambda_.11} parent=5 // pred_region
      %s359 = ssub.s32 %s20, 1
      // Predicated region
      $region13: #{_lambda_.11} parent=11 // pred_check
        %p360 = pneg %p67
      $region14: #{_lambda_.11} parent=11 // pred_check_branch
        %362 = sbr.rel (%p360) target = $region16
      $region15: #{_lambda_.11} parent=11 // pred_region
        _
      $region16: #{_lambda_.11} parent=11 // pred_fallthru
        _
      // Predicated region
      $region17: #{_lambda_.11} parent=11 // pred_check
        %p363 = pneg %p88
      $region18: #{_lambda_.11} parent=11 // pred_check_branch
        %365 = sbr.rel (%p363) target = $region20
      $region19: #{_lambda_.11} parent=11 // pred_region
        _
      $region20: #{_lambda_.11} parent=11 // pred_fallthru
        _
      // Predicated region
      $region21: #{_lambda_.11} parent=11 // pred_check
        %p366 = pneg %p109
      $region22: #{_lambda_.11} parent=11 // pred_check_branch
        %368 = sbr.rel (%p366) target = $region24
      $region23: #{_lambda_.11} parent=11 // pred_region
        _
      $region24: #{_lambda_.11} parent=11 // pred_fallthru
        _
      // Predicated region
      $region25: #{_lambda_.11} parent=11 // pred_check
        %p369 = pneg %p130
      $region26: #{_lambda_.11} parent=11 // pred_check_branch
        %371 = sbr.rel (%p369) target = $region28
      $region27: #{_lambda_.11} parent=11 // pred_region
        _
      $region28: #{_lambda_.11} parent=11 // pred_fallthru
        _
      // Predicated region
      $region29: #{_lambda_.11} parent=11 // pred_check
        %p372 = pneg %p151
      $region30: #{_lambda_.11} parent=11 // pred_check_branch
        %374 = sbr.rel (%p372) target = $region32
      $region31: #{_lambda_.11} parent=11 // pred_region
        _
      $region32: #{_lambda_.11} parent=11 // pred_fallthru
        _
      // Predicated region
      $region33: #{_lambda_.11} parent=11 // pred_check
        %p375 = pneg %p172
      $region34: #{_lambda_.11} parent=11 // pred_check_branch
        %377 = sbr.rel (%p375) target = $region36
      $region35: #{_lambda_.11} parent=11 // pred_region
        _
      $region36: #{_lambda_.11} parent=11 // pred_fallthru
        _
      // Predicated region
      $region37: #{_lambda_.11} parent=11 // pred_check
        %p378 = pneg %p193
      $region38: #{_lambda_.11} parent=11 // pred_check_branch
        %380 = sbr.rel (%p378) target = $region40
      $region39: #{_lambda_.11} parent=11 // pred_region
        _
      $region40: #{_lambda_.11} parent=11 // pred_fallthru
        _
      // Predicated region
      $region41: #{_lambda_.11} parent=11 // pred_check
        %p381 = pneg %p214
      $region42: #{_lambda_.11} parent=11 // pred_check_branch
        %383 = sbr.rel (%p381) target = $region44
      $region43: #{_lambda_.11} parent=11 // pred_region
        _
      $region44: #{_lambda_.11} parent=11 // pred_fallthru
        _
      // Predicated region
      $region45: #{_lambda_.11} parent=11 // pred_check
        %p384 = pneg %p235
      $region46: #{_lambda_.11} parent=11 // pred_check_branch
        %386 = sbr.rel (%p384) target = $region48
      $region47: #{_lambda_.11} parent=11 // pred_region
        _
      $region48: #{_lambda_.11} parent=11 // pred_fallthru
        _
      // Predicated region
      $region49: #{_lambda_.11} parent=11 // pred_check
        %p387 = pneg %p256
      $region50: #{_lambda_.11} parent=11 // pred_check_branch
        %389 = sbr.rel (%p387) target = $region52
      $region51: #{_lambda_.11} parent=11 // pred_region
        _
      $region52: #{_lambda_.11} parent=11 // pred_fallthru
        _
      // Predicated region
      $region53: #{_lambda_.11} parent=11 // pred_check
        %p390 = pneg %p277
      $region54: #{_lambda_.11} parent=11 // pred_check_branch
        %392 = sbr.rel (%p390) target = $region56
      $region55: #{_lambda_.11} parent=11 // pred_region
        _
      $region56: #{_lambda_.11} parent=11 // pred_fallthru
        _
      // Predicated region
      $region57: #{_lambda_.11} parent=11 // pred_check
        %p393 = pneg %p298
      $region58: #{_lambda_.11} parent=11 // pred_check_branch
        %395 = sbr.rel (%p393) target = $region60
      $region59: #{_lambda_.11} parent=11 // pred_region
        _
      $region60: #{_lambda_.11} parent=11 // pred_fallthru
        _
      // Predicated region
      $region61: #{_lambda_.11} parent=11 // pred_check
        %p396 = pneg %p319
      $region62: #{_lambda_.11} parent=11 // pred_check_branch
        %398 = sbr.rel (%p396) target = $region64
      $region63: #{_lambda_.11} parent=11 // pred_region
        _
      $region64: #{_lambda_.11} parent=11 // pred_fallthru
        _
    $region12: #{_lambda_.11} parent=5 // pred_fallthru
      _
    %p399 = scmp.lt.s32.totalorder %s20, 2
    // Predicated region
    $region65: #{_lambda_.11} parent=5 // pred_check
      %p400 = pneg %p399
    $region66: #{_lambda_.11} parent=5 // pred_check_branch
      %402 = sbr.rel (%p400) target = $region68
    $region67: #{_lambda_.11} parent=5 // pred_region
      // Predicated region
      $region69: #{_lambda_.11} parent=67 // pred_check
        %p403 = pneg %p40
      $region70: #{_lambda_.11} parent=67 // pred_check_branch
        %405 = sbr.rel (%p403) target = $region72
      $region71: #{_lambda_.11} parent=67 // pred_region
        %p406 = scmp.lt.s32.totalorder %s20, 1
        %s407 = scalar_select %p406, %s20, 1
        %s408 = smul.addr %s407, 8
        %s409 = scalar_lea.vmem %s0, %s408
      $region72: #{_lambda_.11} parent=67 // pred_fallthru
        _
    $region68: #{_lambda_.11} parent=5 // pred_fallthru
      _
    %p410 = scmp.le.s32.totalorder 1, %s20
    %p411 = scmp.lt.s32.totalorder %s20, 3
    %p412 = pnand %p410, %p411
    %p413 = pneg %p412
    // Predicated region
    $region73: #{_lambda_.11} parent=5 // pred_check
      _
    $region74: #{_lambda_.11} parent=5 // pred_check_branch
      %415 = sbr.rel (%p412) target = $region76
    $region75: #{_lambda_.11} parent=5 // pred_region
      %s416 = ssub.s32 %s20, 1
      %p417 = scmp.lt.s32.totalorder %s25, 1
      %s418 = scalar_select %p417, %s25, 1
      %s419 = smul.addr %s418, 8
      %s420 = scalar_lea.vmem %s0, %s419
      %p421 = pneg %p46
      %p422 = pneg %p43
      %p423 = pneg %p67
      %p424 = pneg %p64
      %p425 = pneg %p88
      %p426 = pneg %p85
      %p427 = pneg %p109
      %p428 = pneg %p106
      %p429 = pneg %p130
      %p430 = pneg %p127
      %p431 = pneg %p151
      %p432 = pneg %p148
      %p433 = pneg %p172
      %p434 = pneg %p169
      %p435 = pneg %p193
      %p436 = pneg %p190
      %p437 = pneg %p214
      %p438 = pneg %p211
      %p439 = pneg %p235
      %p440 = pneg %p232
      %p441 = pneg %p256
      %p442 = pneg %p253
      %p443 = pneg %p277
      %p444 = pneg %p274
      %p445 = pneg %p298
      %p446 = pneg %p295
      %p447 = pneg %p319
      %p448 = pneg %p316
      %p449 = pneg %p345
      %p450 = pneg %p342
      %p451 = scmp.lt.s32.totalorder %s25, 1
      %s452 = scalar_select %p451, %s25, 1
      %s453 = smul.addr %s452, 8
      %s454 = scalar_lea.vmem %s14, %s453
      %p455 = scmp.lt.s32.totalorder %s25, 1
      %s456 = scalar_select %p455, %s25, 1
      %s457 = smul.addr %s456, 8
      %s458 = scalar_lea.vmem %s0, %s457
      %p459 = scmp.lt.s32.totalorder %s25, 1
      %s460 = scalar_select %p459, %s25, 1
      %s461 = smul.addr %s460, 8
      %s462 = scalar_lea.vmem %s14, %s461
      %v464 = vld [vmem:[%s458] sm:$0xff]
      %v465 = vld [vmem:[%s1] sm:$0xff]
      %v466 = vadd.f32 %v464, %v465
      %v467 = vld [vmem:[%s2] sm:$0xff]
      %v468 = vld [vmem:[%s2 + $0x8] sm:$0xff]
      %v469 = vld [vmem:[%s2 + $0x10] sm:$0xff]
      %v470 = vld [vmem:[%s2 + $0x18] sm:$0xff]
      %v471 = vpack.c.bf16 %v466, %v466
      %v472 = vpack.c.bf16 %v468, %v467
      %v473 = vpack.c.bf16 %v470, %v469
      %v474 = vld [vmem:[%s3] sm:$0x1]
      %v476 = vlaneseq
      %v477 = vshrl.u32 %v476, 7
      %v478 = vsub.s32 0, %v477
      %v479 = vrot.slane %v474, %v478
      %vm481 = vcmask 261120
      %v483 = vsel %vm481, %v471, 0
      %485 = vmatprep.subr.bf16.mxu0 0
      %486 = vmatpush1.bf16.msra.mxu0 %v472
      %487 = vmatprep.subr.bf16.mxu0 0
      %488 = vmatpush1.bf16.msra.mxu0 %v473
      %489 = vmatprep.subr.bf16.mxu0 0
      %490 = vmatpush1.bf16.msra.mxu0 0
      %491 = vmatprep.subr.bf16.mxu0 0
      %492 = vmatpush1.bf16.msra.mxu0 0
      %493 = vmatprep.subr.bf16.mxu0 0
      %494 = vmatpush1.bf16.msra.mxu0 0
      %495 = vmatprep.subr.bf16.mxu0 0
      %496 = vmatpush1.bf16.msra.mxu0 0
      %497 = vmatprep.subr.bf16.mxu0 0
      %498 = vmatpush1.bf16.msra.mxu0 0
      %499 = vmatprep.subr.bf16.mxu0 0
      %500 = vmatpush1.bf16.msra.mxu0 0
      %501 = vmatprep.subr.bf16.mxu0 0
      %502 = vmatpush1.bf16.msra.mxu0 0
      %503 = vmatprep.subr.bf16.mxu0 0
      %504 = vmatpush1.bf16.msra.mxu0 0
      %505 = vmatprep.subr.bf16.mxu0 0
      %506 = vmatpush1.bf16.msra.mxu0 0
      %507 = vmatprep.subr.bf16.mxu0 0
      %508 = vmatpush1.bf16.msra.mxu0 0
      %509 = vmatprep.subr.bf16.mxu0 0
      %510 = vmatpush1.bf16.msra.mxu0 0
      %511 = vmatprep.subr.bf16.mxu0 0
      %512 = vmatpush1.bf16.msra.mxu0 0
      %513 = vmatprep.subr.bf16.mxu0 0
      %514 = vmatpush1.bf16.msra.mxu0 0
      %515 = vmatprep.subr.bf16.mxu0 0
      %516 = vmatpush1.bf16.msra.mxu0 0
      %517 = vmatprep.mubr.bf16.mxu0 0
      %518 = vmatmul.mubr.bf16.gmra.mrb[0].mxu0 %v483
      %v519 = vpop.f32.mrb[0].mxu0
      %v520 = vadd.f32 %v479, %v519
      %v521 = vpop.f32.mrb[0].mxu0
      %v522 = vpop.f32.mrb[0].mxu0
      %v523 = vpop.f32.mrb[0].mxu0
      %524 = vdwg.mxu0
      %v525 = vld [vmem:[%s4] sm:$0xff]
      %v526 = vld [vmem:[%s4 + $0x8] sm:$0xff]
      %v527 = vld [vmem:[%s4 + $0x10] sm:$0xff]
      %v528 = vld [vmem:[%s4 + $0x18] sm:$0xff]
      %v529 = vpack.c.bf16 %v520, %v520
      %531 = vrot.lane.b32.xlu0 %v529, 96
      %v532 = vpop.permute.xlu0 %531
      %vm533 = vcmask 64512
      %v535 = vsel %vm533, %v529, 0
      %v538 = vsel %vm533, %v532, 0
      %540 = vmatprep.subr.bf16.mxu0 0
      %541 = vmatpush1.bf16.xpose.msra.mxu0 %v538
      %542 = vmatprep.subr.bf16.mxu0 0
      %543 = vmatpush1.bf16.xpose.msra.mxu0 0
      %544 = vmatprep.subr.bf16.mxu0 0
      %545 = vmatpush1.bf16.xpose.msra.mxu0 0
      %546 = vmatprep.subr.bf16.mxu0 0
      %547 = vmatpush1.bf16.xpose.msra.mxu0 0
      %548 = vmatprep.subr.bf16.mxu0 0
      %549 = vmatpush1.bf16.xpose.msra.mxu0 0
      %550 = vmatprep.subr.bf16.mxu0 0
      %551 = vmatpush1.bf16.xpose.msra.mxu0 0
      %552 = vmatprep.subr.bf16.mxu0 0
      %553 = vmatpush1.bf16.xpose.msra.mxu0 0
      %554 = vmatprep.subr.bf16.mxu0 0
      %555 = vmatpush1.bf16.xpose.msra.mxu0 0
      %556 = vmatprep.subr.bf16.mxu0 0
      %557 = vmatpush1.bf16.xpose.msra.mxu0 0
      %558 = vmatprep.subr.bf16.mxu0 0
      %559 = vmatpush1.bf16.xpose.msra.mxu0 0
      %560 = vmatprep.subr.bf16.mxu0 0
      %561 = vmatpush1.bf16.xpose.msra.mxu0 0
      %562 = vmatprep.subr.bf16.mxu0 0
      %563 = vmatpush1.bf16.xpose.msra.mxu0 0
      %564 = vmatprep.subr.bf16.mxu0 0
      %565 = vmatpush1.bf16.xpose.msra.mxu0 0
      %566 = vmatprep.subr.bf16.mxu0 0
      %567 = vmatpush1.bf16.xpose.msra.mxu0 0
      %568 = vmatprep.subr.bf16.mxu0 0
      %569 = vmatpush1.bf16.xpose.msra.mxu0 0
      %570 = vmatprep.subr.bf16.mxu0 0
      %571 = vmatpush1.bf16.xpose.msra.mxu0 0
      %572 = vmatprep.mubr.bf16.mxu0 0
      %573 = vmatmul.mubr.bf16.gmra.mrb[0].mxu0 %v535
      %v574 = vpop.f32.mrb[0].mxu0
      %v575 = vadd.f32 0.0, %v574
      %v576 = vpop.f32.mrb[0].mxu0
      %v577 = vpop.f32.mrb[0].mxu0
      %v578 = vpop.f32.mrb[0].mxu0
      %579 = vdwg.mxu0
      %v580 = vmul.f32 %v575, 0.35355338
      %v581 = vsel %vm533, %v580, -inf
      %582 = vmax.xlane.f32.xlu0 %v581
      %v583 = vpop.xlane.xlu0 %582
      %v584 = vsub.f32 %v580, %v583
      %v585 = vmul.f32 %v584, 1.442695
      %v586 = vpow.pop %v585
      %v587 = vsel %vm533, %v586, 0.0
      %588 = vadd.xlane.f32.xlu0 %v587
      %v589 = vpop.xlane.xlu0 %588
      %v590 = vrcp.pop %v589
      %v591 = vmul.f32 %v586, %v590
      %v592 = vpack.c.bf16 %v591, %v591
      %593 = vrot.lane.b32.xlu0 %v529, 64
      %v594 = vpop.permute.xlu0 %593
      %v596 = vsel %vm533, %v592, 0
      %vm598 = vcmask 1043456
      %v600 = vsel %vm598, %v594, 0
      %602 = vmatprep.subr.bf16.mxu0 0
      %603 = vmatpush1.bf16.msra.mxu0 %v600
      %604 = vmatprep.subr.bf16.mxu0 0
      %605 = vmatpush1.bf16.msra.mxu0 0
      %606 = vmatprep.subr.bf16.mxu0 0
      %607 = vmatpush1.bf16.msra.mxu0 0
      %608 = vmatprep.subr.bf16.mxu0 0
      %609 = vmatpush1.bf16.msra.mxu0 0
      %610 = vmatprep.subr.bf16.mxu0 0
      %611 = vmatpush1.bf16.msra.mxu0 0
      %612 = vmatprep.subr.bf16.mxu0 0
      %613 = vmatpush1.bf16.msra.mxu0 0
      %614 = vmatprep.subr.bf16.mxu0 0
      %615 = vmatpush1.bf16.msra.mxu0 0
      %616 = vmatprep.subr.bf16.mxu0 0
      %617 = vmatpush1.bf16.msra.mxu0 0
      %618 = vmatprep.subr.bf16.mxu0 0
      %619 = vmatpush1.bf16.msra.mxu0 0
      %620 = vmatprep.subr.bf16.mxu0 0
      %621 = vmatpush1.bf16.msra.mxu0 0
      %622 = vmatprep.subr.bf16.mxu0 0
      %623 = vmatpush1.bf16.msra.mxu0 0
      %624 = vmatprep.subr.bf16.mxu0 0
      %625 = vmatpush1.bf16.msra.mxu0 0
      %626 = vmatprep.subr.bf16.mxu0 0
      %627 = vmatpush1.bf16.msra.mxu0 0
      %628 = vmatprep.subr.bf16.mxu0 0
      %629 = vmatpush1.bf16.msra.mxu0 0
      %630 = vmatprep.subr.bf16.mxu0 0
      %631 = vmatpush1.bf16.msra.mxu0 0
      %632 = vmatprep.subr.bf16.mxu0 0
      %633 = vmatpush1.bf16.msra.mxu0 0
      %634 = vmatprep.mubr.bf16.mxu0 0
      %635 = vmatmul.mubr.bf16.gmra.mrb[0].mxu0 %v596
      %v636 = vpop.f32.mrb[0].mxu0
      %v637 = vadd.f32 0.0, %v636
      %v638 = vpop.f32.mrb[0].mxu0
      %v639 = vpop.f32.mrb[0].mxu0
      %v640 = vpop.f32.mrb[0].mxu0
      %641 = vdwg.mxu0
      %v642 = vpack.c.bf16 %v637, %v637
      %v643 = vpack.c.bf16 %v525, %v525
      %644 = vrot.lane.b32.xlu0 %v529, 120
      %v645 = vpop.permute.xlu0 %644
      %646 = vrot.lane.b32.xlu0 %v529, 88
      %v647 = vpop.permute.xlu0 %646
      %v649 = vsel %vm533, %v645, 0
      %v652 = vsel %vm533, %v647, 0
      %654 = vmatprep.subr.bf16.mxu0 0
      %655 = vmatpush1.bf16.xpose.msra.mxu0 %v652
      %656 = vmatprep.subr.bf16.mxu0 0
      %657 = vmatpush1.bf16.xpose.msra.mxu0 0
      %658 = vmatprep.subr.bf16.mxu0 0
      %659 = vmatpush1.bf16.xpose.msra.mxu0 0
      %660 = vmatprep.subr.bf16.mxu0 0
      %661 = vmatpush1.bf16.xpose.msra.mxu0 0
      %662 = vmatprep.subr.bf16.mxu0 0
      %663 = vmatpush1.bf16.xpose.msra.mxu0 0
      %664 = vmatprep.subr.bf16.mxu0 0
      %665 = vmatpush1.bf16.xpose.msra.mxu0 0
      %666 = vmatprep.subr.bf16.mxu0 0
      %667 = vmatpush1.bf16.xpose.msra.mxu0 0
      %668 = vmatprep.subr.bf16.mxu0 0
      %669 = vmatpush1.bf16.xpose.msra.mxu0 0
      %670 = vmatprep.subr.bf16.mxu0 0
      %671 = vmatpush1.bf16.xpose.msra.mxu0 0
      %672 = vmatprep.subr.bf16.mxu0 0
      %673 = vmatpush1.bf16.xpose.msra.mxu0 0
      %674 = vmatprep.subr.bf16.mxu0 0
      %675 = vmatpush1.bf16.xpose.msra.mxu0 0
      %676 = vmatprep.subr.bf16.mxu0 0
      %677 = vmatpush1.bf16.xpose.msra.mxu0 0
      %678 = vmatprep.subr.bf16.mxu0 0
      %679 = vmatpush1.bf16.xpose.msra.mxu0 0
      %680 = vmatprep.subr.bf16.mxu0 0
      %681 = vmatpush1.bf16.xpose.msra.mxu0 0
      %682 = vmatprep.subr.bf16.mxu0 0
      %683 = vmatpush1.bf16.xpose.msra.mxu0 0
      %684 = vmatprep.subr.bf16.mxu0 0
      %685 = vmatpush1.bf16.xpose.msra.mxu0 0
      %686 = vmatprep.mubr.bf16.mxu0 0
      %687 = vmatmul.mubr.bf16.gmra.mrb[0].mxu0 %v649
      %v688 = vpop.f32.mrb[0].mxu0
      %v689 = vadd.f32 0.0, %v688
      %v690 = vpop.f32.mrb[0].mxu0
      %v691 = vpop.f32.mrb[0].mxu0
      %v692 = vpop.f32.mrb[0].mxu0
      %693 = vdwg.mxu0
      %v694 = vmul.f32 %v689, 0.35355338
      %v695 = vsel %vm533, %v694, -inf
      %696 = vmax.xlane.f32.xlu0 %v695
      %v697 = vpop.xlane.xlu0 %696
      %v698 = vsub.f32 %v694, %v697
      %v699 = vmul.f32 %v698, 1.442695
      %v700 = vpow.pop %v699
      %v701 = vsel %vm533, %v700, 0.0
      %702 = vadd.xlane.f32.xlu0 %v701
      %v703 = vpop.xlane.xlu0 %702
      %v704 = vrcp.pop %v703
      %v705 = vmul.f32 %v700, %v704
      %v706 = vpack.c.bf16 %v705, %v705
      %707 = vrot.lane.b32.xlu0 %v529, 56
      %v708 = vpop.permute.xlu0 %707
      %v710 = vsel %vm533, %v706, 0
      %v713 = vsel %vm598, %v708, 0
      %715 = vmatprep.subr.bf16.mxu0 0
      %716 = vmatpush1.bf16.msra.mxu0 %v713
      %717 = vmatprep.subr.bf16.mxu0 0
      %718 = vmatpush1.bf16.msra.mxu0 0
      %719 = vmatprep.subr.bf16.mxu0 0
      %720 = vmatpush1.bf16.msra.mxu0 0
      %721 = vmatprep.subr.bf16.mxu0 0
      %722 = vmatpush1.bf16.msra.mxu0 0
      %723 = vmatprep.subr.bf16.mxu0 0
      %724 = vmatpush1.bf16.msra.mxu0 0
      %725 = vmatprep.subr.bf16.mxu0 0
      %726 = vmatpush1.bf16.msra.mxu0 0
      %727 = vmatprep.subr.bf16.mxu0 0
      %728 = vmatpush1.bf16.msra.mxu0 0
      %729 = vmatprep.subr.bf16.mxu0 0
      %730 = vmatpush1.bf16.msra.mxu0 0
      %731 = vmatprep.subr.bf16.mxu0 0
      %732 = vmatpush1.bf16.msra.mxu0 0
      %733 = vmatprep.subr.bf16.mxu0 0
      %734 = vmatpush1.bf16.msra.mxu0 0
      %735 = vmatprep.subr.bf16.mxu0 0
      %736 = vmatpush1.bf16.msra.mxu0 0
      %737 = vmatprep.subr.bf16.mxu0 0
      %738 = vmatpush1.bf16.msra.mxu0 0
      %739 = vmatprep.subr.bf16.mxu0 0
      %740 = vmatpush1.bf16.msra.mxu0 0
      %741 = vmatprep.subr.bf16.mxu0 0
      %742 = vmatpush1.bf16.msra.mxu0 0
      %743 = vmatprep.subr.bf16.mxu0 0
      %744 = vmatpush1.bf16.msra.mxu0 0
      %745 = vmatprep.subr.bf16.mxu0 0
      %746 = vmatpush1.bf16.msra.mxu0 0
      %747 = vmatprep.mubr.bf16.mxu0 0
      %748 = vmatmul.mubr.bf16.gmra.mrb[0].mxu0 %v710
      %v749 = vpop.f32.mrb[0].mxu0
      %v750 = vadd.f32 0.0, %v749
      %v751 = vpop.f32.mrb[0].mxu0
      %v752 = vpop.f32.mrb[0].mxu0
      %v753 = vpop.f32.mrb[0].mxu0
      %754 = vdwg.mxu0
      %v755 = vpack.c.bf16 %v750, %v750
      %v756 = vpack.c.bf16 %v526, %v526
      %v758 = vsel %vm533, %v755, 0
      %v761 = vsel %vm598, %v756, 0
      %763 = vmatprep.subr.bf16.mxu0 0
      %764 = vmatpush1.bf16.msra.mxu0 %v761
      %765 = vmatprep.subr.bf16.mxu0 0
      %766 = vmatpush1.bf16.msra.mxu0 0
      %767 = vmatprep.subr.bf16.mxu0 0
      %768 = vmatpush1.bf16.msra.mxu0 0
      %769 = vmatprep.subr.bf16.mxu0 0
      %770 = vmatpush1.bf16.msra.mxu0 0
      %771 = vmatprep.subr.bf16.mxu0 0
      %772 = vmatpush1.bf16.msra.mxu0 0
      %773 = vmatprep.subr.bf16.mxu0 0
      %774 = vmatpush1.bf16.msra.mxu0 0
      %775 = vmatprep.subr.bf16.mxu0 0
      %776 = vmatpush1.bf16.msra.mxu0 0
      %777 = vmatprep.subr.bf16.mxu0 0
      %778 = vmatpush1.bf16.msra.mxu0 0
      %779 = vmatprep.subr.bf16.mxu0 0
      %780 = vmatpush1.bf16.msra.mxu0 0
      %781 = vmatprep.subr.bf16.mxu0 0
      %782 = vmatpush1.bf16.msra.mxu0 0
      %783 = vmatprep.subr.bf16.mxu0 0
      %784 = vmatpush1.bf16.msra.mxu0 0
      %785 = vmatprep.subr.bf16.mxu0 0
      %786 = vmatpush1.bf16.msra.mxu0 0
      %787 = vmatprep.subr.bf16.mxu0 0
      %788 = vmatpush1.bf16.msra.mxu0 0
      %789 = vmatprep.subr.bf16.mxu0 0
      %790 = vmatpush1.bf16.msra.mxu0 0
      %791 = vmatprep.subr.bf16.mxu0 0
      %792 = vmatpush1.bf16.msra.mxu0 0
      %793 = vmatprep.subr.bf16.mxu0 0
      %794 = vmatpush1.bf16.msra.mxu0 0
      %795 = vmatprep.mubr.bf16.mxu0 0
      %796 = vmatmul.mubr.bf16.gmra.mrb[0].mxu0 %v758
      %v797 = vpop.f32.mrb[0].mxu0
      %v798 = vadd.f32 0.0, %v797
      %v799 = vpop.f32.mrb[0].mxu0
      %v800 = vpop.f32.mrb[0].mxu0
      %v801 = vpop.f32.mrb[0].mxu0
      %802 = vdwg.mxu0
      %v804 = vsel %vm533, %v642, 0
      %v807 = vsel %vm598, %v643, 0
      %809 = vmatprep.subr.bf16.mxu0 0
      %810 = vmatpush1.bf16.msra.mxu0 %v807
      %811 = vmatprep.subr.bf16.mxu0 0
      %812 = vmatpush1.bf16.msra.mxu0 0
      %813 = vmatprep.subr.bf16.mxu0 0
      %814 = vmatpush1.bf16.msra.mxu0 0
      %815 = vmatprep.subr.bf16.mxu0 0
      %816 = vmatpush1.bf16.msra.mxu0 0
      %817 = vmatprep.subr.bf16.mxu0 0
      %818 = vmatpush1.bf16.msra.mxu0 0
      %819 = vmatprep.subr.bf16.mxu0 0
      %820 = vmatpush1.bf16.msra.mxu0 0
      %821 = vmatprep.subr.bf16.mxu0 0
      %822 = vmatpush1.bf16.msra.mxu0 0
      %823 = vmatprep.subr.bf16.mxu0 0
      %824 = vmatpush1.bf16.msra.mxu0 0
      %825 = vmatprep.subr.bf16.mxu0 0
      %826 = vmatpush1.bf16.msra.mxu0 0
      %827 = vmatprep.subr.bf16.mxu0 0
      %828 = vmatpush1.bf16.msra.mxu0 0
      %829 = vmatprep.subr.bf16.mxu0 0
      %830 = vmatpush1.bf16.msra.mxu0 0
      %831 = vmatprep.subr.bf16.mxu0 0
      %832 = vmatpush1.bf16.msra.mxu0 0
      %833 = vmatprep.subr.bf16.mxu0 0
      %834 = vmatpush1.bf16.msra.mxu0 0
      %835 = vmatprep.subr.bf16.mxu0 0
      %836 = vmatpush1.bf16.msra.mxu0 0
      %837 = vmatprep.subr.bf16.mxu0 0
      %838 = vmatpush1.bf16.msra.mxu0 0
      %839 = vmatprep.subr.bf16.mxu0 0
      %840 = vmatpush1.bf16.msra.mxu0 0
      %841 = vmatprep.mubr.bf16.mxu0 0
      %842 = vmatmul.mubr.bf16.gmra.mrb[0].mxu0 %v804
      %v843 = vpop.f32.mrb[0].mxu0
      %v844 = vadd.f32 %v798, %v843
      %v845 = vpop.f32.mrb[0].mxu0
      %v846 = vpop.f32.mrb[0].mxu0
      %v847 = vpop.f32.mrb[0].mxu0
      %848 = vdwg.mxu0
      %849 = vrot.lane.b32.xlu0 %v529, 112
      %v850 = vpop.permute.xlu0 %849
      %851 = vrot.lane.b32.xlu0 %v529, 80
      %v852 = vpop.permute.xlu0 %851
      %v854 = vsel %vm533, %v850, 0
      %v857 = vsel %vm533, %v852, 0
      %859 = vmatprep.subr.bf16.mxu0 0
      %860 = vmatpush1.bf16.xpose.msra.mxu0 %v857
      %861 = vmatprep.subr.bf16.mxu0 0
      %862 = vmatpush1.bf16.xpose.msra.mxu0 0
      %863 = vmatprep.subr.bf16.mxu0 0
      %864 = vmatpush1.bf16.xpose.msra.mxu0 0
      %865 = vmatprep.subr.bf16.mxu0 0
      %866 = vmatpush1.bf16.xpose.msra.mxu0 0
      %867 = vmatprep.subr.bf16.mxu0 0
      %868 = vmatpush1.bf16.xpose.msra.mxu0 0
      %869 = vmatprep.subr.bf16.mxu0 0
      %870 = vmatpush1.bf16.xpose.msra.mxu0 0
      %871 = vmatprep.subr.bf16.mxu0 0
      %872 = vmatpush1.bf16.xpose.msra.mxu0 0
      %873 = vmatprep.subr.bf16.mxu0 0
      %874 = vmatpush1.bf16.xpose.msra.mxu0 0
      %875 = vmatprep.subr.bf16.mxu0 0
      %876 = vmatpush1.bf16.xpose.msra.mxu0 0
      %877 = vmatprep.subr.bf16.mxu0 0
      %878 = vmatpush1.bf16.xpose.msra.mxu0 0
      %879 = vmatprep.subr.bf16.mxu0 0
      %880 = vmatpush1.bf16.xpose.msra.mxu0 0
      %881 = vmatprep.subr.bf16.mxu0 0
      %882 = vmatpush1.bf16.xpose.msra.mxu0 0
      %883 = vmatprep.subr.bf16.mxu0 0
      %884 = vmatpush1.bf16.xpose.msra.mxu0 0
      %885 = vmatprep.subr.bf16.mxu0 0
      %886 = vmatpush1.bf16.xpose.msra.mxu0 0
      %887 = vmatprep.subr.bf16.mxu0 0
      %888 = vmatpush1.bf16.xpose.msra.mxu0 0
      %889 = vmatprep.subr.bf16.mxu0 0
      %890 = vmatpush1.bf16.xpose.msra.mxu0 0
      %891 = vmatprep.mubr.bf16.mxu0 0
      %892 = vmatmul.mubr.bf16.gmra.mrb[0].mxu0 %v854
      %v893 = vpop.f32.mrb[0].mxu0
      %v894 = vadd.f32 0.0, %v893
      %v895 = vpop.f32.mrb[0].mxu0
      %v896 = vpop.f32.mrb[0].mxu0
      %v897 = vpop.f32.mrb[0].mxu0
      %898 = vdwg.mxu0
      %v899 = vmul.f32 %v894, 0.35355338
      %v900 = vsel %vm533, %v899, -inf
      %901 = vmax.xlane.f32.xlu0 %v900
      %v902 = vpop.xlane.xlu0 %901
      %v903 = vsub.f32 %v899, %v902
      %v904 = vmul.f32 %v903, 1.442695
      %v905 = vpow.pop %v904
      %v906 = vsel %vm533, %v905, 0.0
      %907 = vadd.xlane.f32.xlu0 %v906
      %v908 = vpop.xlane.xlu0 %907
      %v909 = vrcp.pop %v908
      %v910 = vmul.f32 %v905, %v909
      %v911 = vpack.c.bf16 %v910, %v910
      %912 = vrot.lane.b32.xlu0 %v529, 48
      %v913 = vpop.permute.xlu0 %912
      %v915 = vsel %vm533, %v911, 0
      %v918 = vsel %vm598, %v913, 0
      %920 = vmatprep.subr.bf16.mxu0 0
      %921 = vmatpush1.bf16.msra.mxu0 %v918
      %922 = vmatprep.subr.bf16.mxu0 0
      %923 = vmatpush1.bf16.msra.mxu0 0
      %924 = vmatprep.subr.bf16.mxu0 0
      %925 = vmatpush1.bf16.msra.mxu0 0
      %926 = vmatprep.subr.bf16.mxu0 0
      %927 = vmatpush1.bf16.msra.mxu0 0
      %928 = vmatprep.subr.bf16.mxu0 0
      %929 = vmatpush1.bf16.msra.mxu0 0
      %930 = vmatprep.subr.bf16.mxu0 0
      %931 = vmatpush1.bf16.msra.mxu0 0
      %932 = vmatprep.subr.bf16.mxu0 0
      %933 = vmatpush1.bf16.msra.mxu0 0
      %934 = vmatprep.subr.bf16.mxu0 0
      %935 = vmatpush1.bf16.msra.mxu0 0
      %936 = vmatprep.subr.bf16.mxu0 0
      %937 = vmatpush1.bf16.msra.mxu0 0
      %938 = vmatprep.subr.bf16.mxu0 0
      %939 = vmatpush1.bf16.msra.mxu0 0
      %940 = vmatprep.subr.bf16.mxu0 0
      %941 = vmatpush1.bf16.msra.mxu0 0
      %942 = vmatprep.subr.bf16.mxu0 0
      %943 = vmatpush1.bf16.msra.mxu0 0
      %944 = vmatprep.subr.bf16.mxu0 0
      %945 = vmatpush1.bf16.msra.mxu0 0
      %946 = vmatprep.subr.bf16.mxu0 0
      %947 = vmatpush1.bf16.msra.mxu0 0
      %948 = vmatprep.subr.bf16.mxu0 0
      %949 = vmatpush1.bf16.msra.mxu0 0
      %950 = vmatprep.subr.bf16.mxu0 0
      %951 = vmatpush1.bf16.msra.mxu0 0
      %952 = vmatprep.mubr.bf16.mxu0 0
      %953 = vmatmul.mubr.bf16.gmra.mrb[0].mxu0 %v915
      %v954 = vpop.f32.mrb[0].mxu0
      %v955 = vadd.f32 0.0, %v954
      %v956 = vpop.f32.mrb[0].mxu0
      %v957 = vpop.f32.mrb[0].mxu0
      %v958 = vpop.f32.mrb[0].mxu0
      %959 = vdwg.mxu0
      %v960 = vpack.c.bf16 %v955, %v955
      %v961 = vpack.c.bf16 %v527, %v527
      %v963 = vsel %vm533, %v960, 0
      %v966 = vsel %vm598, %v961, 0
      %968 = vmatprep.subr.bf16.mxu0 0
      %969 = vmatpush1.bf16.msra.mxu0 %v966
      %970 = vmatprep.subr.bf16.mxu0 0
      %971 = vmatpush1.bf16.msra.mxu0 0
      %972 = vmatprep.subr.bf16.mxu0 0
      %973 = vmatpush1.bf16.msra.mxu0 0
      %974 = vmatprep.subr.bf16.mxu0 0
      %975 = vmatpush1.bf16.msra.mxu0 0
      %976 = vmatprep.subr.bf16.mxu0 0
      %977 = vmatpush1.bf16.msra.mxu0 0
      %978 = vmatprep.subr.bf16.mxu0 0
      %979 = vmatpush1.bf16.msra.mxu0 0
      %980 = vmatprep.subr.bf16.mxu0 0
      %981 = vmatpush1.bf16.msra.mxu0 0
      %982 = vmatprep.subr.bf16.mxu0 0
      %983 = vmatpush1.bf16.msra.mxu0 0
      %984 = vmatprep.subr.bf16.mxu0 0
      %985 = vmatpush1.bf16.msra.mxu0 0
      %986 = vmatprep.subr.bf16.mxu0 0
      %987 = vmatpush1.bf16.msra.mxu0 0
      %988 = vmatprep.subr.bf16.mxu0 0
      %989 = vmatpush1.bf16.msra.mxu0 0
      %990 = vmatprep.subr.bf16.mxu0 0
      %991 = vmatpush1.bf16.msra.mxu0 0
      %992 = vmatprep.subr.bf16.mxu0 0
      %993 = vmatpush1.bf16.msra.mxu0 0
      %994 = vmatprep.subr.bf16.mxu0 0
      %995 = vmatpush1.bf16.msra.mxu0 0
      %996 = vmatprep.subr.bf16.mxu0 0
      %997 = vmatpush1.bf16.msra.mxu0 0
      %998 = vmatprep.subr.bf16.mxu0 0
      %999 = vmatpush1.bf16.msra.mxu0 0
      %1000 = vmatprep.mubr.bf16.mxu0 0
      %1001 = vmatmul.mubr.bf16.gmra.mrb[0].mxu0 %v963
      %v1002 = vpop.f32.mrb[0].mxu0
      %v1003 = vadd.f32 0.0, %v1002
      %v1004 = vpop.f32.mrb[0].mxu0
      %v1005 = vpop.f32.mrb[0].mxu0
      %v1006 = vpop.f32.mrb[0].mxu0
      %1007 = vdwg.mxu0
      %v1008 = vadd.f32 %v844, %v1003
      %1009 = vrot.lane.b32.xlu0 %v529, 104
      %v1010 = vpop.permute.xlu0 %1009
      %1011 = vrot.lane.b32.xlu0 %v529, 72
      %v1012 = vpop.permute.xlu0 %1011
      %v1014 = vsel %vm533, %v1010, 0
      %v1017 = vsel %vm533, %v1012, 0
      %1019 = vmatprep.subr.bf16.mxu0 0
      %1020 = vmatpush1.bf16.xpose.msra.mxu0 %v1017
      %1021 = vmatprep.subr.bf16.mxu0 0
      %1022 = vmatpush1.bf16.xpose.msra.mxu0 0
      %1023 = vmatprep.subr.bf16.mxu0 0
      %1024 = vmatpush1.bf16.xpose.msra.mxu0 0
      %1025 = vmatprep.subr.bf16.mxu0 0
      %1026 = vmatpush1.bf16.xpose.msra.mxu0 0
      %1027 = vmatprep.subr.bf16.mxu0 0
      %1028 = vmatpush1.bf16.xpose.msra.mxu0 0
      %1029 = vmatprep.subr.bf16.mxu0 0
      %1030 = vmatpush1.bf16.xpose.msra.mxu0 0
      %1031 = vmatprep.subr.bf16.mxu0 0
      %1032 = vmatpush1.bf16.xpose.msra.mxu0 0
      %1033 = vmatprep.subr.bf16.mxu0 0
      %1034 = vmatpush1.bf16.xpose.msra.mxu0 0
      %1035 = vmatprep.subr.bf16.mxu0 0
      %1036 = vmatpush1.bf16.xpose.msra.mxu0 0
      %1037 = vmatprep.subr.bf16.mxu0 0
      %1038 = vmatpush1.bf16.xpose.msra.mxu0 0
      %1039 = vmatprep.subr.bf16.mxu0 0
      %1040 = vmatpush1.bf16.xpose.msra.mxu0 0
      %1041 = vmatprep.subr.bf16.mxu0 0
      %1042 = vmatpush1.bf16.xpose.msra.mxu0 0
      %1043 = vmatprep.subr.bf16.mxu0 0
      %1044 = vmatpush1.bf16.xpose.msra.mxu0 0
      %1045 = vmatprep.subr.bf16.mxu0 0
      %1046 = vmatpush1.bf16.xpose.msra.mxu0 0
      %1047 = vmatprep.subr.bf16.mxu0 0
      %1048 = vmatpush1.bf16.xpose.msra.mxu0 0
      %1049 = vmatprep.subr.bf16.mxu0 0
      %1050 = vmatpush1.bf16.xpose.msra.mxu0 0
      %1051 = vmatprep.mubr.bf16.mxu0 0
      %1052 = vmatmul.mubr.bf16.gmra.mrb[0].mxu0 %v1014
      %v1053 = vpop.f32.mrb[0].mxu0
      %v1054 = vadd.f32 0.0, %v1053
      %v1055 = vpop.f32.mrb[0].mxu0
      %v1056 = vpop.f32.mrb[0].mxu0
      %v1057 = vpop.f32.mrb[0].mxu0
      %1058 = vdwg.mxu0
      %v1059 = vmul.f32 %v1054, 0.35355338
      %v1060 = vsel %vm533, %v1059, -inf
      %1061 = vmax.xlane.f32.xlu0 %v1060
      %v1062 = vpop.xlane.xlu0 %1061
      %v1063 = vsub.f32 %v1059, %v1062
      %v1064 = vmul.f32 %v1063, 1.442695
      %v1065 = vpow.pop %v1064
      %v1066 = vsel %vm533, %v1065, 0.0
      %1067 = vadd.xlane.f32.xlu0 %v1066
      %v1068 = vpop.xlane.xlu0 %1067
      %v1069 = vrcp.pop %v1068
      %v1070 = vmul.f32 %v1065, %v1069
      %v1071 = vpack.c.bf16 %v1070, %v1070
      %1072 = vrot.lane.b32.xlu0 %v529, 40
      %v1073 = vpop.permute.xlu0 %1072
      %v1075 = vsel %vm533, %v1071, 0
      %v1078 = vsel %vm598, %v1073, 0
      %1080 = vmatprep.subr.bf16.mxu0 0
      %1081 = vmatpush1.bf16.msra.mxu0 %v1078
      %1082 = vmatprep.subr.bf16.mxu0 0
      %1083 = vmatpush1.bf16.msra.mxu0 0
      %1084 = vmatprep.subr.bf16.mxu0 0
      %1085 = vmatpush1.bf16.msra.mxu0 0
      %1086 = vmatprep.subr.bf16.mxu0 0
      %1087 = vmatpush1.bf16.msra.mxu0 0
      %1088 = vmatprep.subr.bf16.mxu0 0
      %1089 = vmatpush1.bf16.msra.mxu0 0
      %1090 = vmatprep.subr.bf16.mxu0 0
      %1091 = vmatpush1.bf16.msra.mxu0 0
      %1092 = vmatprep.subr.bf16.mxu0 0
      %1093 = vmatpush1.bf16.msra.mxu0 0
      %1094 = vmatprep.subr.bf16.mxu0 0
      %1095 = vmatpush1.bf16.msra.mxu0 0
      %1096 = vmatprep.subr.bf16.mxu0 0
      %1097 = vmatpush1.bf16.msra.mxu0 0
      %1098 = vmatprep.subr.bf16.mxu0 0
      %1099 = vmatpush1.bf16.msra.mxu0 0
      %1100 = vmatprep.subr.bf16.mxu0 0
      %1101 = vmatpush1.bf16.msra.mxu0 0
      %1102 = vmatprep.subr.bf16.mxu0 0
      %1103 = vmatpush1.bf16.msra.mxu0 0
      %1104 = vmatprep.subr.bf16.mxu0 0
      %1105 = vmatpush1.bf16.msra.mxu0 0
      %1106 = vmatprep.subr.bf16.mxu0 0
      %1107 = vmatpush1.bf16.msra.mxu0 0
      %1108 = vmatprep.subr.bf16.mxu0 0
      %1109 = vmatpush1.bf16.msra.mxu0 0
      %1110 = vmatprep.subr.bf16.mxu0 0
      %1111 = vmatpush1.bf16.msra.mxu0 0
      %1112 = vmatprep.mubr.bf16.mxu0 0
      %1113 = vmatmul.mubr.bf16.gmra.mrb[0].mxu0 %v1075
      %v1114 = vpop.f32.mrb[0].mxu0
      %v1115 = vadd.f32 0.0, %v1114
      %v1116 = vpop.f32.mrb[0].mxu0
      %v1117 = vpop.f32.mrb[0].mxu0
      %v1118 = vpop.f32.mrb[0].mxu0
      %1119 = vdwg.mxu0
      %v1120 = vpack.c.bf16 %v1115, %v1115
      %v1121 = vpack.c.bf16 %v528, %v528
      %v1123 = vsel %vm533, %v1120, 0
      %v1126 = vsel %vm598, %v1121, 0
      %1128 = vmatprep.subr.bf16.mxu0 0
      %1129 = vmatpush1.bf16.msra.mxu0 %v1126
      %1130 = vmatprep.subr.bf16.mxu0 0
      %1131 = vmatpush1.bf16.msra.mxu0 0
      %1132 = vmatprep.subr.bf16.mxu0 0
      %1133 = vmatpush1.bf16.msra.mxu0 0
      %1134 = vmatprep.subr.bf16.mxu0 0
      %1135 = vmatpush1.bf16.msra.mxu0 0
      %1136 = vmatprep.subr.bf16.mxu0 0
      %1137 = vmatpush1.bf16.msra.mxu0 0
      %1138 = vmatprep.subr.bf16.mxu0 0
      %1139 = vmatpush1.bf16.msra.mxu0 0
      %1140 = vmatprep.subr.bf16.mxu0 0
      %1141 = vmatpush1.bf16.msra.mxu0 0
      %1142 = vmatprep.subr.bf16.mxu0 0
      %1143 = vmatpush1.bf16.msra.mxu0 0
      %1144 = vmatprep.subr.bf16.mxu0 0
      %1145 = vmatpush1.bf16.msra.mxu0 0
      %1146 = vmatprep.subr.bf16.mxu0 0
      %1147 = vmatpush1.bf16.msra.mxu0 0
      %1148 = vmatprep.subr.bf16.mxu0 0
      %1149 = vmatpush1.bf16.msra.mxu0 0
      %1150 = vmatprep.subr.bf16.mxu0 0
      %1151 = vmatpush1.bf16.msra.mxu0 0
      %1152 = vmatprep.subr.bf16.mxu0 0
      %1153 = vmatpush1.bf16.msra.mxu0 0
      %1154 = vmatprep.subr.bf16.mxu0 0
      %1155 = vmatpush1.bf16.msra.mxu0 0
      %1156 = vmatprep.subr.bf16.mxu0 0
      %1157 = vmatpush1.bf16.msra.mxu0 0
      %1158 = vmatprep.subr.bf16.mxu0 0
      %1159 = vmatpush1.bf16.msra.mxu0 0
      %1160 = vmatprep.mubr.bf16.mxu0 0
      %1161 = vmatmul.mubr.bf16.gmra.mrb[0].mxu0 %v1123
      %v1162 = vpop.f32.mrb[0].mxu0
      %v1163 = vadd.f32 0.0, %v1162
      %v1164 = vpop.f32.mrb[0].mxu0
      %v1165 = vpop.f32.mrb[0].mxu0
      %v1166 = vpop.f32.mrb[0].mxu0
      %1167 = vdwg.mxu0
      %v1168 = vadd.f32 %v1008, %v1163
      %v1169 = vld [vmem:[%s5] sm:$0x1]
      %v1171 = vlaneseq
      %v1172 = vshrl.u32 %v1171, 7
      %v1173 = vsub.s32 0, %v1172
      %v1174 = vrot.slane %v1169, %v1173
      %v1176 = vadd.f32 %v1168, %v1174
      %v1177 = vadd.f32 %v466, %v1176
      %v1178 = vld [vmem:[%s6] sm:$0x1]
      %v1179 = vld [vmem:[%s7] sm:$0x1]
      %v1180 = vsel %vm481, %v1177, 0.0
      %1181 = vadd.xlane.f32.xlu0 %v1180
      %v1182 = vpop.xlane.xlu0 %1181
      %v1183 = vrcp.pop 32.0
      %v1184 = vmul.f32 %v1182, %v1183
      %v1185 = vsub.f32 %v1177, %v1184
      %v1186 = vmul.f32 %v1185, %v1185
      %v1187 = vsel %vm481, %v1186, 0.0
      %1188 = vadd.xlane.f32.xlu0 %v1187
      %v1189 = vpop.xlane.xlu0 %1188
      %v1190 = vmul.f32 %v1189, %v1183
      %v1191 = vadd.f32 %v1190, 1e-05
      %v1192 = vrsqrt.pop %v1191
      %v1193 = vmul.f32 %v1185, %v1192
      %v1195 = vlaneseq
      %v1196 = vshrl.u32 %v1195, 7
      %v1197 = vsub.s32 0, %v1196
      %v1198 = vrot.slane %v1178, %v1197
      %v1200 = vmul.f32 %v1193, %v1198
      %v1202 = vlaneseq
      %v1203 = vshrl.u32 %v1202, 7
      %v1204 = vsub.s32 0, %v1203
      %v1205 = vrot.slane %v1179, %v1204
      %v1207 = vadd.f32 %v1200, %v1205
      %v1208 = vld [vmem:[%s8] sm:$0xff]
      %v1209 = vld [vmem:[%s8 + $0x8] sm:$0xff]
      %v1210 = vld [vmem:[%s8 + $0x10] sm:$0xff]
      %v1211 = vld [vmem:[%s8 + $0x18] sm:$0xff]
      %v1212 = vpack.c.bf16 %v1207, %v1207
      %v1213 = vpack.c.bf16 %v1209, %v1208
      %v1214 = vpack.c.bf16 %v1211, %v1210
      %v1215 = vld [vmem:[%s9] sm:$0x1]
      %v1217 = vlaneseq
      %v1218 = vshrl.u32 %v1217, 7
      %v1219 = vsub.s32 0, %v1218
      %v1220 = vrot.slane %v1215, %v1219
      %v1223 = vsel %vm481, %v1212, 0
      %1225 = vmatprep.subr.bf16.mxu0 0
      %1226 = vmatpush1.bf16.msra.mxu0 %v1213
      %1227 = vmatprep.subr.bf16.mxu0 0
      %1228 = vmatpush1.bf16.msra.mxu0 %v1214
      %1229 = vmatprep.subr.bf16.mxu0 0
      %1230 = vmatpush1.bf16.msra.mxu0 0
      %1231 = vmatprep.subr.bf16.mxu0 0
      %1232 = vmatpush1.bf16.msra.mxu0 0
      %1233 = vmatprep.subr.bf16.mxu0 0
      %1234 = vmatpush1.bf16.msra.mxu0 0
      %1235 = vmatprep.subr.bf16.mxu0 0
      %1236 = vmatpush1.bf16.msra.mxu0 0
      %1237 = vmatprep.subr.bf16.mxu0 0
      %1238 = vmatpush1.bf16.msra.mxu0 0
      %1239 = vmatprep.subr.bf16.mxu0 0
      %1240 = vmatpush1.bf16.msra.mxu0 0
      %1241 = vmatprep.subr.bf16.mxu0 0
      %1242 = vmatpush1.bf16.msra.mxu0 0
      %1243 = vmatprep.subr.bf16.mxu0 0
      %1244 = vmatpush1.bf16.msra.mxu0 0
      %1245 = vmatprep.subr.bf16.mxu0 0
      %1246 = vmatpush1.bf16.msra.mxu0 0
      %1247 = vmatprep.subr.bf16.mxu0 0
      %1248 = vmatpush1.bf16.msra.mxu0 0
      %1249 = vmatprep.subr.bf16.mxu0 0
      %1250 = vmatpush1.bf16.msra.mxu0 0
      %1251 = vmatprep.subr.bf16.mxu0 0
      %1252 = vmatpush1.bf16.msra.mxu0 0
      %1253 = vmatprep.subr.bf16.mxu0 0
      %1254 = vmatpush1.bf16.msra.mxu0 0
      %1255 = vmatprep.subr.bf16.mxu0 0
      %1256 = vmatpush1.bf16.msra.mxu0 0
      %1257 = vmatprep.mubr.bf16.mxu0 0
      %1258 = vmatmul.mubr.bf16.gmra.mrb[0].mxu0 %v1223
      %v1259 = vpop.f32.mrb[0].mxu0
      %v1260 = vadd.f32 %v1220, %v1259
      %v1261 = vpop.f32.mrb[0].mxu0
      %v1262 = vpop.f32.mrb[0].mxu0
      %v1263 = vpop.f32.mrb[0].mxu0
      %1264 = vdwg.mxu0
      %v1265 = vmax.f32 %v1260, 0.0
      %v1266 = vld [vmem:[%s10] sm:$0xff]
      %v1267 = vld [vmem:[%s10 + $0x8] sm:$0xff]
      %v1268 = vld [vmem:[%s10 + $0x10] sm:$0xff]
      %v1269 = vld [vmem:[%s10 + $0x18] sm:$0xff]
      %v1270 = vld [vmem:[%s10 + $0x20] sm:$0xff]
      %v1271 = vld [vmem:[%s10 + $0x28] sm:$0xff]
      %v1272 = vld [vmem:[%s10 + $0x30] sm:$0xff]
      %v1273 = vld [vmem:[%s10 + $0x38] sm:$0xff]
      %v1274 = vpack.c.bf16 %v1265, %v1265
      %v1275 = vpack.c.bf16 %v1267, %v1266
      %v1276 = vpack.c.bf16 %v1269, %v1268
      %v1277 = vpack.c.bf16 %v1271, %v1270
      %v1278 = vpack.c.bf16 %v1273, %v1272
      %v1279 = vld [vmem:[%s11] sm:$0x1]
      %v1281 = vlaneseq
      %v1282 = vshrl.u32 %v1281, 7
      %v1283 = vsub.s32 0, %v1282
      %v1284 = vrot.slane %v1279, %v1283
      %vm1286 = vcmask 523264
      %v1288 = vsel %vm1286, %v1274, 0
      %1290 = vmatprep.subr.bf16.mxu0 0
      %1291 = vmatpush1.bf16.msra.mxu0 %v1275
      %1292 = vmatprep.subr.bf16.mxu0 0
      %1293 = vmatpush1.bf16.msra.mxu0 %v1276
      %1294 = vmatprep.subr.bf16.mxu0 0
      %1295 = vmatpush1.bf16.msra.mxu0 %v1277
      %1296 = vmatprep.subr.bf16.mxu0 0
      %1297 = vmatpush1.bf16.msra.mxu0 %v1278
      %1298 = vmatprep.subr.bf16.mxu0 0
      %1299 = vmatpush1.bf16.msra.mxu0 0
      %1300 = vmatprep.subr.bf16.mxu0 0
      %1301 = vmatpush1.bf16.msra.mxu0 0
      %1302 = vmatprep.subr.bf16.mxu0 0
      %1303 = vmatpush1.bf16.msra.mxu0 0
      %1304 = vmatprep.subr.bf16.mxu0 0
      %1305 = vmatpush1.bf16.msra.mxu0 0
      %1306 = vmatprep.subr.bf16.mxu0 0
      %1307 = vmatpush1.bf16.msra.mxu0 0
      %1308 = vmatprep.subr.bf16.mxu0 0
      %1309 = vmatpush1.bf16.msra.mxu0 0
      %1310 = vmatprep.subr.bf16.mxu0 0
      %1311 = vmatpush1.bf16.msra.mxu0 0
      %1312 = vmatprep.subr.bf16.mxu0 0
      %1313 = vmatpush1.bf16.msra.mxu0 0
      %1314 = vmatprep.subr.bf16.mxu0 0
      %1315 = vmatpush1.bf16.msra.mxu0 0
      %1316 = vmatprep.subr.bf16.mxu0 0
      %1317 = vmatpush1.bf16.msra.mxu0 0
      %1318 = vmatprep.subr.bf16.mxu0 0
      %1319 = vmatpush1.bf16.msra.mxu0 0
      %1320 = vmatprep.subr.bf16.mxu0 0
      %1321 = vmatpush1.bf16.msra.mxu0 0
      %1322 = vmatprep.mubr.bf16.mxu0 0
      %1323 = vmatmul.mubr.bf16.gmra.mrb[0].mxu0 %v1288
      %v1324 = vpop.f32.mrb[0].mxu0
      %v1325 = vadd.f32 %v1284, %v1324
      %v1326 = vpop.f32.mrb[0].mxu0
      %v1327 = vpop.f32.mrb[0].mxu0
      %v1328 = vpop.f32.mrb[0].mxu0
      %1329 = vdwg.mxu0
      %v1330 = vadd.f32 %v1207, %v1325
      %v1331 = vld [vmem:[%s12] sm:$0x1]
      %v1332 = vld [vmem:[%s13] sm:$0x1]
      %v1333 = vsel %vm481, %v1330, 0.0
      %1334 = vadd.xlane.f32.xlu0 %v1333
      %v1335 = vpop.xlane.xlu0 %1334
      %v1336 = vmul.f32 %v1335, %v1183
      %v1337 = vsub.f32 %v1330, %v1336
      %v1338 = vmul.f32 %v1337, %v1337
      %v1339 = vsel %vm481, %v1338, 0.0
      %1340 = vadd.xlane.f32.xlu0 %v1339
      %v1341 = vpop.xlane.xlu0 %1340
      %v1342 = vmul.f32 %v1341, %v1183
      %v1343 = vadd.f32 %v1342, 1e-05
      %v1344 = vrsqrt.pop %v1343
      %v1345 = vmul.f32 %v1337, %v1344
      %v1347 = vlaneseq
      %v1348 = vshrl.u32 %v1347, 7
      %v1349 = vsub.s32 0, %v1348
      %v1350 = vrot.slane %v1331, %v1349
      %v1352 = vmul.f32 %v1345, %v1350
      %v1354 = vlaneseq
      %v1355 = vshrl.u32 %v1354, 7
      %v1356 = vsub.s32 0, %v1355
      %v1357 = vrot.slane %v1332, %v1356
      %v1359 = vadd.f32 %v1352, %v1357
      %1360 = vst.msk [vmem:[%s462] sm:$0xff] %vm481, %v1359
      %p1361 = scmp.lt.s32.totalorder %s25, 1
      %s1362 = scalar_select %p1361, %s25, 1
      %s1363 = smul.addr %s1362, 8
      %s1364 = scalar_lea.vmem %s14, %s1363
      // Predicated region
      $region77: #{_lambda_.11} parent=75 // pred_check
        %p1365 = pneg %p342
      $region78: #{_lambda_.11} parent=75 // pred_check_branch
        %1367 = sbr.rel (%p1365) target = $region80
      $region79: #{_lambda_.11} parent=75 // pred_region
        _
      $region80: #{_lambda_.11} parent=75 // pred_fallthru
        _
    $region76: #{_lambda_.11} parent=5 // pred_fallthru
      _
    %p1368 = scmp.le.s32.totalorder 2, %s20
    // Predicated region
    $region81: #{_lambda_.11} parent=5 // pred_check
      %p1369 = pneg %p1368
    $region82: #{_lambda_.11} parent=5 // pred_check_branch
      %1371 = sbr.rel (%p1369) target = $region84
    $region83: #{_lambda_.11} parent=5 // pred_region
      %s1372 = ssub.s32 %s20, 2
      // Predicated region
      $region85: #{_lambda_.11} parent=83 // pred_check
        %p1373 = pneg %p348
      $region86: #{_lambda_.11} parent=83 // pred_check_branch
        %1375 = sbr.rel (%p1373) target = $region88
      $region87: #{_lambda_.11} parent=83 // pred_region
        %p1376 = scmp.lt.s32.totalorder %s26, 1
        %s1377 = scalar_select %p1376, %s26, 1
        %s1378 = smul.addr %s1377, 8
        %s1379 = scalar_lea.vmem %s14, %s1378
      $region88: #{_lambda_.11} parent=83 // pred_fallthru
        _
    $region84: #{_lambda_.11} parent=5 // pred_fallthru
      _
  $region6: #{_lambda_.11} parent=0 // loop_footer
    %s24 = sadd.s32 1, %s20
  $region7: #{_lambda_.11} parent=0 // loop_footer_branch
    %19 = sbr.rel target = $region3
  $region8: #{_lambda_.11} parent=0 // loop_exit
    _

// kernel: _lambda_.8
$region0: #{_lambda_.8}
  #allocation0 [shape = 'u32[]', space=smem, size = 0x4, offset = 0x4, fixed_abs, tag = 'smem constant byte address 0x4 - core index']
  #allocation1 [shape = 'u32[144,128]{1,0:T(1,128)}', space=vmem, size = 0x12000, scoped, tag = 'internal scratch']
  %s0 = inlined_call_operand.vmem [shape: f32[2,8,32], index: 0, kind: input, shape index: {}]
  %s1 = inlined_call_operand.vmem [shape: f32[32,96], index: 1, kind: input, shape index: {}]
  %s2 = inlined_call_operand.vmem [shape: f32[1,96], index: 2, kind: input, shape index: {}]
  %s3 = inlined_call_operand.vmem [shape: f32[32,32], index: 3, kind: input, shape index: {}]
  %s4 = inlined_call_operand.vmem [shape: f32[1,32], index: 4, kind: input, shape index: {}]
  %s5 = inlined_call_operand.vmem [shape: f32[1,32], index: 5, kind: input, shape index: {}]
  %s6 = inlined_call_operand.vmem [shape: f32[1,32], index: 6, kind: input, shape index: {}]
  %s7 = inlined_call_operand.vmem [shape: f32[32,64], index: 7, kind: input, shape index: {}]
  %s8 = inlined_call_operand.vmem [shape: f32[1,64], index: 8, kind: input, shape index: {}]
  %s9 = inlined_call_operand.vmem [shape: f32[64,32], index: 9, kind: input, shape index: {}]
  %s10 = inlined_call_operand.vmem [shape: f32[1,32], index: 10, kind: input, shape index: {}]
  %s11 = inlined_call_operand.vmem [shape: f32[1,32], index: 11, kind: input, shape index: {}]
  %s12 = inlined_call_operand.vmem [shape: f32[1,32], index: 12, kind: input, shape index: {}]
  %s13 = inlined_call_operand.vmem [shape: f32[2,8,32], index: 13, kind: output, shape index: {}]
  %s14 = sld [smem:[#allocation0]]
  $region85: #{_lambda_.8} parent=0
    _
  %s16 = ssub.s32 1, %s14
  %s17 = scalar_select 0, %s16, %s14
  loop: start=0, step=1, limit=4
  $region2: #{_lambda_.8} parent=0 // loop_pre_header
    _
  $region3: #{_lambda_.8} parent=0 // loop_header
    %s19 = sphi 0, %s23
    %p20 = scmp.ge.s32.totalorder %s19, 4
    %s29 = sphi 0, %s31
    %s32 = sphi 0, %s29
    %s33 = sphi 0, %s32
    %s49 = sphi 0, %s33
    %s53 = sphi 0, %s53
    %s55 = sphi 0, %s53
    %s56 = sphi 0, %s55
    %s70 = sphi 0, %s56
    %s74 = sphi 0, %s74
    %s76 = sphi 0, %s74
    %s77 = sphi 0, %s76
    %s91 = sphi 0, %s77
    %s95 = sphi 0, %s95
    %s97 = sphi 0, %s95
    %s98 = sphi 0, %s97
    %s112 = sphi 0, %s98
    %s116 = sphi 0, %s116
    %s118 = sphi 0, %s116
    %s119 = sphi 0, %s118
    %s133 = sphi 0, %s119
    %s137 = sphi 0, %s137
    %s139 = sphi 0, %s137
    %s140 = sphi 0, %s139
    %s154 = sphi 0, %s140
    %s158 = sphi 0, %s158
    %s160 = sphi 0, %s158
    %s161 = sphi 0, %s160
    %s175 = sphi 0, %s161
    %s179 = sphi 0, %s179
    %s181 = sphi 0, %s179
    %s182 = sphi 0, %s181
    %s196 = sphi 0, %s182
    %s200 = sphi 0, %s200
    %s202 = sphi 0, %s200
    %s203 = sphi 0, %s202
    %s217 = sphi 0, %s203
    %s221 = sphi 0, %s221
    %s223 = sphi 0, %s221
    %s224 = sphi 0, %s223
    %s238 = sphi 0, %s224
    %s242 = sphi 0, %s242
    %s244 = sphi 0, %s242
    %s245 = sphi 0, %s244
    %s259 = sphi 0, %s245
    %s263 = sphi 0, %s263
    %s265 = sphi 0, %s263
    %s266 = sphi 0, %s265
    %s280 = sphi 0, %s266
    %s284 = sphi 0, %s284
    %s286 = sphi 0, %s284
    %s287 = sphi 0, %s286
    %s301 = sphi 0, %s287
    %s307 = sphi 0, %s309
    %s310 = sphi 0, %s307
    %s311 = sphi 0, %s310
    %s327 = sphi 0, %s311
  $region4: #{_lambda_.8} parent=0 // loop_header_branch
    %22 = sbr.rel (%p20) target = $region8
  $region5: #{_lambda_.8} parent=0 // loop_body
    %s24 = ssub.s32 %s19, 1
    %s25 = ssub.s32 %s19, 2
    %s26 = sadd.s32 %s19, 1
    %s27 = ssub.s32 %s19, %s26
    %p28 = scmp.eq.s32.totalorder %s27, 0
    %s30 = sadd.s32 %s29, 1
    %s31 = scalar_select %p28, %s29, %s30
    %p34 = pneg %p28
    %p35 = scmp.eq.s32.totalorder %s19, 1
    %p36 = por %p34, %p35
    %p37 = scmp.ne.s32.totalorder %s29, %s32
    %p38 = scmp.eq.s32.totalorder %s19, 0
    %p39 = por %p37, %p38
    %p40 = scmp.ne.s32.totalorder %s29, %s32
    %p41 = scmp.eq.s32.totalorder %s24, 1
    %p42 = por %p40, %p41
    %p43 = scmp.ne.s32.totalorder %s32, %s33
    %p44 = scmp.eq.s32.totalorder %s24, 0
    %p45 = por %p43, %p44
    %p46 = scmp.ne.s32.totalorder %s32, %s33
    %p47 = scmp.eq.s32.totalorder %s25, 1
    %p48 = por %p46, %p47
    %p50 = scmp.ne.s32.totalorder %s33, %s49
    %p51 = scmp.eq.s32.totalorder %s25, 0
    %p52 = por %p50, %p51
    %s54 = sadd.s32 %s53, 1
    %p57 = scmp.eq.s32.totalorder %s19, 1
    %p58 = scmp.ne.s32.totalorder %s53, %s55
    %p59 = scmp.eq.s32.totalorder %s19, 0
    %p60 = por %p58, %p59
    %p61 = scmp.ne.s32.totalorder %s53, %s55
    %p62 = scmp.eq.s32.totalorder %s24, 1
    %p63 = por %p61, %p62
    %p64 = scmp.ne.s32.totalorder %s55, %s56
    %p65 = scmp.eq.s32.totalorder %s24, 0
    %p66 = por %p64, %p65
    %p67 = scmp.ne.s32.totalorder %s55, %s56
    %p68 = scmp.eq.s32.totalorder %s25, 1
    %p69 = por %p67, %p68
    %p71 = scmp.ne.s32.totalorder %s56, %s70
    %p72 = scmp.eq.s32.totalorder %s25, 0
    %p73 = por %p71, %p72
    %s75 = sadd.s32 %s74, 1
    %p78 = scmp.eq.s32.totalorder %s19, 1
    %p79 = scmp.ne.s32.totalorder %s74, %s76
    %p80 = scmp.eq.s32.totalorder %s19, 0
    %p81 = por %p79, %p80
    %p82 = scmp.ne.s32.totalorder %s74, %s76
    %p83 = scmp.eq.s32.totalorder %s24, 1
    %p84 = por %p82, %p83
    %p85 = scmp.ne.s32.totalorder %s76, %s77
    %p86 = scmp.eq.s32.totalorder %s24, 0
    %p87 = por %p85, %p86
    %p88 = scmp.ne.s32.totalorder %s76, %s77
    %p89 = scmp.eq.s32.totalorder %s25, 1
    %p90 = por %p88, %p89
    %p92 = scmp.ne.s32.totalorder %s77, %s91
    %p93 = scmp.eq.s32.totalorder %s25, 0
    %p94 = por %p92, %p93
    %s96 = sadd.s32 %s95, 1
    %p99 = scmp.eq.s32.totalorder %s19, 1
    %p100 = scmp.ne.s32.totalorder %s95, %s97
    %p101 = scmp.eq.s32.totalorder %s19, 0
    %p102 = por %p100, %p101
    %p103 = scmp.ne.s32.totalorder %s95, %s97
    %p104 = scmp.eq.s32.totalorder %s24, 1
    %p105 = por %p103, %p104
    %p106 = scmp.ne.s32.totalorder %s97, %s98
    %p107 = scmp.eq.s32.totalorder %s24, 0
    %p108 = por %p106, %p107
    %p109 = scmp.ne.s32.totalorder %s97, %s98
    %p110 = scmp.eq.s32.totalorder %s25, 1
    %p111 = por %p109, %p110
    %p113 = scmp.ne.s32.totalorder %s98, %s112
    %p114 = scmp.eq.s32.totalorder %s25, 0
    %p115 = por %p113, %p114
    %s117 = sadd.s32 %s116, 1
    %p120 = scmp.eq.s32.totalorder %s19, 1
    %p121 = scmp.ne.s32.totalorder %s116, %s118
    %p122 = scmp.eq.s32.totalorder %s19, 0
    %p123 = por %p121, %p122
    %p124 = scmp.ne.s32.totalorder %s116, %s118
    %p125 = scmp.eq.s32.totalorder %s24, 1
    %p126 = por %p124, %p125
    %p127 = scmp.ne.s32.totalorder %s118, %s119
    %p128 = scmp.eq.s32.totalorder %s24, 0
    %p129 = por %p127, %p128
    %p130 = scmp.ne.s32.totalorder %s118, %s119
    %p131 = scmp.eq.s32.totalorder %s25, 1
    %p132 = por %p130, %p131
    %p134 = scmp.ne.s32.totalorder %s119, %s133
    %p135 = scmp.eq.s32.totalorder %s25, 0
    %p136 = por %p134, %p135
    %s138 = sadd.s32 %s137, 1
    %p141 = scmp.eq.s32.totalorder %s19, 1
    %p142 = scmp.ne.s32.totalorder %s137, %s139
    %p143 = scmp.eq.s32.totalorder %s19, 0
    %p144 = por %p142, %p143
    %p145 = scmp.ne.s32.totalorder %s137, %s139
    %p146 = scmp.eq.s32.totalorder %s24, 1
    %p147 = por %p145, %p146
    %p148 = scmp.ne.s32.totalorder %s139, %s140
    %p149 = scmp.eq.s32.totalorder %s24, 0
    %p150 = por %p148, %p149
    %p151 = scmp.ne.s32.totalorder %s139, %s140
    %p152 = scmp.eq.s32.totalorder %s25, 1
    %p153 = por %p151, %p152
    %p155 = scmp.ne.s32.totalorder %s140, %s154
    %p156 = scmp.eq.s32.totalorder %s25, 0
    %p157 = por %p155, %p156
    %s159 = sadd.s32 %s158, 1
    %p162 = scmp.eq.s32.totalorder %s19, 1
    %p163 = scmp.ne.s32.totalorder %s158, %s160
    %p164 = scmp.eq.s32.totalorder %s19, 0
    %p165 = por %p163, %p164
    %p166 = scmp.ne.s32.totalorder %s158, %s160
    %p167 = scmp.eq.s32.totalorder %s24, 1
    %p168 = por %p166, %p167
    %p169 = scmp.ne.s32.totalorder %s160, %s161
    %p170 = scmp.eq.s32.totalorder %s24, 0
    %p171 = por %p169, %p170
    %p172 = scmp.ne.s32.totalorder %s160, %s161
    %p173 = scmp.eq.s32.totalorder %s25, 1
    %p174 = por %p172, %p173
    %p176 = scmp.ne.s32.totalorder %s161, %s175
    %p177 = scmp.eq.s32.totalorder %s25, 0
    %p178 = por %p176, %p177
    %s180 = sadd.s32 %s179, 1
    %p183 = scmp.eq.s32.totalorder %s19, 1
    %p184 = scmp.ne.s32.totalorder %s179, %s181
    %p185 = scmp.eq.s32.totalorder %s19, 0
    %p186 = por %p184, %p185
    %p187 = scmp.ne.s32.totalorder %s179, %s181
    %p188 = scmp.eq.s32.totalorder %s24, 1
    %p189 = por %p187, %p188
    %p190 = scmp.ne.s32.totalorder %s181, %s182
    %p191 = scmp.eq.s32.totalorder %s24, 0
    %p192 = por %p190, %p191
    %p193 = scmp.ne.s32.totalorder %s181, %s182
    %p194 = scmp.eq.s32.totalorder %s25, 1
    %p195 = por %p193, %p194
    %p197 = scmp.ne.s32.totalorder %s182, %s196
    %p198 = scmp.eq.s32.totalorder %s25, 0
    %p199 = por %p197, %p198
    %s201 = sadd.s32 %s200, 1
    %p204 = scmp.eq.s32.totalorder %s19, 1
    %p205 = scmp.ne.s32.totalorder %s200, %s202
    %p206 = scmp.eq.s32.totalorder %s19, 0
    %p207 = por %p205, %p206
    %p208 = scmp.ne.s32.totalorder %s200, %s202
    %p209 = scmp.eq.s32.totalorder %s24, 1
    %p210 = por %p208, %p209
    %p211 = scmp.ne.s32.totalorder %s202, %s203
    %p212 = scmp.eq.s32.totalorder %s24, 0
    %p213 = por %p211, %p212
    %p214 = scmp.ne.s32.totalorder %s202, %s203
    %p215 = scmp.eq.s32.totalorder %s25, 1
    %p216 = por %p214, %p215
    %p218 = scmp.ne.s32.totalorder %s203, %s217
    %p219 = scmp.eq.s32.totalorder %s25, 0
    %p220 = por %p218, %p219
    %s222 = sadd.s32 %s221, 1
    %p225 = scmp.eq.s32.totalorder %s19, 1
    %p226 = scmp.ne.s32.totalorder %s221, %s223
    %p227 = scmp.eq.s32.totalorder %s19, 0
    %p228 = por %p226, %p227
    %p229 = scmp.ne.s32.totalorder %s221, %s223
    %p230 = scmp.eq.s32.totalorder %s24, 1
    %p231 = por %p229, %p230
    %p232 = scmp.ne.s32.totalorder %s223, %s224
    %p233 = scmp.eq.s32.totalorder %s24, 0
    %p234 = por %p232, %p233
    %p235 = scmp.ne.s32.totalorder %s223, %s224
    %p236 = scmp.eq.s32.totalorder %s25, 1
    %p237 = por %p235, %p236
    %p239 = scmp.ne.s32.totalorder %s224, %s238
    %p240 = scmp.eq.s32.totalorder %s25, 0
    %p241 = por %p239, %p240
    %s243 = sadd.s32 %s242, 1
    %p246 = scmp.eq.s32.totalorder %s19, 1
    %p247 = scmp.ne.s32.totalorder %s242, %s244
    %p248 = scmp.eq.s32.totalorder %s19, 0
    %p249 = por %p247, %p248
    %p250 = scmp.ne.s32.totalorder %s242, %s244
    %p251 = scmp.eq.s32.totalorder %s24, 1
    %p252 = por %p250, %p251
    %p253 = scmp.ne.s32.totalorder %s244, %s245
    %p254 = scmp.eq.s32.totalorder %s24, 0
    %p255 = por %p253, %p254
    %p256 = scmp.ne.s32.totalorder %s244, %s245
    %p257 = scmp.eq.s32.totalorder %s25, 1
    %p258 = por %p256, %p257
    %p260 = scmp.ne.s32.totalorder %s245, %s259
    %p261 = scmp.eq.s32.totalorder %s25, 0
    %p262 = por %p260, %p261
    %s264 = sadd.s32 %s263, 1
    %p267 = scmp.eq.s32.totalorder %s19, 1
    %p268 = scmp.ne.s32.totalorder %s263, %s265
    %p269 = scmp.eq.s32.totalorder %s19, 0
    %p270 = por %p268, %p269
    %p271 = scmp.ne.s32.totalorder %s263, %s265
    %p272 = scmp.eq.s32.totalorder %s24, 1
    %p273 = por %p271, %p272
    %p274 = scmp.ne.s32.totalorder %s265, %s266
    %p275 = scmp.eq.s32.totalorder %s24, 0
    %p276 = por %p274, %p275
    %p277 = scmp.ne.s32.totalorder %s265, %s266
    %p278 = scmp.eq.s32.totalorder %s25, 1
    %p279 = por %p277, %p278
    %p281 = scmp.ne.s32.totalorder %s266, %s280
    %p282 = scmp.eq.s32.totalorder %s25, 0
    %p283 = por %p281, %p282
    %s285 = sadd.s32 %s284, 1
    %p288 = scmp.eq.s32.totalorder %s19, 1
    %p289 = scmp.ne.s32.totalorder %s284, %s286
    %p290 = scmp.eq.s32.totalorder %s19, 0
    %p291 = por %p289, %p290
    %p292 = scmp.ne.s32.totalorder %s284, %s286
    %p293 = scmp.eq.s32.totalorder %s24, 1
    %p294 = por %p292, %p293
    %p295 = scmp.ne.s32.totalorder %s286, %s287
    %p296 = scmp.eq.s32.totalorder %s24, 0
    %p297 = por %p295, %p296
    %p298 = scmp.ne.s32.totalorder %s286, %s287
    %p299 = scmp.eq.s32.totalorder %s25, 1
    %p300 = por %p298, %p299
    %p302 = scmp.ne.s32.totalorder %s287, %s301
    %p303 = scmp.eq.s32.totalorder %s25, 0
    %p304 = por %p302, %p303
    %s305 = ssub.s32 %s19, %s26
    %p306 = scmp.eq.s32.totalorder %s305, 0
    %s308 = sadd.s32 %s307, 1
    %s309 = scalar_select %p306, %s307, %s308
    %p312 = pneg %p306
    %p313 = scmp.eq.s32.totalorder %s19, 1
    %p314 = por %p312, %p313
    %p315 = scmp.ne.s32.totalorder %s307, %s310
    %p316 = scmp.eq.s32.totalorder %s19, 0
    %p317 = por %p315, %p316
    %p318 = scmp.ne.s32.totalorder %s307, %s310
    %p319 = scmp.eq.s32.totalorder %s24, 1
    %p320 = por %p318, %p319
    %p321 = scmp.ne.s32.totalorder %s310, %s311
    %p322 = scmp.eq.s32.totalorder %s24, 0
    %p323 = por %p321, %p322
    %p324 = scmp.ne.s32.totalorder %s310, %s311
    %p325 = scmp.eq.s32.totalorder %s25, 1
    %p326 = por %p324, %p325
    %p328 = scmp.ne.s32.totalorder %s311, %s327
    %p329 = scmp.eq.s32.totalorder %s25, 0
    %p330 = por %p328, %p329
    %p331 = scmp.le.s32.totalorder 1, %s19
    %p332 = scmp.lt.s32.totalorder %s19, 3
    %p333 = pnand %p331, %p332
    %p334 = pneg %p333
    // Predicated region
    $region9: #{_lambda_.8} parent=5 // pred_check
      _
    $region10: #{_lambda_.8} parent=5 // pred_check_branch
      %336 = sbr.rel (%p333) target = $region12
    $region11: #{_lambda_.8} parent=5 // pred_region
      %s337 = ssub.s32 %s19, 1
      // Predicated region
      $region13: #{_lambda_.8} parent=11 // pred_check
        %p338 = pneg %p66
      $region14: #{_lambda_.8} parent=11 // pred_check_branch
        %340 = sbr.rel (%p338) target = $region16
      $region15: #{_lambda_.8} parent=11 // pred_region
        _
      $region16: #{_lambda_.8} parent=11 // pred_fallthru
        _
      // Predicated region
      $region17: #{_lambda_.8} parent=11 // pred_check
        %p341 = pneg %p87
      $region18: #{_lambda_.8} parent=11 // pred_check_branch
        %343 = sbr.rel (%p341) target = $region20
      $region19: #{_lambda_.8} parent=11 // pred_region
        _
      $region20: #{_lambda_.8} parent=11 // pred_fallthru
        _
      // Predicated region
      $region21: #{_lambda_.8} parent=11 // pred_check
        %p344 = pneg %p108
      $region22: #{_lambda_.8} parent=11 // pred_check_branch
        %346 = sbr.rel (%p344) target = $region24
      $region23: #{_lambda_.8} parent=11 // pred_region
        _
      $region24: #{_lambda_.8} parent=11 // pred_fallthru
        _
      // Predicated region
      $region25: #{_lambda_.8} parent=11 // pred_check
        %p347 = pneg %p129
      $region26: #{_lambda_.8} parent=11 // pred_check_branch
        %349 = sbr.rel (%p347) target = $region28
      $region27: #{_lambda_.8} parent=11 // pred_region
        _
      $region28: #{_lambda_.8} parent=11 // pred_fallthru
        _
      // Predicated region
      $region29: #{_lambda_.8} parent=11 // pred_check
        %p350 = pneg %p150
      $region30: #{_lambda_.8} parent=11 // pred_check_branch
        %352 = sbr.rel (%p350) target = $region32
      $region31: #{_lambda_.8} parent=11 // pred_region
        _
      $region32: #{_lambda_.8} parent=11 // pred_fallthru
        _
      // Predicated region
      $region33: #{_lambda_.8} parent=11 // pred_check
        %p353 = pneg %p171
      $region34: #{_lambda_.8} parent=11 // pred_check_branch
        %355 = sbr.rel (%p353) target = $region36
      $region35: #{_lambda_.8} parent=11 // pred_region
        _
      $region36: #{_lambda_.8} parent=11 // pred_fallthru
        _
      // Predicated region
      $region37: #{_lambda_.8} parent=11 // pred_check
        %p356 = pneg %p192
      $region38: #{_lambda_.8} parent=11 // pred_check_branch
        %358 = sbr.rel (%p356) target = $region40
      $region39: #{_lambda_.8} parent=11 // pred_region
        _
      $region40: #{_lambda_.8} parent=11 // pred_fallthru
        _
      // Predicated region
      $region41: #{_lambda_.8} parent=11 // pred_check
        %p359 = pneg %p213
      $region42: #{_lambda_.8} parent=11 // pred_check_branch
        %361 = sbr.rel (%p359) target = $region44
      $region43: #{_lambda_.8} parent=11 // pred_region
        _
      $region44: #{_lambda_.8} parent=11 // pred_fallthru
        _
      // Predicated region
      $region45: #{_lambda_.8} parent=11 // pred_check
        %p362 = pneg %p234
      $region46: #{_lambda_.8} parent=11 // pred_check_branch
        %364 = sbr.rel (%p362) target = $region48
      $region47: #{_lambda_.8} parent=11 // pred_region
        _
      $region48: #{_lambda_.8} parent=11 // pred_fallthru
        _
      // Predicated region
      $region49: #{_lambda_.8} parent=11 // pred_check
        %p365 = pneg %p255
      $region50: #{_lambda_.8} parent=11 // pred_check_branch
        %367 = sbr.rel (%p365) target = $region52
      $region51: #{_lambda_.8} parent=11 // pred_region
        _
      $region52: #{_lambda_.8} parent=11 // pred_fallthru
        _
      // Predicated region
      $region53: #{_lambda_.8} parent=11 // pred_check
        %p368 = pneg %p276
      $region54: #{_lambda_.8} parent=11 // pred_check_branch
        %370 = sbr.rel (%p368) target = $region56
      $region55: #{_lambda_.8} parent=11 // pred_region
        _
      $region56: #{_lambda_.8} parent=11 // pred_fallthru
        _
      // Predicated region
      $region57: #{_lambda_.8} parent=11 // pred_check
        %p371 = pneg %p297
      $region58: #{_lambda_.8} parent=11 // pred_check_branch
        %373 = sbr.rel (%p371) target = $region60
      $region59: #{_lambda_.8} parent=11 // pred_region
        _
      $region60: #{_lambda_.8} parent=11 // pred_fallthru
        _
    $region12: #{_lambda_.8} parent=5 // pred_fallthru
      _
    %p374 = scmp.lt.s32.totalorder %s19, 2
    // Predicated region
    $region61: #{_lambda_.8} parent=5 // pred_check
      %p375 = pneg %p374
    $region62: #{_lambda_.8} parent=5 // pred_check_branch
      %377 = sbr.rel (%p375) target = $region64
    $region63: #{_lambda_.8} parent=5 // pred_region
      // Predicated region
      $region65: #{_lambda_.8} parent=63 // pred_check
        %p378 = pneg %p39
      $region66: #{_lambda_.8} parent=63 // pred_check_branch
        %380 = sbr.rel (%p378) target = $region68
      $region67: #{_lambda_.8} parent=63 // pred_region
        %p381 = scmp.lt.s32.totalorder %s19, 1
        %s382 = scalar_select %p381, %s19, 1
        %s383 = smul.addr %s382, 8
        %s384 = scalar_lea.vmem %s0, %s383
      $region68: #{_lambda_.8} parent=63 // pred_fallthru
        _
    $region64: #{_lambda_.8} parent=5 // pred_fallthru
      _
    %p385 = scmp.le.s32.totalorder 1, %s19
    %p386 = scmp.lt.s32.totalorder %s19, 3
    %p387 = pnand %p385, %p386
    %p388 = pneg %p387
    // Predicated region
    $region69: #{_lambda_.8} parent=5 // pred_check
      _
    $region70: #{_lambda_.8} parent=5 // pred_check_branch
      %390 = sbr.rel (%p387) target = $region72
    $region71: #{_lambda_.8} parent=5 // pred_region
      %s391 = ssub.s32 %s19, 1
      %p392 = scmp.lt.s32.totalorder %s24, 1
      %s393 = scalar_select %p392, %s24, 1
      %s394 = smul.addr %s393, 8
      %s395 = scalar_lea.vmem %s0, %s394
      %p396 = pneg %p45
      %p397 = pneg %p42
      %p398 = pneg %p66
      %p399 = pneg %p63
      %p400 = pneg %p87
      %p401 = pneg %p84
      %p402 = pneg %p108
      %p403 = pneg %p105
      %p404 = pneg %p129
      %p405 = pneg %p126
      %p406 = pneg %p150
      %p407 = pneg %p147
      %p408 = pneg %p171
      %p409 = pneg %p168
      %p410 = pneg %p192
      %p411 = pneg %p189
      %p412 = pneg %p213
      %p413 = pneg %p210
      %p414 = pneg %p234
      %p415 = pneg %p231
      %p416 = pneg %p255
      %p417 = pneg %p252
      %p418 = pneg %p276
      %p419 = pneg %p273
      %p420 = pneg %p297
      %p421 = pneg %p294
      %p422 = pneg %p323
      %p423 = pneg %p320
      %p424 = scmp.lt.s32.totalorder %s24, 1
      %s425 = scalar_select %p424, %s24, 1
      %s426 = smul.addr %s425, 8
      %s427 = scalar_lea.vmem %s13, %s426
      %p428 = scmp.lt.s32.totalorder %s24, 1
      %s429 = scalar_select %p428, %s24, 1
      %s430 = smul.addr %s429, 8
      %s431 = scalar_lea.vmem %s0, %s430
      %p432 = scmp.lt.s32.totalorder %s24, 1
      %s433 = scalar_select %p432, %s24, 1
      %s434 = smul.addr %s433, 8
      %s435 = scalar_lea.vmem %s13, %s434
      %v437 = vld [vmem:[%s431] sm:$0xff]
      %v438 = vld [vmem:[%s1] sm:$0xff]
      %v439 = vld [vmem:[%s1 + $0x8] sm:$0xff]
      %v440 = vld [vmem:[%s1 + $0x10] sm:$0xff]
      %v441 = vld [vmem:[%s1 + $0x18] sm:$0xff]
      %v442 = vpack.c.bf16 %v437, %v437
      %v443 = vpack.c.bf16 %v439, %v438
      %v444 = vpack.c.bf16 %v441, %v440
      %v445 = vld [vmem:[%s2] sm:$0x1]
      %v447 = vlaneseq
      %v448 = vshrl.u32 %v447, 7
      %v449 = vsub.s32 0, %v448
      %v450 = vrot.slane %v445, %v449
      %vm452 = vcmask 261120
      %v454 = vsel %vm452, %v442, 0
      %456 = vmatprep.subr.bf16.mxu0 0
      %457 = vmatpush1.bf16.msra.mxu0 %v443
      %458 = vmatprep.subr.bf16.mxu0 0
      %459 = vmatpush1.bf16.msra.mxu0 %v444
      %460 = vmatprep.subr.bf16.mxu0 0
      %461 = vmatpush1.bf16.msra.mxu0 0
      %462 = vmatprep.subr.bf16.mxu0 0
      %463 = vmatpush1.bf16.msra.mxu0 0
      %464 = vmatprep.subr.bf16.mxu0 0
      %465 = vmatpush1.bf16.msra.mxu0 0
      %466 = vmatprep.subr.bf16.mxu0 0
      %467 = vmatpush1.bf16.msra.mxu0 0
      %468 = vmatprep.subr.bf16.mxu0 0
      %469 = vmatpush1.bf16.msra.mxu0 0
      %470 = vmatprep.subr.bf16.mxu0 0
      %471 = vmatpush1.bf16.msra.mxu0 0
      %472 = vmatprep.subr.bf16.mxu0 0
      %473 = vmatpush1.bf16.msra.mxu0 0
      %474 = vmatprep.subr.bf16.mxu0 0
      %475 = vmatpush1.bf16.msra.mxu0 0
      %476 = vmatprep.subr.bf16.mxu0 0
      %477 = vmatpush1.bf16.msra.mxu0 0
      %478 = vmatprep.subr.bf16.mxu0 0
      %479 = vmatpush1.bf16.msra.mxu0 0
      %480 = vmatprep.subr.bf16.mxu0 0
      %481 = vmatpush1.bf16.msra.mxu0 0
      %482 = vmatprep.subr.bf16.mxu0 0
      %483 = vmatpush1.bf16.msra.mxu0 0
      %484 = vmatprep.subr.bf16.mxu0 0
      %485 = vmatpush1.bf16.msra.mxu0 0
      %486 = vmatprep.subr.bf16.mxu0 0
      %487 = vmatpush1.bf16.msra.mxu0 0
      %488 = vmatprep.mubr.bf16.mxu0 0
      %489 = vmatmul.mubr.bf16.gmra.mrb[0].mxu0 %v454
      %v490 = vpop.f32.mrb[0].mxu0
      %v491 = vadd.f32 %v450, %v490
      %v492 = vpop.f32.mrb[0].mxu0
      %v493 = vpop.f32.mrb[0].mxu0
      %v494 = vpop.f32.mrb[0].mxu0
      %495 = vdwg.mxu0
      %v496 = vld [vmem:[%s3] sm:$0xff]
      %v497 = vld [vmem:[%s3 + $0x8] sm:$0xff]
      %v498 = vld [vmem:[%s3 + $0x10] sm:$0xff]
      %v499 = vld [vmem:[%s3 + $0x18] sm:$0xff]
      %v500 = vpack.c.bf16 %v491, %v491
      %502 = vrot.lane.b32.xlu0 %v500, 96
      %v503 = vpop.permute.xlu0 %502
      %vm504 = vcmask 64512
      %v506 = vsel %vm504, %v500, 0
      %v509 = vsel %vm504, %v503, 0
      %511 = vmatprep.subr.bf16.mxu0 0
      %512 = vmatpush1.bf16.xpose.msra.mxu0 %v509
      %513 = vmatprep.subr.bf16.mxu0 0
      %514 = vmatpush1.bf16.xpose.msra.mxu0 0
      %515 = vmatprep.subr.bf16.mxu0 0
      %516 = vmatpush1.bf16.xpose.msra.mxu0 0
      %517 = vmatprep.subr.bf16.mxu0 0
      %518 = vmatpush1.bf16.xpose.msra.mxu0 0
      %519 = vmatprep.subr.bf16.mxu0 0
      %520 = vmatpush1.bf16.xpose.msra.mxu0 0
      %521 = vmatprep.subr.bf16.mxu0 0
      %522 = vmatpush1.bf16.xpose.msra.mxu0 0
      %523 = vmatprep.subr.bf16.mxu0 0
      %524 = vmatpush1.bf16.xpose.msra.mxu0 0
      %525 = vmatprep.subr.bf16.mxu0 0
      %526 = vmatpush1.bf16.xpose.msra.mxu0 0
      %527 = vmatprep.subr.bf16.mxu0 0
      %528 = vmatpush1.bf16.xpose.msra.mxu0 0
      %529 = vmatprep.subr.bf16.mxu0 0
      %530 = vmatpush1.bf16.xpose.msra.mxu0 0
      %531 = vmatprep.subr.bf16.mxu0 0
      %532 = vmatpush1.bf16.xpose.msra.mxu0 0
      %533 = vmatprep.subr.bf16.mxu0 0
      %534 = vmatpush1.bf16.xpose.msra.mxu0 0
      %535 = vmatprep.subr.bf16.mxu0 0
      %536 = vmatpush1.bf16.xpose.msra.mxu0 0
      %537 = vmatprep.subr.bf16.mxu0 0
      %538 = vmatpush1.bf16.xpose.msra.mxu0 0
      %539 = vmatprep.subr.bf16.mxu0 0
      %540 = vmatpush1.bf16.xpose.msra.mxu0 0
      %541 = vmatprep.subr.bf16.mxu0 0
      %542 = vmatpush1.bf16.xpose.msra.mxu0 0
      %543 = vmatprep.mubr.bf16.mxu0 0
      %544 = vmatmul.mubr.bf16.gmra.mrb[0].mxu0 %v506
      %v545 = vpop.f32.mrb[0].mxu0
      %v546 = vadd.f32 0.0, %v545
      %v547 = vpop.f32.mrb[0].mxu0
      %v548 = vpop.f32.mrb[0].mxu0
      %v549 = vpop.f32.mrb[0].mxu0
      %550 = vdwg.mxu0
      %v551 = vmul.f32 %v546, 0.35355338
      %v552 = vsel %vm504, %v551, -inf
      %553 = vmax.xlane.f32.xlu0 %v552
      %v554 = vpop.xlane.xlu0 %553
      %v555 = vsub.f32 %v551, %v554
      %v556 = vmul.f32 %v555, 1.442695
      %v557 = vpow.pop %v556
      %v558 = vsel %vm504, %v557, 0.0
      %559 = vadd.xlane.f32.xlu0 %v558
      %v560 = vpop.xlane.xlu0 %559
      %v561 = vrcp.pop %v560
      %v562 = vmul.f32 %v557, %v561
      %v563 = vpack.c.bf16 %v562, %v562
      %564 = vrot.lane.b32.xlu0 %v500, 64
      %v565 = vpop.permute.xlu0 %564
      %v567 = vsel %vm504, %v563, 0
      %vm569 = vcmask 1043456
      %v571 = vsel %vm569, %v565, 0
      %573 = vmatprep.subr.bf16.mxu0 0
      %574 = vmatpush1.bf16.msra.mxu0 %v571
      %575 = vmatprep.subr.bf16.mxu0 0
      %576 = vmatpush1.bf16.msra.mxu0 0
      %577 = vmatprep.subr.bf16.mxu0 0
      %578 = vmatpush1.bf16.msra.mxu0 0
      %579 = vmatprep.subr.bf16.mxu0 0
      %580 = vmatpush1.bf16.msra.mxu0 0
      %581 = vmatprep.subr.bf16.mxu0 0
      %582 = vmatpush1.bf16.msra.mxu0 0
      %583 = vmatprep.subr.bf16.mxu0 0
      %584 = vmatpush1.bf16.msra.mxu0 0
      %585 = vmatprep.subr.bf16.mxu0 0
      %586 = vmatpush1.bf16.msra.mxu0 0
      %587 = vmatprep.subr.bf16.mxu0 0
      %588 = vmatpush1.bf16.msra.mxu0 0
      %589 = vmatprep.subr.bf16.mxu0 0
      %590 = vmatpush1.bf16.msra.mxu0 0
      %591 = vmatprep.subr.bf16.mxu0 0
      %592 = vmatpush1.bf16.msra.mxu0 0
      %593 = vmatprep.subr.bf16.mxu0 0
      %594 = vmatpush1.bf16.msra.mxu0 0
      %595 = vmatprep.subr.bf16.mxu0 0
      %596 = vmatpush1.bf16.msra.mxu0 0
      %597 = vmatprep.subr.bf16.mxu0 0
      %598 = vmatpush1.bf16.msra.mxu0 0
      %599 = vmatprep.subr.bf16.mxu0 0
      %600 = vmatpush1.bf16.msra.mxu0 0
      %601 = vmatprep.subr.bf16.mxu0 0
      %602 = vmatpush1.bf16.msra.mxu0 0
      %603 = vmatprep.subr.bf16.mxu0 0
      %604 = vmatpush1.bf16.msra.mxu0 0
      %605 = vmatprep.mubr.bf16.mxu0 0
      %606 = vmatmul.mubr.bf16.gmra.mrb[0].mxu0 %v567
      %v607 = vpop.f32.mrb[0].mxu0
      %v608 = vadd.f32 0.0, %v607
      %v609 = vpop.f32.mrb[0].mxu0
      %v610 = vpop.f32.mrb[0].mxu0
      %v611 = vpop.f32.mrb[0].mxu0
      %612 = vdwg.mxu0
      %v613 = vpack.c.bf16 %v608, %v608
      %v614 = vpack.c.bf16 %v496, %v496
      %615 = vrot.lane.b32.xlu0 %v500, 120
      %v616 = vpop.permute.xlu0 %615
      %617 = vrot.lane.b32.xlu0 %v500, 88
      %v618 = vpop.permute.xlu0 %617
      %v620 = vsel %vm504, %v616, 0
      %v623 = vsel %vm504, %v618, 0
      %625 = vmatprep.subr.bf16.mxu0 0
      %626 = vmatpush1.bf16.xpose.msra.mxu0 %v623
      %627 = vmatprep.subr.bf16.mxu0 0
      %628 = vmatpush1.bf16.xpose.msra.mxu0 0
      %629 = vmatprep.subr.bf16.mxu0 0
      %630 = vmatpush1.bf16.xpose.msra.mxu0 0
      %631 = vmatprep.subr.bf16.mxu0 0
      %632 = vmatpush1.bf16.xpose.msra.mxu0 0
      %633 = vmatprep.subr.bf16.mxu0 0
      %634 = vmatpush1.bf16.xpose.msra.mxu0 0
      %635 = vmatprep.subr.bf16.mxu0 0
      %636 = vmatpush1.bf16.xpose.msra.mxu0 0
      %637 = vmatprep.subr.bf16.mxu0 0
      %638 = vmatpush1.bf16.xpose.msra.mxu0 0
      %639 = vmatprep.subr.bf16.mxu0 0
      %640 = vmatpush1.bf16.xpose.msra.mxu0 0
      %641 = vmatprep.subr.bf16.mxu0 0
      %642 = vmatpush1.bf16.xpose.msra.mxu0 0
      %643 = vmatprep.subr.bf16.mxu0 0
      %644 = vmatpush1.bf16.xpose.msra.mxu0 0
      %645 = vmatprep.subr.bf16.mxu0 0
      %646 = vmatpush1.bf16.xpose.msra.mxu0 0
      %647 = vmatprep.subr.bf16.mxu0 0
      %648 = vmatpush1.bf16.xpose.msra.mxu0 0
      %649 = vmatprep.subr.bf16.mxu0 0
      %650 = vmatpush1.bf16.xpose.msra.mxu0 0
      %651 = vmatprep.subr.bf16.mxu0 0
      %652 = vmatpush1.bf16.xpose.msra.mxu0 0
      %653 = vmatprep.subr.bf16.mxu0 0
      %654 = vmatpush1.bf16.xpose.msra.mxu0 0
      %655 = vmatprep.subr.bf16.mxu0 0
      %656 = vmatpush1.bf16.xpose.msra.mxu0 0
      %657 = vmatprep.mubr.bf16.mxu0 0
      %658 = vmatmul.mubr.bf16.gmra.mrb[0].mxu0 %v620
      %v659 = vpop.f32.mrb[0].mxu0
      %v660 = vadd.f32 0.0, %v659
      %v661 = vpop.f32.mrb[0].mxu0
      %v662 = vpop.f32.mrb[0].mxu0
      %v663 = vpop.f32.mrb[0].mxu0
      %664 = vdwg.mxu0
      %v665 = vmul.f32 %v660, 0.35355338
      %v666 = vsel %vm504, %v665, -inf
      %667 = vmax.xlane.f32.xlu0 %v666
      %v668 = vpop.xlane.xlu0 %667
      %v669 = vsub.f32 %v665, %v668
      %v670 = vmul.f32 %v669, 1.442695
      %v671 = vpow.pop %v670
      %v672 = vsel %vm504, %v671, 0.0
      %673 = vadd.xlane.f32.xlu0 %v672
      %v674 = vpop.xlane.xlu0 %673
      %v675 = vrcp.pop %v674
      %v676 = vmul.f32 %v671, %v675
      %v677 = vpack.c.bf16 %v676, %v676
      %678 = vrot.lane.b32.xlu0 %v500, 56
      %v679 = vpop.permute.xlu0 %678
      %v681 = vsel %vm504, %v677, 0
      %v684 = vsel %vm569, %v679, 0
      %686 = vmatprep.subr.bf16.mxu0 0
      %687 = vmatpush1.bf16.msra.mxu0 %v684
      %688 = vmatprep.subr.bf16.mxu0 0
      %689 = vmatpush1.bf16.msra.mxu0 0
      %690 = vmatprep.subr.bf16.mxu0 0
      %691 = vmatpush1.bf16.msra.mxu0 0
      %692 = vmatprep.subr.bf16.mxu0 0
      %693 = vmatpush1.bf16.msra.mxu0 0
      %694 = vmatprep.subr.bf16.mxu0 0
      %695 = vmatpush1.bf16.msra.mxu0 0
      %696 = vmatprep.subr.bf16.mxu0 0
      %697 = vmatpush1.bf16.msra.mxu0 0
      %698 = vmatprep.subr.bf16.mxu0 0
      %699 = vmatpush1.bf16.msra.mxu0 0
      %700 = vmatprep.subr.bf16.mxu0 0
      %701 = vmatpush1.bf16.msra.mxu0 0
      %702 = vmatprep.subr.bf16.mxu0 0
      %703 = vmatpush1.bf16.msra.mxu0 0
      %704 = vmatprep.subr.bf16.mxu0 0
      %705 = vmatpush1.bf16.msra.mxu0 0
      %706 = vmatprep.subr.bf16.mxu0 0
      %707 = vmatpush1.bf16.msra.mxu0 0
      %708 = vmatprep.subr.bf16.mxu0 0
      %709 = vmatpush1.bf16.msra.mxu0 0
      %710 = vmatprep.subr.bf16.mxu0 0
      %711 = vmatpush1.bf16.msra.mxu0 0
      %712 = vmatprep.subr.bf16.mxu0 0
      %713 = vmatpush1.bf16.msra.mxu0 0
      %714 = vmatprep.subr.bf16.mxu0 0
      %715 = vmatpush1.bf16.msra.mxu0 0
      %716 = vmatprep.subr.bf16.mxu0 0
      %717 = vmatpush1.bf16.msra.mxu0 0
      %718 = vmatprep.mubr.bf16.mxu0 0
      %719 = vmatmul.mubr.bf16.gmra.mrb[0].mxu0 %v681
      %v720 = vpop.f32.mrb[0].mxu0
      %v721 = vadd.f32 0.0, %v720
      %v722 = vpop.f32.mrb[0].mxu0
      %v723 = vpop.f32.mrb[0].mxu0
      %v724 = vpop.f32.mrb[0].mxu0
      %725 = vdwg.mxu0
      %v726 = vpack.c.bf16 %v721, %v721
      %v727 = vpack.c.bf16 %v497, %v497
      %v729 = vsel %vm504, %v726, 0
      %v732 = vsel %vm569, %v727, 0
      %734 = vmatprep.subr.bf16.mxu0 0
      %735 = vmatpush1.bf16.msra.mxu0 %v732
      %736 = vmatprep.subr.bf16.mxu0 0
      %737 = vmatpush1.bf16.msra.mxu0 0
      %738 = vmatprep.subr.bf16.mxu0 0
      %739 = vmatpush1.bf16.msra.mxu0 0
      %740 = vmatprep.subr.bf16.mxu0 0
      %741 = vmatpush1.bf16.msra.mxu0 0
      %742 = vmatprep.subr.bf16.mxu0 0
      %743 = vmatpush1.bf16.msra.mxu0 0
      %744 = vmatprep.subr.bf16.mxu0 0
      %745 = vmatpush1.bf16.msra.mxu0 0
      %746 = vmatprep.subr.bf16.mxu0 0
      %747 = vmatpush1.bf16.msra.mxu0 0
      %748 = vmatprep.subr.bf16.mxu0 0
      %749 = vmatpush1.bf16.msra.mxu0 0
      %750 = vmatprep.subr.bf16.mxu0 0
      %751 = vmatpush1.bf16.msra.mxu0 0
      %752 = vmatprep.subr.bf16.mxu0 0
      %753 = vmatpush1.bf16.msra.mxu0 0
      %754 = vmatprep.subr.bf16.mxu0 0
      %755 = vmatpush1.bf16.msra.mxu0 0
      %756 = vmatprep.subr.bf16.mxu0 0
      %757 = vmatpush1.bf16.msra.mxu0 0
      %758 = vmatprep.subr.bf16.mxu0 0
      %759 = vmatpush1.bf16.msra.mxu0 0
      %760 = vmatprep.subr.bf16.mxu0 0
      %761 = vmatpush1.bf16.msra.mxu0 0
      %762 = vmatprep.subr.bf16.mxu0 0
      %763 = vmatpush1.bf16.msra.mxu0 0
      %764 = vmatprep.subr.bf16.mxu0 0
      %765 = vmatpush1.bf16.msra.mxu0 0
      %766 = vmatprep.mubr.bf16.mxu0 0
      %767 = vmatmul.mubr.bf16.gmra.mrb[0].mxu0 %v729
      %v768 = vpop.f32.mrb[0].mxu0
      %v769 = vadd.f32 0.0, %v768
      %v770 = vpop.f32.mrb[0].mxu0
      %v771 = vpop.f32.mrb[0].mxu0
      %v772 = vpop.f32.mrb[0].mxu0
      %773 = vdwg.mxu0
      %v775 = vsel %vm504, %v613, 0
      %v778 = vsel %vm569, %v614, 0
      %780 = vmatprep.subr.bf16.mxu0 0
      %781 = vmatpush1.bf16.msra.mxu0 %v778
      %782 = vmatprep.subr.bf16.mxu0 0
      %783 = vmatpush1.bf16.msra.mxu0 0
      %784 = vmatprep.subr.bf16.mxu0 0
      %785 = vmatpush1.bf16.msra.mxu0 0
      %786 = vmatprep.subr.bf16.mxu0 0
      %787 = vmatpush1.bf16.msra.mxu0 0
      %788 = vmatprep.subr.bf16.mxu0 0
      %789 = vmatpush1.bf16.msra.mxu0 0
      %790 = vmatprep.subr.bf16.mxu0 0
      %791 = vmatpush1.bf16.msra.mxu0 0
      %792 = vmatprep.subr.bf16.mxu0 0
      %793 = vmatpush1.bf16.msra.mxu0 0
      %794 = vmatprep.subr.bf16.mxu0 0
      %795 = vmatpush1.bf16.msra.mxu0 0
      %796 = vmatprep.subr.bf16.mxu0 0
      %797 = vmatpush1.bf16.msra.mxu0 0
      %798 = vmatprep.subr.bf16.mxu0 0
      %799 = vmatpush1.bf16.msra.mxu0 0
      %800 = vmatprep.subr.bf16.mxu0 0
      %801 = vmatpush1.bf16.msra.mxu0 0
      %802 = vmatprep.subr.bf16.mxu0 0
      %803 = vmatpush1.bf16.msra.mxu0 0
      %804 = vmatprep.subr.bf16.mxu0 0
      %805 = vmatpush1.bf16.msra.mxu0 0
      %806 = vmatprep.subr.bf16.mxu0 0
      %807 = vmatpush1.bf16.msra.mxu0 0
      %808 = vmatprep.subr.bf16.mxu0 0
      %809 = vmatpush1.bf16.msra.mxu0 0
      %810 = vmatprep.subr.bf16.mxu0 0
      %811 = vmatpush1.bf16.msra.mxu0 0
      %812 = vmatprep.mubr.bf16.mxu0 0
      %813 = vmatmul.mubr.bf16.gmra.mrb[0].mxu0 %v775
      %v814 = vpop.f32.mrb[0].mxu0
      %v815 = vadd.f32 %v769, %v814
      %v816 = vpop.f32.mrb[0].mxu0
      %v817 = vpop.f32.mrb[0].mxu0
      %v818 = vpop.f32.mrb[0].mxu0
      %819 = vdwg.mxu0
      %820 = vrot.lane.b32.xlu0 %v500, 112
      %v821 = vpop.permute.xlu0 %820
      %822 = vrot.lane.b32.xlu0 %v500, 80
      %v823 = vpop.permute.xlu0 %822
      %v825 = vsel %vm504, %v821, 0
      %v828 = vsel %vm504, %v823, 0
      %830 = vmatprep.subr.bf16.mxu0 0
      %831 = vmatpush1.bf16.xpose.msra.mxu0 %v828
      %832 = vmatprep.subr.bf16.mxu0 0
      %833 = vmatpush1.bf16.xpose.msra.mxu0 0
      %834 = vmatprep.subr.bf16.mxu0 0
      %835 = vmatpush1.bf16.xpose.msra.mxu0 0
      %836 = vmatprep.subr.bf16.mxu0 0
      %837 = vmatpush1.bf16.xpose.msra.mxu0 0
      %838 = vmatprep.subr.bf16.mxu0 0
      %839 = vmatpush1.bf16.xpose.msra.mxu0 0
      %840 = vmatprep.subr.bf16.mxu0 0
      %841 = vmatpush1.bf16.xpose.msra.mxu0 0
      %842 = vmatprep.subr.bf16.mxu0 0
      %843 = vmatpush1.bf16.xpose.msra.mxu0 0
      %844 = vmatprep.subr.bf16.mxu0 0
      %845 = vmatpush1.bf16.xpose.msra.mxu0 0
      %846 = vmatprep.subr.bf16.mxu0 0
      %847 = vmatpush1.bf16.xpose.msra.mxu0 0
      %848 = vmatprep.subr.bf16.mxu0 0
      %849 = vmatpush1.bf16.xpose.msra.mxu0 0
      %850 = vmatprep.subr.bf16.mxu0 0
      %851 = vmatpush1.bf16.xpose.msra.mxu0 0
      %852 = vmatprep.subr.bf16.mxu0 0
      %853 = vmatpush1.bf16.xpose.msra.mxu0 0
      %854 = vmatprep.subr.bf16.mxu0 0
      %855 = vmatpush1.bf16.xpose.msra.mxu0 0
      %856 = vmatprep.subr.bf16.mxu0 0
      %857 = vmatpush1.bf16.xpose.msra.mxu0 0
      %858 = vmatprep.subr.bf16.mxu0 0
      %859 = vmatpush1.bf16.xpose.msra.mxu0 0
      %860 = vmatprep.subr.bf16.mxu0 0
      %861 = vmatpush1.bf16.xpose.msra.mxu0 0
      %862 = vmatprep.mubr.bf16.mxu0 0
      %863 = vmatmul.mubr.bf16.gmra.mrb[0].mxu0 %v825
      %v864 = vpop.f32.mrb[0].mxu0
      %v865 = vadd.f32 0.0, %v864
      %v866 = vpop.f32.mrb[0].mxu0
      %v867 = vpop.f32.mrb[0].mxu0
      %v868 = vpop.f32.mrb[0].mxu0
      %869 = vdwg.mxu0
      %v870 = vmul.f32 %v865, 0.35355338
      %v871 = vsel %vm504, %v870, -inf
      %872 = vmax.xlane.f32.xlu0 %v871
      %v873 = vpop.xlane.xlu0 %872
      %v874 = vsub.f32 %v870, %v873
      %v875 = vmul.f32 %v874, 1.442695
      %v876 = vpow.pop %v875
      %v877 = vsel %vm504, %v876, 0.0
      %878 = vadd.xlane.f32.xlu0 %v877
      %v879 = vpop.xlane.xlu0 %878
      %v880 = vrcp.pop %v879
      %v881 = vmul.f32 %v876, %v880
      %v882 = vpack.c.bf16 %v881, %v881
      %883 = vrot.lane.b32.xlu0 %v500, 48
      %v884 = vpop.permute.xlu0 %883
      %v886 = vsel %vm504, %v882, 0
      %v889 = vsel %vm569, %v884, 0
      %891 = vmatprep.subr.bf16.mxu0 0
      %892 = vmatpush1.bf16.msra.mxu0 %v889
      %893 = vmatprep.subr.bf16.mxu0 0
      %894 = vmatpush1.bf16.msra.mxu0 0
      %895 = vmatprep.subr.bf16.mxu0 0
      %896 = vmatpush1.bf16.msra.mxu0 0
      %897 = vmatprep.subr.bf16.mxu0 0
      %898 = vmatpush1.bf16.msra.mxu0 0
      %899 = vmatprep.subr.bf16.mxu0 0
      %900 = vmatpush1.bf16.msra.mxu0 0
      %901 = vmatprep.subr.bf16.mxu0 0
      %902 = vmatpush1.bf16.msra.mxu0 0
      %903 = vmatprep.subr.bf16.mxu0 0
      %904 = vmatpush1.bf16.msra.mxu0 0
      %905 = vmatprep.subr.bf16.mxu0 0
      %906 = vmatpush1.bf16.msra.mxu0 0
      %907 = vmatprep.subr.bf16.mxu0 0
      %908 = vmatpush1.bf16.msra.mxu0 0
      %909 = vmatprep.subr.bf16.mxu0 0
      %910 = vmatpush1.bf16.msra.mxu0 0
      %911 = vmatprep.subr.bf16.mxu0 0
      %912 = vmatpush1.bf16.msra.mxu0 0
      %913 = vmatprep.subr.bf16.mxu0 0
      %914 = vmatpush1.bf16.msra.mxu0 0
      %915 = vmatprep.subr.bf16.mxu0 0
      %916 = vmatpush1.bf16.msra.mxu0 0
      %917 = vmatprep.subr.bf16.mxu0 0
      %918 = vmatpush1.bf16.msra.mxu0 0
      %919 = vmatprep.subr.bf16.mxu0 0
      %920 = vmatpush1.bf16.msra.mxu0 0
      %921 = vmatprep.subr.bf16.mxu0 0
      %922 = vmatpush1.bf16.msra.mxu0 0
      %923 = vmatprep.mubr.bf16.mxu0 0
      %924 = vmatmul.mubr.bf16.gmra.mrb[0].mxu0 %v886
      %v925 = vpop.f32.mrb[0].mxu0
      %v926 = vadd.f32 0.0, %v925
      %v927 = vpop.f32.mrb[0].mxu0
      %v928 = vpop.f32.mrb[0].mxu0
      %v929 = vpop.f32.mrb[0].mxu0
      %930 = vdwg.mxu0
      %v931 = vpack.c.bf16 %v926, %v926
      %v932 = vpack.c.bf16 %v498, %v498
      %v934 = vsel %vm504, %v931, 0
      %v937 = vsel %vm569, %v932, 0
      %939 = vmatprep.subr.bf16.mxu0 0
      %940 = vmatpush1.bf16.msra.mxu0 %v937
      %941 = vmatprep.subr.bf16.mxu0 0
      %942 = vmatpush1.bf16.msra.mxu0 0
      %943 = vmatprep.subr.bf16.mxu0 0
      %944 = vmatpush1.bf16.msra.mxu0 0
      %945 = vmatprep.subr.bf16.mxu0 0
      %946 = vmatpush1.bf16.msra.mxu0 0
      %947 = vmatprep.subr.bf16.mxu0 0
      %948 = vmatpush1.bf16.msra.mxu0 0
      %949 = vmatprep.subr.bf16.mxu0 0
      %950 = vmatpush1.bf16.msra.mxu0 0
      %951 = vmatprep.subr.bf16.mxu0 0
      %952 = vmatpush1.bf16.msra.mxu0 0
      %953 = vmatprep.subr.bf16.mxu0 0
      %954 = vmatpush1.bf16.msra.mxu0 0
      %955 = vmatprep.subr.bf16.mxu0 0
      %956 = vmatpush1.bf16.msra.mxu0 0
      %957 = vmatprep.subr.bf16.mxu0 0
      %958 = vmatpush1.bf16.msra.mxu0 0
      %959 = vmatprep.subr.bf16.mxu0 0
      %960 = vmatpush1.bf16.msra.mxu0 0
      %961 = vmatprep.subr.bf16.mxu0 0
      %962 = vmatpush1.bf16.msra.mxu0 0
      %963 = vmatprep.subr.bf16.mxu0 0
      %964 = vmatpush1.bf16.msra.mxu0 0
      %965 = vmatprep.subr.bf16.mxu0 0
      %966 = vmatpush1.bf16.msra.mxu0 0
      %967 = vmatprep.subr.bf16.mxu0 0
      %968 = vmatpush1.bf16.msra.mxu0 0
      %969 = vmatprep.subr.bf16.mxu0 0
      %970 = vmatpush1.bf16.msra.mxu0 0
      %971 = vmatprep.mubr.bf16.mxu0 0
      %972 = vmatmul.mubr.bf16.gmra.mrb[0].mxu0 %v934
      %v973 = vpop.f32.mrb[0].mxu0
      %v974 = vadd.f32 0.0, %v973
      %v975 = vpop.f32.mrb[0].mxu0
      %v976 = vpop.f32.mrb[0].mxu0
      %v977 = vpop.f32.mrb[0].mxu0
      %978 = vdwg.mxu0
      %v979 = vadd.f32 %v815, %v974
      %980 = vrot.lane.b32.xlu0 %v500, 104
      %v981 = vpop.permute.xlu0 %980
      %982 = vrot.lane.b32.xlu0 %v500, 72
      %v983 = vpop.permute.xlu0 %982
      %v985 = vsel %vm504, %v981, 0
      %v988 = vsel %vm504, %v983, 0
      %990 = vmatprep.subr.bf16.mxu0 0
      %991 = vmatpush1.bf16.xpose.msra.mxu0 %v988
      %992 = vmatprep.subr.bf16.mxu0 0
      %993 = vmatpush1.bf16.xpose.msra.mxu0 0
      %994 = vmatprep.subr.bf16.mxu0 0
      %995 = vmatpush1.bf16.xpose.msra.mxu0 0
      %996 = vmatprep.subr.bf16.mxu0 0
      %997 = vmatpush1.bf16.xpose.msra.mxu0 0
      %998 = vmatprep.subr.bf16.mxu0 0
      %999 = vmatpush1.bf16.xpose.msra.mxu0 0
      %1000 = vmatprep.subr.bf16.mxu0 0
      %1001 = vmatpush1.bf16.xpose.msra.mxu0 0
      %1002 = vmatprep.subr.bf16.mxu0 0
      %1003 = vmatpush1.bf16.xpose.msra.mxu0 0
      %1004 = vmatprep.subr.bf16.mxu0 0
      %1005 = vmatpush1.bf16.xpose.msra.mxu0 0
      %1006 = vmatprep.subr.bf16.mxu0 0
      %1007 = vmatpush1.bf16.xpose.msra.mxu0 0
      %1008 = vmatprep.subr.bf16.mxu0 0
      %1009 = vmatpush1.bf16.xpose.msra.mxu0 0
      %1010 = vmatprep.subr.bf16.mxu0 0
      %1011 = vmatpush1.bf16.xpose.msra.mxu0 0
      %1012 = vmatprep.subr.bf16.mxu0 0
      %1013 = vmatpush1.bf16.xpose.msra.mxu0 0
      %1014 = vmatprep.subr.bf16.mxu0 0
      %1015 = vmatpush1.bf16.xpose.msra.mxu0 0
      %1016 = vmatprep.subr.bf16.mxu0 0
      %1017 = vmatpush1.bf16.xpose.msra.mxu0 0
      %1018 = vmatprep.subr.bf16.mxu0 0
      %1019 = vmatpush1.bf16.xpose.msra.mxu0 0
      %1020 = vmatprep.subr.bf16.mxu0 0
      %1021 = vmatpush1.bf16.xpose.msra.mxu0 0
      %1022 = vmatprep.mubr.bf16.mxu0 0
      %1023 = vmatmul.mubr.bf16.gmra.mrb[0].mxu0 %v985
      %v1024 = vpop.f32.mrb[0].mxu0
      %v1025 = vadd.f32 0.0, %v1024
      %v1026 = vpop.f32.mrb[0].mxu0
      %v1027 = vpop.f32.mrb[0].mxu0
      %v1028 = vpop.f32.mrb[0].mxu0
      %1029 = vdwg.mxu0
      %v1030 = vmul.f32 %v1025, 0.35355338
      %v1031 = vsel %vm504, %v1030, -inf
      %1032 = vmax.xlane.f32.xlu0 %v1031
      %v1033 = vpop.xlane.xlu0 %1032
      %v1034 = vsub.f32 %v1030, %v1033
      %v1035 = vmul.f32 %v1034, 1.442695
      %v1036 = vpow.pop %v1035
      %v1037 = vsel %vm504, %v1036, 0.0
      %1038 = vadd.xlane.f32.xlu0 %v1037
      %v1039 = vpop.xlane.xlu0 %1038
      %v1040 = vrcp.pop %v1039
      %v1041 = vmul.f32 %v1036, %v1040
      %v1042 = vpack.c.bf16 %v1041, %v1041
      %1043 = vrot.lane.b32.xlu0 %v500, 40
      %v1044 = vpop.permute.xlu0 %1043
      %v1046 = vsel %vm504, %v1042, 0
      %v1049 = vsel %vm569, %v1044, 0
      %1051 = vmatprep.subr.bf16.mxu0 0
      %1052 = vmatpush1.bf16.msra.mxu0 %v1049
      %1053 = vmatprep.subr.bf16.mxu0 0
      %1054 = vmatpush1.bf16.msra.mxu0 0
      %1055 = vmatprep.subr.bf16.mxu0 0
      %1056 = vmatpush1.bf16.msra.mxu0 0
      %1057 = vmatprep.subr.bf16.mxu0 0
      %1058 = vmatpush1.bf16.msra.mxu0 0
      %1059 = vmatprep.subr.bf16.mxu0 0
      %1060 = vmatpush1.bf16.msra.mxu0 0
      %1061 = vmatprep.subr.bf16.mxu0 0
      %1062 = vmatpush1.bf16.msra.mxu0 0
      %1063 = vmatprep.subr.bf16.mxu0 0
      %1064 = vmatpush1.bf16.msra.mxu0 0
      %1065 = vmatprep.subr.bf16.mxu0 0
      %1066 = vmatpush1.bf16.msra.mxu0 0
      %1067 = vmatprep.subr.bf16.mxu0 0
      %1068 = vmatpush1.bf16.msra.mxu0 0
      %1069 = vmatprep.subr.bf16.mxu0 0
      %1070 = vmatpush1.bf16.msra.mxu0 0
      %1071 = vmatprep.subr.bf16.mxu0 0
      %1072 = vmatpush1.bf16.msra.mxu0 0
      %1073 = vmatprep.subr.bf16.mxu0 0
      %1074 = vmatpush1.bf16.msra.mxu0 0
      %1075 = vmatprep.subr.bf16.mxu0 0
      %1076 = vmatpush1.bf16.msra.mxu0 0
      %1077 = vmatprep.subr.bf16.mxu0 0
      %1078 = vmatpush1.bf16.msra.mxu0 0
      %1079 = vmatprep.subr.bf16.mxu0 0
      %1080 = vmatpush1.bf16.msra.mxu0 0
      %1081 = vmatprep.subr.bf16.mxu0 0
      %1082 = vmatpush1.bf16.msra.mxu0 0
      %1083 = vmatprep.mubr.bf16.mxu0 0
      %1084 = vmatmul.mubr.bf16.gmra.mrb[0].mxu0 %v1046
      %v1085 = vpop.f32.mrb[0].mxu0
      %v1086 = vadd.f32 0.0, %v1085
      %v1087 = vpop.f32.mrb[0].mxu0
      %v1088 = vpop.f32.mrb[0].mxu0
      %v1089 = vpop.f32.mrb[0].mxu0
      %1090 = vdwg.mxu0
      %v1091 = vpack.c.bf16 %v1086, %v1086
      %v1092 = vpack.c.bf16 %v499, %v499
      %v1094 = vsel %vm504, %v1091, 0
      %v1097 = vsel %vm569, %v1092, 0
      %1099 = vmatprep.subr.bf16.mxu0 0
      %1100 = vmatpush1.bf16.msra.mxu0 %v1097
      %1101 = vmatprep.subr.bf16.mxu0 0
      %1102 = vmatpush1.bf16.msra.mxu0 0
      %1103 = vmatprep.subr.bf16.mxu0 0
      %1104 = vmatpush1.bf16.msra.mxu0 0
      %1105 = vmatprep.subr.bf16.mxu0 0
      %1106 = vmatpush1.bf16.msra.mxu0 0
      %1107 = vmatprep.subr.bf16.mxu0 0
      %1108 = vmatpush1.bf16.msra.mxu0 0
      %1109 = vmatprep.subr.bf16.mxu0 0
      %1110 = vmatpush1.bf16.msra.mxu0 0
      %1111 = vmatprep.subr.bf16.mxu0 0
      %1112 = vmatpush1.bf16.msra.mxu0 0
      %1113 = vmatprep.subr.bf16.mxu0 0
      %1114 = vmatpush1.bf16.msra.mxu0 0
      %1115 = vmatprep.subr.bf16.mxu0 0
      %1116 = vmatpush1.bf16.msra.mxu0 0
      %1117 = vmatprep.subr.bf16.mxu0 0
      %1118 = vmatpush1.bf16.msra.mxu0 0
      %1119 = vmatprep.subr.bf16.mxu0 0
      %1120 = vmatpush1.bf16.msra.mxu0 0
      %1121 = vmatprep.subr.bf16.mxu0 0
      %1122 = vmatpush1.bf16.msra.mxu0 0
      %1123 = vmatprep.subr.bf16.mxu0 0
      %1124 = vmatpush1.bf16.msra.mxu0 0
      %1125 = vmatprep.subr.bf16.mxu0 0
      %1126 = vmatpush1.bf16.msra.mxu0 0
      %1127 = vmatprep.subr.bf16.mxu0 0
      %1128 = vmatpush1.bf16.msra.mxu0 0
      %1129 = vmatprep.subr.bf16.mxu0 0
      %1130 = vmatpush1.bf16.msra.mxu0 0
      %1131 = vmatprep.mubr.bf16.mxu0 0
      %1132 = vmatmul.mubr.bf16.gmra.mrb[0].mxu0 %v1094
      %v1133 = vpop.f32.mrb[0].mxu0
      %v1134 = vadd.f32 0.0, %v1133
      %v1135 = vpop.f32.mrb[0].mxu0
      %v1136 = vpop.f32.mrb[0].mxu0
      %v1137 = vpop.f32.mrb[0].mxu0
      %1138 = vdwg.mxu0
      %v1139 = vadd.f32 %v979, %v1134
      %v1140 = vld [vmem:[%s4] sm:$0x1]
      %v1142 = vlaneseq
      %v1143 = vshrl.u32 %v1142, 7
      %v1144 = vsub.s32 0, %v1143
      %v1145 = vrot.slane %v1140, %v1144
      %v1147 = vadd.f32 %v1139, %v1145
      %v1148 = vadd.f32 %v437, %v1147
      %v1149 = vld [vmem:[%s5] sm:$0x1]
      %v1150 = vld [vmem:[%s6] sm:$0x1]
      %v1151 = vsel %vm452, %v1148, 0.0
      %1152 = vadd.xlane.f32.xlu0 %v1151
      %v1153 = vpop.xlane.xlu0 %1152
      %v1154 = vrcp.pop 32.0
      %v1155 = vmul.f32 %v1153, %v1154
      %v1156 = vsub.f32 %v1148, %v1155
      %v1157 = vmul.f32 %v1156, %v1156
      %v1158 = vsel %vm452, %v1157, 0.0
      %1159 = vadd.xlane.f32.xlu0 %v1158
      %v1160 = vpop.xlane.xlu0 %1159
      %v1161 = vmul.f32 %v1160, %v1154
      %v1162 = vadd.f32 %v1161, 1e-05
      %v1163 = vrsqrt.pop %v1162
      %v1164 = vmul.f32 %v1156, %v1163
      %v1166 = vlaneseq
      %v1167 = vshrl.u32 %v1166, 7
      %v1168 = vsub.s32 0, %v1167
      %v1169 = vrot.slane %v1149, %v1168
      %v1171 = vmul.f32 %v1164, %v1169
      %v1173 = vlaneseq
      %v1174 = vshrl.u32 %v1173, 7
      %v1175 = vsub.s32 0, %v1174
      %v1176 = vrot.slane %v1150, %v1175
      %v1178 = vadd.f32 %v1171, %v1176
      %v1179 = vld [vmem:[%s7] sm:$0xff]
      %v1180 = vld [vmem:[%s7 + $0x8] sm:$0xff]
      %v1181 = vld [vmem:[%s7 + $0x10] sm:$0xff]
      %v1182 = vld [vmem:[%s7 + $0x18] sm:$0xff]
      %v1183 = vpack.c.bf16 %v1178, %v1178
      %v1184 = vpack.c.bf16 %v1180, %v1179
      %v1185 = vpack.c.bf16 %v1182, %v1181
      %v1186 = vld [vmem:[%s8] sm:$0x1]
      %v1188 = vlaneseq
      %v1189 = vshrl.u32 %v1188, 7
      %v1190 = vsub.s32 0, %v1189
      %v1191 = vrot.slane %v1186, %v1190
      %v1194 = vsel %vm452, %v1183, 0
      %1196 = vmatprep.subr.bf16.mxu0 0
      %1197 = vmatpush1.bf16.msra.mxu0 %v1184
      %1198 = vmatprep.subr.bf16.mxu0 0
      %1199 = vmatpush1.bf16.msra.mxu0 %v1185
      %1200 = vmatprep.subr.bf16.mxu0 0
      %1201 = vmatpush1.bf16.msra.mxu0 0
      %1202 = vmatprep.subr.bf16.mxu0 0
      %1203 = vmatpush1.bf16.msra.mxu0 0
      %1204 = vmatprep.subr.bf16.mxu0 0
      %1205 = vmatpush1.bf16.msra.mxu0 0
      %1206 = vmatprep.subr.bf16.mxu0 0
      %1207 = vmatpush1.bf16.msra.mxu0 0
      %1208 = vmatprep.subr.bf16.mxu0 0
      %1209 = vmatpush1.bf16.msra.mxu0 0
      %1210 = vmatprep.subr.bf16.mxu0 0
      %1211 = vmatpush1.bf16.msra.mxu0 0
      %1212 = vmatprep.subr.bf16.mxu0 0
      %1213 = vmatpush1.bf16.msra.mxu0 0
      %1214 = vmatprep.subr.bf16.mxu0 0
      %1215 = vmatpush1.bf16.msra.mxu0 0
      %1216 = vmatprep.subr.bf16.mxu0 0
      %1217 = vmatpush1.bf16.msra.mxu0 0
      %1218 = vmatprep.subr.bf16.mxu0 0
      %1219 = vmatpush1.bf16.msra.mxu0 0
      %1220 = vmatprep.subr.bf16.mxu0 0
      %1221 = vmatpush1.bf16.msra.mxu0 0
      %1222 = vmatprep.subr.bf16.mxu0 0
      %1223 = vmatpush1.bf16.msra.mxu0 0
      %1224 = vmatprep.subr.bf16.mxu0 0
      %1225 = vmatpush1.bf16.msra.mxu0 0
      %1226 = vmatprep.subr.bf16.mxu0 0
      %1227 = vmatpush1.bf16.msra.mxu0 0
      %1228 = vmatprep.mubr.bf16.mxu0 0
      %1229 = vmatmul.mubr.bf16.gmra.mrb[0].mxu0 %v1194
      %v1230 = vpop.f32.mrb[0].mxu0
      %v1231 = vadd.f32 %v1191, %v1230
      %v1232 = vpop.f32.mrb[0].mxu0
      %v1233 = vpop.f32.mrb[0].mxu0
      %v1234 = vpop.f32.mrb[0].mxu0
      %1235 = vdwg.mxu0
      %v1236 = vmax.f32 %v1231, 0.0
      %v1237 = vld [vmem:[%s9] sm:$0xff]
      %v1238 = vld [vmem:[%s9 + $0x8] sm:$0xff]
      %v1239 = vld [vmem:[%s9 + $0x10] sm:$0xff]
      %v1240 = vld [vmem:[%s9 + $0x18] sm:$0xff]
      %v1241 = vld [vmem:[%s9 + $0x20] sm:$0xff]
      %v1242 = vld [vmem:[%s9 + $0x28] sm:$0xff]
      %v1243 = vld [vmem:[%s9 + $0x30] sm:$0xff]
      %v1244 = vld [vmem:[%s9 + $0x38] sm:$0xff]
      %v1245 = vpack.c.bf16 %v1236, %v1236
      %v1246 = vpack.c.bf16 %v1238, %v1237
      %v1247 = vpack.c.bf16 %v1240, %v1239
      %v1248 = vpack.c.bf16 %v1242, %v1241
      %v1249 = vpack.c.bf16 %v1244, %v1243
      %v1250 = vld [vmem:[%s10] sm:$0x1]
      %v1252 = vlaneseq
      %v1253 = vshrl.u32 %v1252, 7
      %v1254 = vsub.s32 0, %v1253
      %v1255 = vrot.slane %v1250, %v1254
      %vm1257 = vcmask 523264
      %v1259 = vsel %vm1257, %v1245, 0
      %1261 = vmatprep.subr.bf16.mxu0 0
      %1262 = vmatpush1.bf16.msra.mxu0 %v1246
      %1263 = vmatprep.subr.bf16.mxu0 0
      %1264 = vmatpush1.bf16.msra.mxu0 %v1247
      %1265 = vmatprep.subr.bf16.mxu0 0
      %1266 = vmatpush1.bf16.msra.mxu0 %v1248
      %1267 = vmatprep.subr.bf16.mxu0 0
      %1268 = vmatpush1.bf16.msra.mxu0 %v1249
      %1269 = vmatprep.subr.bf16.mxu0 0
      %1270 = vmatpush1.bf16.msra.mxu0 0
      %1271 = vmatprep.subr.bf16.mxu0 0
      %1272 = vmatpush1.bf16.msra.mxu0 0
      %1273 = vmatprep.subr.bf16.mxu0 0
      %1274 = vmatpush1.bf16.msra.mxu0 0
      %1275 = vmatprep.subr.bf16.mxu0 0
      %1276 = vmatpush1.bf16.msra.mxu0 0
      %1277 = vmatprep.subr.bf16.mxu0 0
      %1278 = vmatpush1.bf16.msra.mxu0 0
      %1279 = vmatprep.subr.bf16.mxu0 0
      %1280 = vmatpush1.bf16.msra.mxu0 0
      %1281 = vmatprep.subr.bf16.mxu0 0
      %1282 = vmatpush1.bf16.msra.mxu0 0
      %1283 = vmatprep.subr.bf16.mxu0 0
      %1284 = vmatpush1.bf16.msra.mxu0 0
      %1285 = vmatprep.subr.bf16.mxu0 0
      %1286 = vmatpush1.bf16.msra.mxu0 0
      %1287 = vmatprep.subr.bf16.mxu0 0
      %1288 = vmatpush1.bf16.msra.mxu0 0
      %1289 = vmatprep.subr.bf16.mxu0 0
      %1290 = vmatpush1.bf16.msra.mxu0 0
      %1291 = vmatprep.subr.bf16.mxu0 0
      %1292 = vmatpush1.bf16.msra.mxu0 0
      %1293 = vmatprep.mubr.bf16.mxu0 0
      %1294 = vmatmul.mubr.bf16.gmra.mrb[0].mxu0 %v1259
      %v1295 = vpop.f32.mrb[0].mxu0
      %v1296 = vadd.f32 %v1255, %v1295
      %v1297 = vpop.f32.mrb[0].mxu0
      %v1298 = vpop.f32.mrb[0].mxu0
      %v1299 = vpop.f32.mrb[0].mxu0
      %1300 = vdwg.mxu0
      %v1301 = vadd.f32 %v1178, %v1296
      %v1302 = vld [vmem:[%s11] sm:$0x1]
      %v1303 = vld [vmem:[%s12] sm:$0x1]
      %v1304 = vsel %vm452, %v1301, 0.0
      %1305 = vadd.xlane.f32.xlu0 %v1304
      %v1306 = vpop.xlane.xlu0 %1305
      %v1307 = vmul.f32 %v1306, %v1154
      %v1308 = vsub.f32 %v1301, %v1307
      %v1309 = vmul.f32 %v1308, %v1308
      %v1310 = vsel %vm452, %v1309, 0.0
      %1311 = vadd.xlane.f32.xlu0 %v1310
      %v1312 = vpop.xlane.xlu0 %1311
      %v1313 = vmul.f32 %v1312, %v1154
      %v1314 = vadd.f32 %v1313, 1e-05
      %v1315 = vrsqrt.pop %v1314
      %v1316 = vmul.f32 %v1308, %v1315
      %v1318 = vlaneseq
      %v1319 = vshrl.u32 %v1318, 7
      %v1320 = vsub.s32 0, %v1319
      %v1321 = vrot.slane %v1302, %v1320
      %v1323 = vmul.f32 %v1316, %v1321
      %v1325 = vlaneseq
      %v1326 = vshrl.u32 %v1325, 7
      %v1327 = vsub.s32 0, %v1326
      %v1328 = vrot.slane %v1303, %v1327
      %v1330 = vadd.f32 %v1323, %v1328
      %1331 = vst.msk [vmem:[%s435] sm:$0xff] %vm452, %v1330
      %p1332 = scmp.lt.s32.totalorder %s24, 1
      %s1333 = scalar_select %p1332, %s24, 1
      %s1334 = smul.addr %s1333, 8
      %s1335 = scalar_lea.vmem %s13, %s1334
      // Predicated region
      $region73: #{_lambda_.8} parent=71 // pred_check
        %p1336 = pneg %p320
      $region74: #{_lambda_.8} parent=71 // pred_check_branch
        %1338 = sbr.rel (%p1336) target = $region76
      $region75: #{_lambda_.8} parent=71 // pred_region
        _
      $region76: #{_lambda_.8} parent=71 // pred_fallthru
        _
    $region72: #{_lambda_.8} parent=5 // pred_fallthru
      _
    %p1339 = scmp.le.s32.totalorder 2, %s19
    // Predicated region
    $region77: #{_lambda_.8} parent=5 // pred_check
      %p1340 = pneg %p1339
    $region78: #{_lambda_.8} parent=5 // pred_check_branch
      %1342 = sbr.rel (%p1340) target = $region80
    $region79: #{_lambda_.8} parent=5 // pred_region
      %s1343 = ssub.s32 %s19, 2
      // Predicated region
      $region81: #{_lambda_.8} parent=79 // pred_check
        %p1344 = pneg %p326
      $region82: #{_lambda_.8} parent=79 // pred_check_branch
        %1346 = sbr.rel (%p1344) target = $region84
      $region83: #{_lambda_.8} parent=79 // pred_region
        %p1347 = scmp.lt.s32.totalorder %s25, 1
        %s1348 = scalar_select %p1347, %s25, 1
        %s1349 = smul.addr %s1348, 8
        %s1350 = scalar_lea.vmem %s13, %s1349
      $region84: #{_lambda_.8} parent=79 // pred_fallthru
        _
    $region80: #{_lambda_.8} parent=5 // pred_fallthru
      _
  $region6: #{_lambda_.8} parent=0 // loop_footer
    %s23 = sadd.s32 1, %s19
  $region7: #{_lambda_.8} parent=0 // loop_footer_branch
    %18 = sbr.rel target = $region3
  $region8: #{_lambda_.8} parent=0 // loop_exit
    _

// kernel: _lambda_.13
$region0: #{_lambda_.13}
  #allocation0 [shape = 'u32[]', space=smem, size = 0x4, offset = 0x4, fixed_abs, tag = 'smem constant byte address 0x4 - core index']
  #allocation1 [shape = 'u32[144,128]{1,0:T(1,128)}', space=vmem, size = 0x12000, scoped, tag = 'internal scratch']
  %s0 = inlined_call_operand.vmem [shape: f32[2,8,32], index: 0, kind: input, shape index: {}]
  %s1 = inlined_call_operand.vmem [shape: f32[32,4], index: 1, kind: input, shape index: {}]
  %s2 = inlined_call_operand.vmem [shape: f32[1,4], index: 2, kind: input, shape index: {}]
  %s3 = inlined_call_operand.vmem [shape: f32[2,8,4], index: 3, kind: output, shape index: {}]
  %s4 = sld [smem:[#allocation0]]
  $region45: #{_lambda_.13} parent=0
    _
  %s6 = ssub.s32 1, %s4
  %s7 = scalar_select 0, %s6, %s4
  loop: start=0, step=1, limit=4
  $region2: #{_lambda_.13} parent=0 // loop_pre_header
    _
  $region3: #{_lambda_.13} parent=0 // loop_header
    %s9 = sphi 0, %s13
    %p10 = scmp.ge.s32.totalorder %s9, 4
    %s19 = sphi 0, %s21
    %s22 = sphi 0, %s19
    %s23 = sphi 0, %s22
    %s39 = sphi 0, %s23
    %s43 = sphi 0, %s43
    %s45 = sphi 0, %s43
    %s46 = sphi 0, %s45
    %s60 = sphi 0, %s46
    %s64 = sphi 0, %s64
    %s66 = sphi 0, %s64
    %s67 = sphi 0, %s66
    %s81 = sphi 0, %s67
    %s87 = sphi 0, %s89
    %s90 = sphi 0, %s87
    %s91 = sphi 0, %s90
    %s107 = sphi 0, %s91
  $region4: #{_lambda_.13} parent=0 // loop_header_branch
    %12 = sbr.rel (%p10) target = $region8
  $region5: #{_lambda_.13} parent=0 // loop_body
    %s14 = ssub.s32 %s9, 1
    %s15 = ssub.s32 %s9, 2
    %s16 = sadd.s32 %s9, 1
    %s17 = ssub.s32 %s9, %s16
    %p18 = scmp.eq.s32.totalorder %s17, 0
    %s20 = sadd.s32 %s19, 1
    %s21 = scalar_select %p18, %s19, %s20
    %p24 = pneg %p18
    %p25 = scmp.eq.s32.totalorder %s9, 1
    %p26 = por %p24, %p25
    %p27 = scmp.ne.s32.totalorder %s19, %s22
    %p28 = scmp.eq.s32.totalorder %s9, 0
    %p29 = por %p27, %p28
    %p30 = scmp.ne.s32.totalorder %s19, %s22
    %p31 = scmp.eq.s32.totalorder %s14, 1
    %p32 = por %p30, %p31
    %p33 = scmp.ne.s32.totalorder %s22, %s23
    %p34 = scmp.eq.s32.totalorder %s14, 0
    %p35 = por %p33, %p34
    %p36 = scmp.ne.s32.totalorder %s22, %s23
    %p37 = scmp.eq.s32.totalorder %s15, 1
    %p38 = por %p36, %p37
    %p40 = scmp.ne.s32.totalorder %s23, %s39
    %p41 = scmp.eq.s32.totalorder %s15, 0
    %p42 = por %p40, %p41
    %s44 = sadd.s32 %s43, 1
    %p47 = scmp.eq.s32.totalorder %s9, 1
    %p48 = scmp.ne.s32.totalorder %s43, %s45
    %p49 = scmp.eq.s32.totalorder %s9, 0
    %p50 = por %p48, %p49
    %p51 = scmp.ne.s32.totalorder %s43, %s45
    %p52 = scmp.eq.s32.totalorder %s14, 1
    %p53 = por %p51, %p52
    %p54 = scmp.ne.s32.totalorder %s45, %s46
    %p55 = scmp.eq.s32.totalorder %s14, 0
    %p56 = por %p54, %p55
    %p57 = scmp.ne.s32.totalorder %s45, %s46
    %p58 = scmp.eq.s32.totalorder %s15, 1
    %p59 = por %p57, %p58
    %p61 = scmp.ne.s32.totalorder %s46, %s60
    %p62 = scmp.eq.s32.totalorder %s15, 0
    %p63 = por %p61, %p62
    %s65 = sadd.s32 %s64, 1
    %p68 = scmp.eq.s32.totalorder %s9, 1
    %p69 = scmp.ne.s32.totalorder %s64, %s66
    %p70 = scmp.eq.s32.totalorder %s9, 0
    %p71 = por %p69, %p70
    %p72 = scmp.ne.s32.totalorder %s64, %s66
    %p73 = scmp.eq.s32.totalorder %s14, 1
    %p74 = por %p72, %p73
    %p75 = scmp.ne.s32.totalorder %s66, %s67
    %p76 = scmp.eq.s32.totalorder %s14, 0
    %p77 = por %p75, %p76
    %p78 = scmp.ne.s32.totalorder %s66, %s67
    %p79 = scmp.eq.s32.totalorder %s15, 1
    %p80 = por %p78, %p79
    %p82 = scmp.ne.s32.totalorder %s67, %s81
    %p83 = scmp.eq.s32.totalorder %s15, 0
    %p84 = por %p82, %p83
    %s85 = ssub.s32 %s9, %s16
    %p86 = scmp.eq.s32.totalorder %s85, 0
    %s88 = sadd.s32 %s87, 1
    %s89 = scalar_select %p86, %s87, %s88
    %p92 = pneg %p86
    %p93 = scmp.eq.s32.totalorder %s9, 1
    %p94 = por %p92, %p93
    %p95 = scmp.ne.s32.totalorder %s87, %s90
    %p96 = scmp.eq.s32.totalorder %s9, 0
    %p97 = por %p95, %p96
    %p98 = scmp.ne.s32.totalorder %s87, %s90
    %p99 = scmp.eq.s32.totalorder %s14, 1
    %p100 = por %p98, %p99
    %p101 = scmp.ne.s32.totalorder %s90, %s91
    %p102 = scmp.eq.s32.totalorder %s14, 0
    %p103 = por %p101, %p102
    %p104 = scmp.ne.s32.totalorder %s90, %s91
    %p105 = scmp.eq.s32.totalorder %s15, 1
    %p106 = por %p104, %p105
    %p108 = scmp.ne.s32.totalorder %s91, %s107
    %p109 = scmp.eq.s32.totalorder %s15, 0
    %p110 = por %p108, %p109
    %p111 = scmp.le.s32.totalorder 1, %s9
    %p112 = scmp.lt.s32.totalorder %s9, 3
    %p113 = pnand %p111, %p112
    %p114 = pneg %p113
    // Predicated region
    $region9: #{_lambda_.13} parent=5 // pred_check
      _
    $region10: #{_lambda_.13} parent=5 // pred_check_branch
      %116 = sbr.rel (%p113) target = $region12
    $region11: #{_lambda_.13} parent=5 // pred_region
      %s117 = ssub.s32 %s9, 1
      // Predicated region
      $region13: #{_lambda_.13} parent=11 // pred_check
        %p118 = pneg %p56
      $region14: #{_lambda_.13} parent=11 // pred_check_branch
        %120 = sbr.rel (%p118) target = $region16
      $region15: #{_lambda_.13} parent=11 // pred_region
        _
      $region16: #{_lambda_.13} parent=11 // pred_fallthru
        _
      // Predicated region
      $region17: #{_lambda_.13} parent=11 // pred_check
        %p121 = pneg %p77
      $region18: #{_lambda_.13} parent=11 // pred_check_branch
        %123 = sbr.rel (%p121) target = $region20
      $region19: #{_lambda_.13} parent=11 // pred_region
        _
      $region20: #{_lambda_.13} parent=11 // pred_fallthru
        _
    $region12: #{_lambda_.13} parent=5 // pred_fallthru
      _
    %p124 = scmp.lt.s32.totalorder %s9, 2
    // Predicated region
    $region21: #{_lambda_.13} parent=5 // pred_check
      %p125 = pneg %p124
    $region22: #{_lambda_.13} parent=5 // pred_check_branch
      %127 = sbr.rel (%p125) target = $region24
    $region23: #{_lambda_.13} parent=5 // pred_region
      // Predicated region
      $region25: #{_lambda_.13} parent=23 // pred_check
        %p128 = pneg %p29
      $region26: #{_lambda_.13} parent=23 // pred_check_branch
        %130 = sbr.rel (%p128) target = $region28
      $region27: #{_lambda_.13} parent=23 // pred_region
        %p131 = scmp.lt.s32.totalorder %s9, 1
        %s132 = scalar_select %p131, %s9, 1
        %s133 = smul.addr %s132, 8
        %s134 = scalar_lea.vmem %s0, %s133
      $region28: #{_lambda_.13} parent=23 // pred_fallthru
        _
    $region24: #{_lambda_.13} parent=5 // pred_fallthru
      _
    %p135 = scmp.le.s32.totalorder 1, %s9
    %p136 = scmp.lt.s32.totalorder %s9, 3
    %p137 = pnand %p135, %p136
    %p138 = pneg %p137
    // Predicated region
    $region29: #{_lambda_.13} parent=5 // pred_check
      _
    $region30: #{_lambda_.13} parent=5 // pred_check_branch
      %140 = sbr.rel (%p137) target = $region32
    $region31: #{_lambda_.13} parent=5 // pred_region
      %s141 = ssub.s32 %s9, 1
      %p142 = scmp.lt.s32.totalorder %s14, 1
      %s143 = scalar_select %p142, %s14, 1
      %s144 = smul.addr %s143, 8
      %s145 = scalar_lea.vmem %s0, %s144
      %p146 = pneg %p35
      %p147 = pneg %p32
      %p148 = pneg %p56
      %p149 = pneg %p53
      %p150 = pneg %p77
      %p151 = pneg %p74
      %p152 = pneg %p103
      %p153 = pneg %p100
      %p154 = scmp.lt.s32.totalorder %s14, 1
      %s155 = scalar_select %p154, %s14, 1
      %s156 = smul.addr %s155, 8
      %s157 = scalar_lea.vmem %s3, %s156
      %p158 = scmp.lt.s32.totalorder %s14, 1
      %s159 = scalar_select %p158, %s14, 1
      %s160 = smul.addr %s159, 8
      %s161 = scalar_lea.vmem %s0, %s160
      %p162 = scmp.lt.s32.totalorder %s14, 1
      %s163 = scalar_select %p162, %s14, 1
      %s164 = smul.addr %s163, 8
      %s165 = scalar_lea.vmem %s3, %s164
      %v167 = vld [vmem:[%s161] sm:$0xff]
      %v168 = vld [vmem:[%s1] sm:$0xff]
      %v169 = vld [vmem:[%s1 + $0x8] sm:$0xff]
      %v170 = vld [vmem:[%s1 + $0x10] sm:$0xff]
      %v171 = vld [vmem:[%s1 + $0x18] sm:$0xff]
      %v172 = vpack.c.bf16 %v167, %v167
      %v173 = vpack.c.bf16 %v169, %v168
      %v174 = vpack.c.bf16 %v171, %v170
      %v175 = vld [vmem:[%s2] sm:$0x1]
      %v177 = vlaneseq
      %v178 = vshrl.u32 %v177, 7
      %v179 = vsub.s32 0, %v178
      %v180 = vrot.slane %v175, %v179
      %vm182 = vcmask 261120
      %v184 = vsel %vm182, %v172, 0
      %186 = vmatprep.subr.bf16.mxu0 0
      %187 = vmatpush1.bf16.msra.mxu0 %v173
      %188 = vmatprep.subr.bf16.mxu0 0
      %189 = vmatpush1.bf16.msra.mxu0 %v174
      %190 = vmatprep.subr.bf16.mxu0 0
      %191 = vmatpush1.bf16.msra.mxu0 0
      %192 = vmatprep.subr.bf16.mxu0 0
      %193 = vmatpush1.bf16.msra.mxu0 0
      %194 = vmatprep.subr.bf16.mxu0 0
      %195 = vmatpush1.bf16.msra.mxu0 0
      %196 = vmatprep.subr.bf16.mxu0 0
      %197 = vmatpush1.bf16.msra.mxu0 0
      %198 = vmatprep.subr.bf16.mxu0 0
      %199 = vmatpush1.bf16.msra.mxu0 0
      %200 = vmatprep.subr.bf16.mxu0 0
      %201 = vmatpush1.bf16.msra.mxu0 0
      %202 = vmatprep.subr.bf16.mxu0 0
      %203 = vmatpush1.bf16.msra.mxu0 0
      %204 = vmatprep.subr.bf16.mxu0 0
      %205 = vmatpush1.bf16.msra.mxu0 0
      %206 = vmatprep.subr.bf16.mxu0 0
      %207 = vmatpush1.bf16.msra.mxu0 0
      %208 = vmatprep.subr.bf16.mxu0 0
      %209 = vmatpush1.bf16.msra.mxu0 0
      %210 = vmatprep.subr.bf16.mxu0 0
      %211 = vmatpush1.bf16.msra.mxu0 0
      %212 = vmatprep.subr.bf16.mxu0 0
      %213 = vmatpush1.bf16.msra.mxu0 0
      %214 = vmatprep.subr.bf16.mxu0 0
      %215 = vmatpush1.bf16.msra.mxu0 0
      %216 = vmatprep.subr.bf16.mxu0 0
      %217 = vmatpush1.bf16.msra.mxu0 0
      %218 = vmatprep.mubr.bf16.mxu0 0
      %219 = vmatmul.mubr.bf16.gmra.mrb[0].mxu0 %v184
      %v220 = vpop.f32.mrb[0].mxu0
      %v221 = vadd.f32 %v180, %v220
      %v222 = vpop.f32.mrb[0].mxu0
      %v223 = vpop.f32.mrb[0].mxu0
      %v224 = vpop.f32.mrb[0].mxu0
      %225 = vdwg.mxu0
      %vm226 = vcmask 31744
      %227 = vst.msk [vmem:[%s165] sm:$0xff] %vm226, %v221
      %p228 = scmp.lt.s32.totalorder %s14, 1
      %s229 = scalar_select %p228, %s14, 1
      %s230 = smul.addr %s229, 8
      %s231 = scalar_lea.vmem %s3, %s230
      // Predicated region
      $region33: #{_lambda_.13} parent=31 // pred_check
        %p232 = pneg %p100
      $region34: #{_lambda_.13} parent=31 // pred_check_branch
        %234 = sbr.rel (%p232) target = $region36
      $region35: #{_lambda_.13} parent=31 // pred_region
        _
      $region36: #{_lambda_.13} parent=31 // pred_fallthru
        _
    $region32: #{_lambda_.13} parent=5 // pred_fallthru
      _
    %p235 = scmp.le.s32.totalorder 2, %s9
    // Predicated region
    $region37: #{_lambda_.13} parent=5 // pred_check
      %p236 = pneg %p235
    $region38: #{_lambda_.13} parent=5 // pred_check_branch
      %238 = sbr.rel (%p236) target = $region40
    $region39: #{_lambda_.13} parent=5 // pred_region
      %s239 = ssub.s32 %s9, 2
      // Predicated region
      $region41: #{_lambda_.13} parent=39 // pred_check
        %p240 = pneg %p106
      $region42: #{_lambda_.13} parent=39 // pred_check_branch
        %242 = sbr.rel (%p240) target = $region44
      $region43: #{_lambda_.13} parent=39 // pred_region
        %p243 = scmp.lt.s32.totalorder %s15, 1
        %s244 = scalar_select %p243, %s15, 1
        %s245 = smul.addr %s244, 8
        %s246 = scalar_lea.vmem %s3, %s245
      $region44: #{_lambda_.13} parent=39 // pred_fallthru
        _
    $region40: #{_lambda_.13} parent=5 // pred_fallthru
      _
  $region6: #{_lambda_.13} parent=0 // loop_footer
    %s13 = sadd.s32 1, %s9
  $region7: #{_lambda_.13} parent=0 // loop_footer_branch
    %8 = sbr.rel target = $region3
  $region8: #{_lambda_.13} parent=0 // loop_exit
    _

</llo_original>
